<compile_context>
chip_gen: v5e
topology: v5e:2x2
jax: 0.10.0
libtpu: 0.0.40
codegen_flags: <defaults>
</compile_context>

<pallas_src>
import math

import numpy as np
import jax
import jax.numpy as jnp
from jax.experimental import pallas as pl
from jax.experimental.pallas import tpu as pltpu

# ------------------------------ config -------------------------------------
INPUT_SIZE = 32            # input_size
WINDOW = 16                # sliding_window_size
STRIDE = 16                # sliding_window_stride
PATCH = 8                  # backbone_output_stride
C_VIS = 32                 # backbone_output_channel
C_Q = 16                   # maskqformer_channel
C_LLM = 32                 # llm_channel
K_PATCH_PAD = 256          # patch im2col K padded to an MXU-friendly multiple of 128
CP = 128                   # lane-padded channel width for every activation / weight N dim

H_GRIDS = max(INPUT_SIZE - WINDOW + STRIDE - 1, 0) // STRIDE + 1
W_GRIDS = max(INPUT_SIZE - WINDOW + STRIDE - 1, 0) // STRIDE + 1
NUM_CLS = H_GRIDS * W_GRIDS                    # 4
FEAT = INPUT_SIZE // PATCH                     # 4
NPH = WINDOW // PATCH                          # patches per window side (2)

NUM_QUERY = 4              # mask_query tokens (== base_model.query_tokens)
N_HEADS_VIS = 2
N_HEADS_Q = 2
N_HEADS_LLM = 2
MLP_VIS = 64
MLP_Q = 32
MLP_LLM = 64
VOCAB_Q = 32
VOCAB_LLM = 64
T_QTEXT = 6
T_LLM_TEXT = 8
B = 2

INV_C_VIS = 1.0 / C_VIS
INV_C_Q = 1.0 / C_Q
INV_C_LLM = 1.0 / C_LLM

ALL_DATASETS = ['coco', 'lvis', 'v3det', 'a847', 'pc459', 'partimagenet',
                'pascal_part', 'ade20k', 'cityscapes', 'any']

# non-overlapping fast path (counters are all 1.0)
assert STRIDE == WINDOW


# ------------------------- in-kernel math helpers ----------------------------
# Operate on VALUES (not Refs); everything stays 2-D [rows, 128 lanes].
# Padded lanes of every activation are exactly zero by construction (zero-padded
# weights/biases and LN gamma/beta), so LN statistics use 1/C_real directly.

def _ln(x, pack, inv_c, eps=1e-5):
    g = pack[0:1, :]
    b = pack[1:2, :]
    mu = jnp.sum(x, axis=-1, keepdims=True) * inv_c
    var = jnp.sum(x * x, axis=-1, keepdims=True) * inv_c - mu * mu
    return (x - mu) * jax.lax.rsqrt(var + eps) * g + b


def _ffn(x, w1, b1, w2, b2):
    h = jnp.dot(x, w1, preferred_element_type=jnp.float32) + b1
    h = jax.nn.gelu(h)
    return jnp.dot(h, w2, preferred_element_type=jnp.float32) + b2


def _mha(q2, k2, v2, wo, bo, n_heads, dh, bias):
    """q2:[M,128] k2/v2:[S,128] (real channels in the first n_heads*dh lanes),
    bias:[M,S], wo:[n_heads*dh, 128].  Per-head scores, ONE merged out-projection."""
    scale = 1.0 / math.sqrt(dh)
    ctxs = []
    for h in range(n_heads):
        sl = slice(h * dh, (h + 1) * dh)
        s = jax.lax.dot_general(q2[:, sl], k2[:, sl],
                                dimension_numbers=(((1,), (1,)), ((), ())),
                                preferred_element_type=jnp.float32) * scale + bias
        m = jnp.max(s, axis=-1, keepdims=True)
        p = jnp.exp(s - m)
        denom = jnp.sum(p, axis=-1, keepdims=True)
        p = p * pl.reciprocal(denom, approx=True)      # EUP slot, effectively free
        ctxs.append(jnp.dot(p, v2[:, sl], preferred_element_type=jnp.float32))
    ctx = jnp.concatenate(ctxs, axis=-1)               # [M, n_heads*dh]
    return jnp.dot(ctx, wo, preferred_element_type=jnp.float32) + bo


# ---------------------------- the fused kernel --------------------------------

def _osm_fused_kernel(
        # ---- vision (sliding-window ViT, all windows merged into 40 rows) ----
        xp_ref, pw_ref, padd_ref, cadd_ref, wpe_ref, vbias_ref,
        vln1_ref, vwqkv_ref, vbqkv_ref, vwo_ref, vbo_ref,
        vln2_ref, vw1_ref, vb1_ref, vw2_ref, vb2_ref, vpln_ref,
        # ---- mask-QFormer ----
        qh0_ref, sab_ref, cab_ref,
        qeln_ref, qswqkv_ref, qsbqkv_ref, qswo_ref, qsbo_ref, qsln_ref,
        qcwq_ref, qcbq_ref, qcwkv_ref, qcbkv_ref, qcwo_ref, qcbo_ref, qcln_ref,
        qfw1_ref, qfb1_ref, qfw2_ref, qfb2_ref, qfln_ref,
        # ---- language projection + decoder LLM + lm_head + CE ----
        lpw_ref, lpb_ref, lextra_ref, lbias_ref,
        lln1_ref, lwqkv_ref, lbqkv_ref, lwo_ref, lbo_ref,
        lln2_ref, lw1_ref, lb1_ref, lw2_ref, lb2_ref, lfln_ref,
        hw_ref, hb_ref, lbl_ref, wvec_ref,
        # ---- output ----
        loss_ref):
    f32 = jnp.float32

    # ---------------- Stage 1: sliding-window ViT ----------------------------
    # patch matmul only over the 32 patch rows; cls rows come from cadd directly.
    hp = jnp.dot(xp_ref[...], pw_ref[...], preferred_element_type=f32) + padd_ref[...]
    h = jnp.concatenate([cadd_ref[...], hp], axis=0)                 # [40, 128]
    hn = _ln(h, vln1_ref[...], INV_C_VIS)
    qkv = jnp.dot(hn, vwqkv_ref[...], preferred_element_type=f32) + vbqkv_ref[...]
    h = h + _mha(qkv[:, :CP], qkv[:, CP:2 * CP], qkv[:, 2 * CP:],
                 vwo_ref[...], vbo_ref[...], N_HEADS_VIS, C_VIS // N_HEADS_VIS,
                 vbias_ref[...])
    h = h + _ffn(_ln(h, vln2_ref[...], INV_C_VIS),
                 vw1_ref[...], vb1_ref[...], vw2_ref[...], vb2_ref[...])
    # post-LN + window_pos_embed == image_embeds rows, stays in VMEM
    img = _ln(h, vpln_ref[...], INV_C_VIS) + wpe_ref[...]            # [40, 128]

    # ---------------- Stage 2: mask-QFormer (1 layer) -------------------------
    qh = _ln(qh0_ref[...], qeln_ref[...], INV_C_Q)                   # [30, 128]
    qkv = jnp.dot(qh, qswqkv_ref[...], preferred_element_type=f32) + qsbqkv_ref[...]
    sa = _mha(qkv[:, :CP], qkv[:, CP:2 * CP], qkv[:, 2 * CP:],
              qswo_ref[...], qsbo_ref[...], N_HEADS_Q, C_Q // N_HEADS_Q, sab_ref[...])
    qh = _ln(qh + sa, qsln_ref[...], INV_C_Q)
    hq = qh[:B * (2 * NUM_QUERY + 1), :]                             # query rows only [18,128]
    qq = jnp.dot(hq, qcwq_ref[...], preferred_element_type=f32) + qcbq_ref[...]
    kv = jnp.dot(img, qcwkv_ref[...], preferred_element_type=f32) + qcbkv_ref[...]
    ca = _mha(qq, kv[:, :CP], kv[:, CP:],
              qcwo_ref[...], qcbo_ref[...], N_HEADS_Q, C_Q // N_HEADS_Q, cab_ref[...])
    hq = _ln(hq + ca, qcln_ref[...], INV_C_Q)
    hq = _ln(hq + _ffn(hq, qfw1_ref[...], qfb1_ref[...], qfw2_ref[...], qfb2_ref[...]),
             qfln_ref[...], INV_C_Q)

    # ---------------- Stage 3: language projection + LLM + CE -----------------
    # qformer_output == mask-query rows == first B*NUM_QUERY rows of hq
    xlp = jnp.dot(hq[:B * NUM_QUERY, :], lpw_ref[...],
                  preferred_element_type=f32) + lpb_ref[...]          # [8, 128]
    # row layout: [text (B*T), mode (B), lang_proj (B*NQ)] -> text rows are first
    x = jnp.concatenate([lextra_ref[...], xlp], axis=0)              # [26, 128]
    hn = _ln(x, lln1_ref[...], INV_C_LLM)
    qkv = jnp.dot(hn, lwqkv_ref[...], preferred_element_type=f32) + lbqkv_ref[...]
    x = x + _mha(qkv[:, :CP], qkv[:, CP:2 * CP], qkv[:, 2 * CP:],
                 lwo_ref[...], lbo_ref[...], N_HEADS_LLM, C_LLM // N_HEADS_LLM,
                 lbias_ref[...])
    x = x + _ffn(_ln(x, lln2_ref[...], INV_C_LLM),
                 lw1_ref[...], lb1_ref[...], lw2_ref[...], lb2_ref[...])
    x = _ln(x, lfln_ref[...], INV_C_LLM)
    htext = x[:B * T_LLM_TEXT, :]                                    # [16, 128]
    # lm_head + per-token cross entropy (logits never leave VMEM).
    # padded vocab columns carry a -1e9 bias so the LSE is unchanged.
    logits = jnp.dot(htext, hw_ref[...], preferred_element_type=f32) + hb_ref[...]
    n, v = logits.shape
    m = jnp.max(logits, axis=-1, keepdims=True)
    lse = jnp.log(jnp.sum(jnp.exp(logits - m), axis=-1, keepdims=True)) + m
    onehot = (lbl_ref[...] == jax.lax.broadcasted_iota(jnp.int32, (n, v), 1)).astype(f32)
    tgt = jnp.sum(logits * onehot, axis=-1, keepdims=True)
    per = (lse - tgt) * wvec_ref[...]
    loss_ref[...] = (jnp.sum(per, axis=0, keepdims=True) /
                     jnp.sum(wvec_ref[...], axis=0, keepdims=True))


# ----------------------------- parameter init --------------------------------
# All weights are stored in kernel-ready, lane-padded (128-wide) layout so the
# jitted forward does ZERO parameter reshaping/concatenation per call.

def init_params(key):
    keys = iter(jax.random.split(key, 96))

    def nrm(shape, std=0.02):
        return jax.random.normal(next(keys), shape, jnp.float32) * std

    def pad_to(a, rows, cols):
        return jnp.pad(a, ((0, rows - a.shape[0]), (0, cols - a.shape[1])))

    def row_pad(v):                               # 1-D -> [1, CP]
        return jnp.pad(v.reshape(1, -1), ((0, 0), (0, CP - v.shape[-1])))

    def ln_pack(d):                               # [2, CP]: row0 = gamma, row1 = beta
        g = jnp.concatenate([jnp.ones((d,), jnp.float32),
                             jnp.zeros((CP - d,), jnp.float32)])
        return jnp.stack([g, jnp.zeros((CP,), jnp.float32)], axis=0)

    def qkv_pack(c):                              # [CP, 3*CP], [1, 3*CP]
        blocks = [pad_to(nrm((c, c)), CP, CP) for _ in range(3)]
        return jnp.concatenate(blocks, axis=1), jnp.zeros((1, 3 * CP), jnp.float32)

    def ffn_pack(c, m):
        return (pad_to(nrm((c, m)), CP, CP), jnp.zeros((1, CP), jnp.float32),
                pad_to(nrm((m, c)), CP, CP), jnp.zeros((1, CP), jnp.float32))

    p = {}
    # ---- synthetic base_model.vision_model (1 layer ViT) ----
    pw_real = nrm((3 * PATCH * PATCH, C_VIS))
    p['patch_w'] = pad_to(pw_real, K_PATCH_PAD, CP)
    patch_b = jnp.zeros((C_VIS,), jnp.float32)
    class_emb = nrm((C_VIS,))
    vis_pos = nrm((1 + NPH * NPH, C_VIS))
    p['vis_ln1'] = ln_pack(C_VIS)
    p['vis_wqkv'], p['vis_bqkv'] = qkv_pack(C_VIS)
    p['vis_wo'] = pad_to(nrm((C_VIS, C_VIS)), C_VIS, CP)
    p['vis_bo'] = jnp.zeros((1, CP), jnp.float32)
    p['vis_ln2'] = ln_pack(C_VIS)
    p['vis_w1'], p['vis_b1'], p['vis_w2'], p['vis_b2'] = ffn_pack(C_VIS, MLP_VIS)
    p['vis_post_ln'] = ln_pack(C_VIS)

    # ---- OmniScientModel-level parameters ----
    wpe = nrm((NUM_CLS + FEAT * FEAT, C_VIS), 1.0)            # window_pos_embed
    query_tokens = nrm((NUM_QUERY, C_Q), 1.0)                 # base_model.query_tokens
    p['mask_query_rows'] = pad_to(query_tokens, NUM_QUERY, CP)   # copy_weight_for_mask_query
    p['context_query_rows'] = p['mask_query_rows']
    p['qformer_mode_rows'] = {k: row_pad(nrm((C_Q,))) for k in ALL_DATASETS}
    p['mode_rows'] = {k: row_pad(nrm((C_LLM,))) for k in ALL_DATASETS}

    # ---- vision structural add-rows / static block-diagonal window bias ----
    fy, fx = np.meshgrid(np.arange(FEAT), np.arange(FEAT), indexing='ij')
    local_idx = ((fy % NPH) * NPH + (fx % NPH)).reshape(-1)           # [16] window-local pos
    win_idx = ((fy // NPH) * W_GRIDS + (fx // NPH)).reshape(-1)       # [16] window id
    vis_pos_pad = jnp.pad(vis_pos, ((0, 0), (0, CP - C_VIS)))
    patch_add_one = vis_pos_pad[1 + local_idx] + row_pad(patch_b)     # [16, CP]
    p['patch_add'] = jnp.tile(patch_add_one, (B, 1))                  # [B*16, CP]
    cls_row = row_pad(class_emb) + vis_pos_pad[0:1]
    p['cls_add'] = jnp.tile(cls_row, (B * NUM_CLS, 1))                # [B*4, CP]
    wpe_pad = jnp.pad(wpe, ((0, 0), (0, CP - C_VIS)))
    wpe_idx = np.concatenate([np.tile(np.arange(NUM_CLS), B),
                              np.tile(NUM_CLS + np.arange(FEAT * FEAT), B)])
    p['wpe_rows'] = wpe_pad[wpe_idx]                                  # [40, CP]
    grp = np.concatenate([np.arange(B * NUM_CLS),
                          np.repeat(np.arange(B), FEAT * FEAT) * NUM_CLS
                          + np.tile(win_idx, B)])
    p['vis_bias'] = jnp.where(jnp.asarray(grp[:, None] == grp[None, :]),
                              0.0, -1e9).astype(jnp.float32)          # [40, 40]

    # ---- synthetic base_model.qformer (1 layer, BLIP-2 style) ----
    p['q_word_emb'] = jnp.pad(nrm((VOCAB_Q, C_Q)), ((0, 0), (0, CP - C_Q)))
    p['q_pos_emb'] = jnp.pad(nrm((T_QTEXT, C_Q)), ((0, 0), (0, CP - C_Q)))
    p['q_emb_ln'] = ln_pack(C_Q)
    p['q_sa_wqkv'], p['q_sa_bqkv'] = qkv_pack(C_Q)
    p['q_sa_wo'] = pad_to(nrm((C_Q, C_Q)), C_Q, CP)
    p['q_sa_bo'] = jnp.zeros((1, CP), jnp.float32)
    p['q_sa_ln'] = ln_pack(C_Q)
    p['q_ca_wq'] = pad_to(nrm((C_Q, C_Q)), CP, CP)
    p['q_ca_bq'] = jnp.zeros((1, CP), jnp.float32)
    p['q_ca_wkv'] = jnp.concatenate([pad_to(nrm((C_VIS, C_Q)), CP, CP),
                                     pad_to(nrm((C_VIS, C_Q)), CP, CP)], axis=1)
    p['q_ca_bkv'] = jnp.zeros((1, 2 * CP), jnp.float32)
    p['q_ca_wo'] = pad_to(nrm((C_Q, C_Q)), C_Q, CP)
    p['q_ca_bo'] = jnp.zeros((1, CP), jnp.float32)
    p['q_ca_ln'] = ln_pack(C_Q)
    p['q_fw1'], p['q_fb1'], p['q_fw2'], p['q_fb2'] = ffn_pack(C_Q, MLP_Q)
    p['q_fln'] = ln_pack(C_Q)

    # ---- language projection + synthetic decoder-only LM (1 layer) ----
    p['lp_w'] = pad_to(nrm((C_Q, C_LLM)), CP, CP)
    p['lp_b'] = jnp.zeros((1, CP), jnp.float32)
    p['lm_emb'] = jnp.pad(nrm((VOCAB_LLM, C_LLM)), ((0, 0), (0, CP - C_LLM)))
    p['lm_ln1'] = ln_pack(C_LLM)
    p['lm_wqkv'], p['lm_bqkv'] = qkv_pack(C_LLM)
    p['lm_wo'] = pad_to(nrm((C_LLM, C_LLM)), C_LLM, CP)
    p['lm_bo'] = jnp.zeros((1, CP), jnp.float32)
    p['lm_ln2'] = ln_pack(C_LLM)
    p['lm_w1'], p['lm_b1'], p['lm_w2'], p['lm_b2'] = ffn_pack(C_LLM, MLP_LLM)
    p['lm_fln'] = ln_pack(C_LLM)
    p['head_w'] = pad_to(nrm((C_LLM, VOCAB_LLM)), CP, CP)
    p['head_b'] = jnp.concatenate([jnp.zeros((1, VOCAB_LLM), jnp.float32),
                                   jnp.full((1, CP - VOCAB_LLM), -1e9, jnp.float32)],
                                  axis=1)
    return p


# --------------------------- forward (single fused call) ----------------------

def osm_forward(p, pixel_values, qformer_input_ids, qformer_attention_mask,
                input_ids, attention_mask, labels, segmentation_mask,
                input_context_mask, dataset_type='any'):
    b = pixel_values.shape[0]
    assert b == B and dataset_type in ALL_DATASETS

    # ---- patchify the full image in (batch, fy, fx) raster order ----
    x = pixel_values.reshape(b, 3, FEAT, PATCH, FEAT, PATCH)
    x = x.transpose(0, 2, 4, 3, 5, 1).reshape(b * FEAT * FEAT, 3 * PATCH * PATCH)
    xp = jnp.pad(x, ((0, 0), (0, K_PATCH_PAD - 3 * PATCH * PATCH)))

    # ---- QFormer hidden rows: [mask_q(8), ctx_q(8), mode(2), text(12)] ----
    if qformer_attention_mask is None:
        qformer_attention_mask = jnp.ones_like(qformer_input_ids)
    t_q = qformer_input_ids.shape[1]
    mq_rows = jnp.tile(p['mask_query_rows'], (b, 1))
    cq_rows = jnp.tile(p['context_query_rows'], (b, 1))
    qmode_rows = jnp.tile(p['qformer_mode_rows'][dataset_type], (b, 1))
    text_rows = (p['q_word_emb'][qformer_input_ids]
                 + p['q_pos_emb'][None, :t_q]).reshape(b * t_q, CP)
    qh0 = jnp.concatenate([mq_rows, cq_rows, qmode_rows, text_rows], axis=0)

    # ---- QFormer self-attn bias: same batch & valid key ----
    nq_all = 2 * NUM_QUERY + 1
    q_batch = np.concatenate([np.repeat(np.arange(b), NUM_QUERY),
                              np.repeat(np.arange(b), NUM_QUERY),
                              np.arange(b),
                              np.repeat(np.arange(b), t_q)])
    kvalid = jnp.concatenate([jnp.ones((b * nq_all,), jnp.float32),
                              qformer_attention_mask.astype(jnp.float32).reshape(-1)])
    sa_bias = jnp.where(jnp.asarray(q_batch[:, None] == q_batch[None, :])
                        & (kvalid[None, :] > 0), 0.0, -1e9).astype(jnp.float32)

    # ---- image-key masks (nearest downsample) and cross-attn bias ----
    idx = np.arange(FEAT) * (INPUT_SIZE // FEAT)

    def down(m):
        return m[:, 0][:, idx][:, :, idx].reshape(b, FEAT * FEAT).astype(jnp.float32)

    a_small = down(segmentation_mask)
    c_small = down(input_context_mask)
    key_batch = np.concatenate([np.repeat(np.arange(b), NUM_CLS),
                                np.repeat(np.arange(b), FEAT * FEAT)])
    iam_keys = jnp.concatenate([jnp.ones((b * NUM_CLS,), jnp.float32), a_small.reshape(-1)])
    icam_keys = jnp.concatenate([jnp.ones((b * NUM_CLS,), jnp.float32), c_small.reshape(-1)])
    qr_batch = np.concatenate([np.repeat(np.arange(b), NUM_QUERY),
                               np.repeat(np.arange(b), NUM_QUERY),
                               np.arange(b)])
    is_mask_q = np.concatenate([np.ones(b * NUM_QUERY), np.zeros(b * (NUM_QUERY + 1))])
    keym = jnp.where(jnp.asarray(is_mask_q)[:, None] > 0,
                     iam_keys[None, :], icam_keys[None, :])
    ca_bias = jnp.where(jnp.asarray(qr_batch[:, None] == key_batch[None, :]) & (keym > 0),
                        0.0, -1e9).astype(jnp.float32)

    # ---- LLM rows [text(16), mode(2)] (+ lang_proj rows appended in-kernel) ----
    if attention_mask is None:
        attention_mask = jnp.ones_like(input_ids)
    t_text = input_ids.shape[1]
    text_llm = p['lm_emb'][input_ids].reshape(b * t_text, CP)
    mode_rows = jnp.tile(p['mode_rows'][dataset_type], (b, 1))
    llm_extra = jnp.concatenate([text_llm, mode_rows], axis=0)

    # causal bias over rows [text, mode, lang_proj] with sequence positions
    # [lang_proj:0..NQ-1, mode:NQ, text:NQ+1..]
    l_batch = np.concatenate([np.repeat(np.arange(b), t_text), np.arange(b),
                              np.repeat(np.arange(b), NUM_QUERY)])
    l_pos = np.concatenate([np.tile(np.arange(t_text), b) + NUM_QUERY + 1,
                            np.full((b,), NUM_QUERY),
                            np.tile(np.arange(NUM_QUERY), b)])
    l_valid = jnp.concatenate([attention_mask.astype(jnp.float32).reshape(-1),
                               jnp.ones((b + b * NUM_QUERY,), jnp.float32)])
    allowed = (jnp.asarray(l_batch[:, None] == l_batch[None, :]) &
               jnp.asarray(l_pos[None, :] <= l_pos[:, None]) &
               (l_valid[None, :] > 0))
    llm_bias = jnp.where(allowed, 0.0, -1e9).astype(jnp.float32)

    # shifted labels + per-row CE weights (last text position excluded)
    t_lab = labels.shape[1]
    lbl = jnp.concatenate([labels[:, 1:], jnp.zeros((b, 1), labels.dtype)], axis=1)
    lbl = lbl.reshape(b * t_text, 1).astype(jnp.int32)
    wvec = jnp.concatenate([jnp.ones((b, t_lab - 1), jnp.float32),
                            jnp.zeros((b, t_text - (t_lab - 1)), jnp.float32)],
                           axis=1).reshape(b * t_text, 1)

    args = [
        # vision
        xp, p['patch_w'], p['patch_add'], p['cls_add'], p['wpe_rows'], p['vis_bias'],
        p['vis_ln1'], p['vis_wqkv'], p['vis_bqkv'], p['vis_wo'], p['vis_bo'],
        p['vis_ln2'], p['vis_w1'], p['vis_b1'], p['vis_w2'], p['vis_b2'], p['vis_post_ln'],
        # qformer
        qh0, sa_bias, ca_bias,
        p['q_emb_ln'], p['q_sa_wqkv'], p['q_sa_bqkv'], p['q_sa_wo'], p['q_sa_bo'],
        p['q_sa_ln'],
        p['q_ca_wq'], p['q_ca_bq'], p['q_ca_wkv'], p['q_ca_bkv'], p['q_ca_wo'],
        p['q_ca_bo'], p['q_ca_ln'],
        p['q_fw1'], p['q_fb1'], p['q_fw2'], p['q_fb2'], p['q_fln'],
        # llm
        p['lp_w'], p['lp_b'], llm_extra, llm_bias,
        p['lm_ln1'], p['lm_wqkv'], p['lm_bqkv'], p['lm_wo'], p['lm_bo'],
        p['lm_ln2'], p['lm_w1'], p['lm_b1'], p['lm_w2'], p['lm_b2'], p['lm_fln'],
        p['head_w'], p['head_b'], lbl, wvec,
    ]
    bytes_accessed = sum(int(a.size) * a.dtype.itemsize for a in args) + 4

    loss = pl.pallas_call(
        _osm_fused_kernel,
        out_shape=jax.ShapeDtypeStruct((1, 1), jnp.float32),
        compiler_params=pltpu.CompilerParams(vmem_limit_bytes=32 * 1024 * 1024),
        cost_estimate=pl.CostEstimate(flops=22_000_000, transcendentals=25_000,
                                      bytes_accessed=bytes_accessed),
    )(*args)
    return loss[0, 0]


# ----------------------------------- main ------------------------------------

if __name__ == "__main__":
    key = jax.random.PRNGKey(0)
    kp, kx, ks, kc, kqi, kii, kl = jax.random.split(key, 7)
    params = init_params(kp)

    pixel_values = jax.random.normal(kx, (B, 3, INPUT_SIZE, INPUT_SIZE), jnp.float32)
    segmentation_mask = (jax.random.uniform(ks, (B, 1, INPUT_SIZE, INPUT_SIZE))
                         > 0.5).astype(jnp.float32)
    input_context_mask = (jax.random.uniform(kc, (B, 1, INPUT_SIZE, INPUT_SIZE))
                          > 0.3).astype(jnp.float32)
    qformer_input_ids = jax.random.randint(kqi, (B, T_QTEXT), 0, VOCAB_Q)
    qformer_attention_mask = jnp.ones((B, T_QTEXT), jnp.int32)
    input_ids = jax.random.randint(kii, (B, T_LLM_TEXT), 0, VOCAB_LLM)
    attention_mask = jnp.ones((B, T_LLM_TEXT), jnp.int32)
    labels = jax.random.randint(kl, (B, T_LLM_TEXT), 0, VOCAB_LLM)

    fwd = jax.jit(osm_forward, static_argnames=('dataset_type',))
    loss = fwd(params, pixel_values, qformer_input_ids, qformer_attention_mask,
               input_ids, attention_mask, labels, segmentation_mask,
               input_context_mask, dataset_type='any')
    jax.block_until_ready(loss)
    assert jnp.isfinite(loss)
    print("KERNEL_OK")
</pallas_src>

<mosaic_0001>
module attributes {stable_mosaic.version = 11 : i64} {
  func.func @_osm_fused_kernel(%arg0: memref<32x256xf32, #tpu.memory_space<vmem>>, %arg1: memref<256x128xf32, #tpu.memory_space<vmem>>, %arg2: memref<32x128xf32, #tpu.memory_space<vmem>>, %arg3: memref<8x128xf32, #tpu.memory_space<vmem>>, %arg4: memref<40x128xf32, #tpu.memory_space<vmem>>, %arg5: memref<40x40xf32, #tpu.memory_space<vmem>>, %arg6: memref<2x128xf32, #tpu.memory_space<vmem>>, %arg7: memref<128x384xf32, #tpu.memory_space<vmem>>, %arg8: memref<1x384xf32, #tpu.memory_space<vmem>>, %arg9: memref<32x128xf32, #tpu.memory_space<vmem>>, %arg10: memref<1x128xf32, #tpu.memory_space<vmem>>, %arg11: memref<2x128xf32, #tpu.memory_space<vmem>>, %arg12: memref<128x128xf32, #tpu.memory_space<vmem>>, %arg13: memref<1x128xf32, #tpu.memory_space<vmem>>, %arg14: memref<128x128xf32, #tpu.memory_space<vmem>>, %arg15: memref<1x128xf32, #tpu.memory_space<vmem>>, %arg16: memref<2x128xf32, #tpu.memory_space<vmem>>, %arg17: memref<30x128xf32, #tpu.memory_space<vmem>>, %arg18: memref<30x30xf32, #tpu.memory_space<vmem>>, %arg19: memref<18x40xf32, #tpu.memory_space<vmem>>, %arg20: memref<2x128xf32, #tpu.memory_space<vmem>>, %arg21: memref<128x384xf32, #tpu.memory_space<vmem>>, %arg22: memref<1x384xf32, #tpu.memory_space<vmem>>, %arg23: memref<16x128xf32, #tpu.memory_space<vmem>>, %arg24: memref<1x128xf32, #tpu.memory_space<vmem>>, %arg25: memref<2x128xf32, #tpu.memory_space<vmem>>, %arg26: memref<128x128xf32, #tpu.memory_space<vmem>>, %arg27: memref<1x128xf32, #tpu.memory_space<vmem>>, %arg28: memref<128x256xf32, #tpu.memory_space<vmem>>, %arg29: memref<1x256xf32, #tpu.memory_space<vmem>>, %arg30: memref<16x128xf32, #tpu.memory_space<vmem>>, %arg31: memref<1x128xf32, #tpu.memory_space<vmem>>, %arg32: memref<2x128xf32, #tpu.memory_space<vmem>>, %arg33: memref<128x128xf32, #tpu.memory_space<vmem>>, %arg34: memref<1x128xf32, #tpu.memory_space<vmem>>, %arg35: memref<128x128xf32, #tpu.memory_space<vmem>>, %arg36: memref<1x128xf32, #tpu.memory_space<vmem>>, %arg37: memref<2x128xf32, #tpu.memory_space<vmem>>, %arg38: memref<128x128xf32, #tpu.memory_space<vmem>>, %arg39: memref<1x128xf32, #tpu.memory_space<vmem>>, %arg40: memref<18x128xf32, #tpu.memory_space<vmem>>, %arg41: memref<26x26xf32, #tpu.memory_space<vmem>>, %arg42: memref<2x128xf32, #tpu.memory_space<vmem>>, %arg43: memref<128x384xf32, #tpu.memory_space<vmem>>, %arg44: memref<1x384xf32, #tpu.memory_space<vmem>>, %arg45: memref<32x128xf32, #tpu.memory_space<vmem>>, %arg46: memref<1x128xf32, #tpu.memory_space<vmem>>, %arg47: memref<2x128xf32, #tpu.memory_space<vmem>>, %arg48: memref<128x128xf32, #tpu.memory_space<vmem>>, %arg49: memref<1x128xf32, #tpu.memory_space<vmem>>, %arg50: memref<128x128xf32, #tpu.memory_space<vmem>>, %arg51: memref<1x128xf32, #tpu.memory_space<vmem>>, %arg52: memref<2x128xf32, #tpu.memory_space<vmem>>, %arg53: memref<128x128xf32, #tpu.memory_space<vmem>>, %arg54: memref<1x128xf32, #tpu.memory_space<vmem>>, %arg55: memref<16x1xi32, #tpu.memory_space<vmem>>, %arg56: memref<16x1xf32, #tpu.memory_space<vmem>>, %arg57: memref<1x1xf32, #tpu.memory_space<vmem>>) attributes {dimension_semantics = [], scalar_prefetch = 0 : i64, scratch_operands = 0 : i64, tpu.core_type = #tpu.core_type<tc>} {
    %c0 = arith.constant 0 : index
    %c0_0 = arith.constant 0 : index
    %0 = vector.load %arg0[%c0, %c0_0] : memref<32x256xf32, #tpu.memory_space<vmem>>, vector<32x256xf32>
    %c0_1 = arith.constant 0 : index
    %c0_2 = arith.constant 0 : index
    %1 = vector.load %arg1[%c0_1, %c0_2] : memref<256x128xf32, #tpu.memory_space<vmem>>, vector<256x128xf32>
    %cst = arith.constant dense<0.000000e+00> : vector<32x128xf32>
    %2 = tpu.matmul %0, %1, %cst {dimension_numbers = #tpu.dot_dimension_numbers<[1], [0], [0], [1], [0, 0, 1, 1], [], []>} : vector<32x256xf32>, vector<256x128xf32>, vector<32x128xf32> -> vector<32x128xf32>
    %c0_3 = arith.constant 0 : index
    %c0_4 = arith.constant 0 : index
    %3 = vector.load %arg2[%c0_3, %c0_4] : memref<32x128xf32, #tpu.memory_space<vmem>>, vector<32x128xf32>
    %4 = arith.addf %2, %3 : vector<32x128xf32>
    %c0_5 = arith.constant 0 : index
    %c0_6 = arith.constant 0 : index
    %5 = vector.load %arg3[%c0_5, %c0_6] : memref<8x128xf32, #tpu.memory_space<vmem>>, vector<8x128xf32>
    %6 = tpu.concatenate %5, %4 in 0 : vector<8x128xf32>, vector<32x128xf32> -> vector<40x128xf32>
    %c0_7 = arith.constant 0 : index
    %c0_8 = arith.constant 0 : index
    %7 = vector.load %arg6[%c0_7, %c0_8] : memref<2x128xf32, #tpu.memory_space<vmem>>, vector<2x128xf32>
    %8 = vector.extract_strided_slice %7 {offsets = [0, 0], sizes = [1, 128], strides = [1, 1]} : vector<2x128xf32> to vector<1x128xf32>
    %9 = vector.extract_strided_slice %7 {offsets = [1, 0], sizes = [1, 128], strides = [1, 1]} : vector<2x128xf32> to vector<1x128xf32>
    %cst_9 = arith.constant dense<0.000000e+00> : vector<40xf32>
    %10 = vector.multi_reduction <add>, %6, %cst_9 [1] : vector<40x128xf32> to vector<40xf32>
    %11 = vector.shape_cast %10 : vector<40xf32> to vector<40x1xf32>
    %cst_10 = arith.constant 3.125000e-02 : f32
    %12 = vector.broadcast %cst_10 : f32 to vector<40x1xf32>
    %13 = arith.mulf %11, %12 : vector<40x1xf32>
    %14 = arith.mulf %6, %6 : vector<40x128xf32>
    %cst_11 = arith.constant dense<0.000000e+00> : vector<40xf32>
    %15 = vector.multi_reduction <add>, %14, %cst_11 [1] : vector<40x128xf32> to vector<40xf32>
    %16 = vector.shape_cast %15 : vector<40xf32> to vector<40x1xf32>
    %cst_12 = arith.constant 3.125000e-02 : f32
    %17 = vector.broadcast %cst_12 : f32 to vector<40x1xf32>
    %18 = arith.mulf %16, %17 : vector<40x1xf32>
    %19 = arith.mulf %13, %13 : vector<40x1xf32>
    %20 = arith.subf %18, %19 : vector<40x1xf32>
    %21 = vector.broadcast %13 : vector<40x1xf32> to vector<40x128xf32>
    %22 = arith.subf %6, %21 : vector<40x128xf32>
    %cst_13 = arith.constant 9.99999974E-6 : f32
    %23 = vector.broadcast %cst_13 : f32 to vector<40x1xf32>
    %24 = arith.addf %20, %23 : vector<40x1xf32>
    %25 = math.rsqrt %24 : vector<40x1xf32>
    %26 = vector.broadcast %25 : vector<40x1xf32> to vector<40x128xf32>
    %27 = arith.mulf %22, %26 : vector<40x128xf32>
    %28 = vector.broadcast %8 : vector<1x128xf32> to vector<40x128xf32>
    %29 = arith.mulf %27, %28 : vector<40x128xf32>
    %30 = vector.broadcast %9 : vector<1x128xf32> to vector<40x128xf32>
    %31 = arith.addf %29, %30 : vector<40x128xf32>
    %c0_14 = arith.constant 0 : index
    %c0_15 = arith.constant 0 : index
    %32 = vector.load %arg7[%c0_14, %c0_15] : memref<128x384xf32, #tpu.memory_space<vmem>>, vector<128x384xf32>
    %cst_16 = arith.constant dense<0.000000e+00> : vector<40x384xf32>
    %33 = tpu.matmul %31, %32, %cst_16 {dimension_numbers = #tpu.dot_dimension_numbers<[1], [0], [0], [1], [0, 0, 1, 1], [], []>} : vector<40x128xf32>, vector<128x384xf32>, vector<40x384xf32> -> vector<40x384xf32>
    %c0_17 = arith.constant 0 : index
    %c0_18 = arith.constant 0 : index
    %34 = vector.load %arg8[%c0_17, %c0_18] : memref<1x384xf32, #tpu.memory_space<vmem>>, vector<1x384xf32>
    %35 = vector.broadcast %34 : vector<1x384xf32> to vector<40x384xf32>
    %36 = arith.addf %33, %35 : vector<40x384xf32>
    %37 = vector.extract_strided_slice %36 {offsets = [0, 0], sizes = [40, 128], strides = [1, 1]} : vector<40x384xf32> to vector<40x128xf32>
    %38 = vector.extract_strided_slice %36 {offsets = [0, 128], sizes = [40, 128], strides = [1, 1]} : vector<40x384xf32> to vector<40x128xf32>
    %39 = vector.extract_strided_slice %36 {offsets = [0, 256], sizes = [40, 128], strides = [1, 1]} : vector<40x384xf32> to vector<40x128xf32>
    %c0_19 = arith.constant 0 : index
    %c0_20 = arith.constant 0 : index
    %40 = vector.load %arg9[%c0_19, %c0_20] : memref<32x128xf32, #tpu.memory_space<vmem>>, vector<32x128xf32>
    %c0_21 = arith.constant 0 : index
    %c0_22 = arith.constant 0 : index
    %41 = vector.load %arg10[%c0_21, %c0_22] : memref<1x128xf32, #tpu.memory_space<vmem>>, vector<1x128xf32>
    %c0_23 = arith.constant 0 : index
    %c0_24 = arith.constant 0 : index
    %42 = vector.load %arg5[%c0_23, %c0_24] : memref<40x40xf32, #tpu.memory_space<vmem>>, vector<40x40xf32>
    %43 = vector.extract_strided_slice %37 {offsets = [0, 0], sizes = [40, 16], strides = [1, 1]} : vector<40x128xf32> to vector<40x16xf32>
    %44 = vector.extract_strided_slice %38 {offsets = [0, 0], sizes = [40, 16], strides = [1, 1]} : vector<40x128xf32> to vector<40x16xf32>
    %cst_25 = arith.constant dense<0.000000e+00> : vector<40x40xf32>
    %45 = tpu.matmul %43, %44, %cst_25 {dimension_numbers = #tpu.dot_dimension_numbers<[1], [1], [0], [0], [0, 0, 1, 0], [], []>} : vector<40x16xf32>, vector<40x16xf32>, vector<40x40xf32> -> vector<40x40xf32>
    %cst_26 = arith.constant 2.500000e-01 : f32
    %46 = vector.broadcast %cst_26 : f32 to vector<40x40xf32>
    %47 = arith.mulf %45, %46 : vector<40x40xf32>
    %48 = arith.addf %47, %42 : vector<40x40xf32>
    %cst_27 = arith.constant dense<0xFF800000> : vector<40xf32>
    %49 = vector.multi_reduction <maximumf>, %48, %cst_27 [1] : vector<40x40xf32> to vector<40xf32>
    %50 = vector.shape_cast %49 : vector<40xf32> to vector<40x1xf32>
    %51 = vector.broadcast %50 : vector<40x1xf32> to vector<40x40xf32>
    %52 = arith.subf %48, %51 : vector<40x40xf32>
    %53 = math.exp %52 : vector<40x40xf32>
    %cst_28 = arith.constant dense<0.000000e+00> : vector<40xf32>
    %54 = vector.multi_reduction <add>, %53, %cst_28 [1] : vector<40x40xf32> to vector<40xf32>
    %55 = vector.shape_cast %54 : vector<40xf32> to vector<40x1xf32>
    %56 = tpu.reciprocal %55 {approx = true} : vector<40x1xf32> -> vector<40x1xf32>
    %57 = vector.broadcast %56 : vector<40x1xf32> to vector<40x40xf32>
    %58 = arith.mulf %53, %57 : vector<40x40xf32>
    %59 = vector.extract_strided_slice %39 {offsets = [0, 0], sizes = [40, 16], strides = [1, 1]} : vector<40x128xf32> to vector<40x16xf32>
    %cst_29 = arith.constant dense<0.000000e+00> : vector<40x16xf32>
    %60 = tpu.matmul %58, %59, %cst_29 {dimension_numbers = #tpu.dot_dimension_numbers<[1], [0], [0], [1], [0, 0, 1, 1], [], []>} : vector<40x40xf32>, vector<40x16xf32>, vector<40x16xf32> -> vector<40x16xf32>
    %61 = vector.extract_strided_slice %37 {offsets = [0, 16], sizes = [40, 16], strides = [1, 1]} : vector<40x128xf32> to vector<40x16xf32>
    %62 = vector.extract_strided_slice %38 {offsets = [0, 16], sizes = [40, 16], strides = [1, 1]} : vector<40x128xf32> to vector<40x16xf32>
    %cst_30 = arith.constant dense<0.000000e+00> : vector<40x40xf32>
    %63 = tpu.matmul %61, %62, %cst_30 {dimension_numbers = #tpu.dot_dimension_numbers<[1], [1], [0], [0], [0, 0, 1, 0], [], []>} : vector<40x16xf32>, vector<40x16xf32>, vector<40x40xf32> -> vector<40x40xf32>
    %cst_31 = arith.constant 2.500000e-01 : f32
    %64 = vector.broadcast %cst_31 : f32 to vector<40x40xf32>
    %65 = arith.mulf %63, %64 : vector<40x40xf32>
    %66 = arith.addf %65, %42 : vector<40x40xf32>
    %cst_32 = arith.constant dense<0xFF800000> : vector<40xf32>
    %67 = vector.multi_reduction <maximumf>, %66, %cst_32 [1] : vector<40x40xf32> to vector<40xf32>
    %68 = vector.shape_cast %67 : vector<40xf32> to vector<40x1xf32>
    %69 = vector.broadcast %68 : vector<40x1xf32> to vector<40x40xf32>
    %70 = arith.subf %66, %69 : vector<40x40xf32>
    %71 = math.exp %70 : vector<40x40xf32>
    %cst_33 = arith.constant dense<0.000000e+00> : vector<40xf32>
    %72 = vector.multi_reduction <add>, %71, %cst_33 [1] : vector<40x40xf32> to vector<40xf32>
    %73 = vector.shape_cast %72 : vector<40xf32> to vector<40x1xf32>
    %74 = tpu.reciprocal %73 {approx = true} : vector<40x1xf32> -> vector<40x1xf32>
    %75 = vector.broadcast %74 : vector<40x1xf32> to vector<40x40xf32>
    %76 = arith.mulf %71, %75 : vector<40x40xf32>
    %77 = vector.extract_strided_slice %39 {offsets = [0, 16], sizes = [40, 16], strides = [1, 1]} : vector<40x128xf32> to vector<40x16xf32>
    %cst_34 = arith.constant dense<0.000000e+00> : vector<40x16xf32>
    %78 = tpu.matmul %76, %77, %cst_34 {dimension_numbers = #tpu.dot_dimension_numbers<[1], [0], [0], [1], [0, 0, 1, 1], [], []>} : vector<40x40xf32>, vector<40x16xf32>, vector<40x16xf32> -> vector<40x16xf32>
    %79 = tpu.concatenate %60, %78 in 1 : vector<40x16xf32>, vector<40x16xf32> -> vector<40x32xf32>
    %cst_35 = arith.constant dense<0.000000e+00> : vector<40x128xf32>
    %80 = tpu.matmul %79, %40, %cst_35 {dimension_numbers = #tpu.dot_dimension_numbers<[1], [0], [0], [1], [0, 0, 1, 1], [], []>} : vector<40x32xf32>, vector<32x128xf32>, vector<40x128xf32> -> vector<40x128xf32>
    %81 = vector.broadcast %41 : vector<1x128xf32> to vector<40x128xf32>
    %82 = arith.addf %80, %81 : vector<40x128xf32>
    %83 = arith.addf %6, %82 : vector<40x128xf32>
    %c0_36 = arith.constant 0 : index
    %c0_37 = arith.constant 0 : index
    %84 = vector.load %arg11[%c0_36, %c0_37] : memref<2x128xf32, #tpu.memory_space<vmem>>, vector<2x128xf32>
    %85 = vector.extract_strided_slice %84 {offsets = [0, 0], sizes = [1, 128], strides = [1, 1]} : vector<2x128xf32> to vector<1x128xf32>
    %86 = vector.extract_strided_slice %84 {offsets = [1, 0], sizes = [1, 128], strides = [1, 1]} : vector<2x128xf32> to vector<1x128xf32>
    %cst_38 = arith.constant dense<0.000000e+00> : vector<40xf32>
    %87 = vector.multi_reduction <add>, %83, %cst_38 [1] : vector<40x128xf32> to vector<40xf32>
    %88 = vector.shape_cast %87 : vector<40xf32> to vector<40x1xf32>
    %cst_39 = arith.constant 3.125000e-02 : f32
    %89 = vector.broadcast %cst_39 : f32 to vector<40x1xf32>
    %90 = arith.mulf %88, %89 : vector<40x1xf32>
    %91 = arith.mulf %83, %83 : vector<40x128xf32>
    %cst_40 = arith.constant dense<0.000000e+00> : vector<40xf32>
    %92 = vector.multi_reduction <add>, %91, %cst_40 [1] : vector<40x128xf32> to vector<40xf32>
    %93 = vector.shape_cast %92 : vector<40xf32> to vector<40x1xf32>
    %cst_41 = arith.constant 3.125000e-02 : f32
    %94 = vector.broadcast %cst_41 : f32 to vector<40x1xf32>
    %95 = arith.mulf %93, %94 : vector<40x1xf32>
    %96 = arith.mulf %90, %90 : vector<40x1xf32>
    %97 = arith.subf %95, %96 : vector<40x1xf32>
    %98 = vector.broadcast %90 : vector<40x1xf32> to vector<40x128xf32>
    %99 = arith.subf %83, %98 : vector<40x128xf32>
    %cst_42 = arith.constant 9.99999974E-6 : f32
    %100 = vector.broadcast %cst_42 : f32 to vector<40x1xf32>
    %101 = arith.addf %97, %100 : vector<40x1xf32>
    %102 = math.rsqrt %101 : vector<40x1xf32>
    %103 = vector.broadcast %102 : vector<40x1xf32> to vector<40x128xf32>
    %104 = arith.mulf %99, %103 : vector<40x128xf32>
    %105 = vector.broadcast %85 : vector<1x128xf32> to vector<40x128xf32>
    %106 = arith.mulf %104, %105 : vector<40x128xf32>
    %107 = vector.broadcast %86 : vector<1x128xf32> to vector<40x128xf32>
    %108 = arith.addf %106, %107 : vector<40x128xf32>
    %c0_43 = arith.constant 0 : index
    %c0_44 = arith.constant 0 : index
    %109 = vector.load %arg12[%c0_43, %c0_44] : memref<128x128xf32, #tpu.memory_space<vmem>>, vector<128x128xf32>
    %c0_45 = arith.constant 0 : index
    %c0_46 = arith.constant 0 : index
    %110 = vector.load %arg13[%c0_45, %c0_46] : memref<1x128xf32, #tpu.memory_space<vmem>>, vector<1x128xf32>
    %c0_47 = arith.constant 0 : index
    %c0_48 = arith.constant 0 : index
    %111 = vector.load %arg14[%c0_47, %c0_48] : memref<128x128xf32, #tpu.memory_space<vmem>>, vector<128x128xf32>
    %c0_49 = arith.constant 0 : index
    %c0_50 = arith.constant 0 : index
    %112 = vector.load %arg15[%c0_49, %c0_50] : memref<1x128xf32, #tpu.memory_space<vmem>>, vector<1x128xf32>
    %cst_51 = arith.constant dense<0.000000e+00> : vector<40x128xf32>
    %113 = tpu.matmul %108, %109, %cst_51 {dimension_numbers = #tpu.dot_dimension_numbers<[1], [0], [0], [1], [0, 0, 1, 1], [], []>} : vector<40x128xf32>, vector<128x128xf32>, vector<40x128xf32> -> vector<40x128xf32>
    %114 = vector.broadcast %110 : vector<1x128xf32> to vector<40x128xf32>
    %115 = arith.addf %113, %114 : vector<40x128xf32>
    %116 = arith.mulf %115, %115 : vector<40x128xf32>
    %117 = arith.mulf %115, %116 : vector<40x128xf32>
    %cst_52 = arith.constant 4.471500e-02 : f32
    %118 = vector.broadcast %cst_52 : f32 to vector<40x128xf32>
    %119 = arith.mulf %118, %117 : vector<40x128xf32>
    %120 = arith.addf %115, %119 : vector<40x128xf32>
    %cst_53 = arith.constant 0.797884583 : f32
    %121 = vector.broadcast %cst_53 : f32 to vector<40x128xf32>
    %122 = arith.mulf %121, %120 : vector<40x128xf32>
    %123 = math.tanh %122 : vector<40x128xf32>
    %cst_54 = arith.constant 1.000000e+00 : f32
    %124 = vector.broadcast %cst_54 : f32 to vector<40x128xf32>
    %125 = arith.addf %124, %123 : vector<40x128xf32>
    %cst_55 = arith.constant 5.000000e-01 : f32
    %126 = vector.broadcast %cst_55 : f32 to vector<40x128xf32>
    %127 = arith.mulf %126, %125 : vector<40x128xf32>
    %128 = arith.mulf %115, %127 : vector<40x128xf32>
    %cst_56 = arith.constant dense<0.000000e+00> : vector<40x128xf32>
    %129 = tpu.matmul %128, %111, %cst_56 {dimension_numbers = #tpu.dot_dimension_numbers<[1], [0], [0], [1], [0, 0, 1, 1], [], []>} : vector<40x128xf32>, vector<128x128xf32>, vector<40x128xf32> -> vector<40x128xf32>
    %130 = vector.broadcast %112 : vector<1x128xf32> to vector<40x128xf32>
    %131 = arith.addf %129, %130 : vector<40x128xf32>
    %132 = arith.addf %83, %131 : vector<40x128xf32>
    %c0_57 = arith.constant 0 : index
    %c0_58 = arith.constant 0 : index
    %133 = vector.load %arg16[%c0_57, %c0_58] : memref<2x128xf32, #tpu.memory_space<vmem>>, vector<2x128xf32>
    %134 = vector.extract_strided_slice %133 {offsets = [0, 0], sizes = [1, 128], strides = [1, 1]} : vector<2x128xf32> to vector<1x128xf32>
    %135 = vector.extract_strided_slice %133 {offsets = [1, 0], sizes = [1, 128], strides = [1, 1]} : vector<2x128xf32> to vector<1x128xf32>
    %cst_59 = arith.constant dense<0.000000e+00> : vector<40xf32>
    %136 = vector.multi_reduction <add>, %132, %cst_59 [1] : vector<40x128xf32> to vector<40xf32>
    %137 = vector.shape_cast %136 : vector<40xf32> to vector<40x1xf32>
    %cst_60 = arith.constant 3.125000e-02 : f32
    %138 = vector.broadcast %cst_60 : f32 to vector<40x1xf32>
    %139 = arith.mulf %137, %138 : vector<40x1xf32>
    %140 = arith.mulf %132, %132 : vector<40x128xf32>
    %cst_61 = arith.constant dense<0.000000e+00> : vector<40xf32>
    %141 = vector.multi_reduction <add>, %140, %cst_61 [1] : vector<40x128xf32> to vector<40xf32>
    %142 = vector.shape_cast %141 : vector<40xf32> to vector<40x1xf32>
    %cst_62 = arith.constant 3.125000e-02 : f32
    %143 = vector.broadcast %cst_62 : f32 to vector<40x1xf32>
    %144 = arith.mulf %142, %143 : vector<40x1xf32>
    %145 = arith.mulf %139, %139 : vector<40x1xf32>
    %146 = arith.subf %144, %145 : vector<40x1xf32>
    %147 = vector.broadcast %139 : vector<40x1xf32> to vector<40x128xf32>
    %148 = arith.subf %132, %147 : vector<40x128xf32>
    %cst_63 = arith.constant 9.99999974E-6 : f32
    %149 = vector.broadcast %cst_63 : f32 to vector<40x1xf32>
    %150 = arith.addf %146, %149 : vector<40x1xf32>
    %151 = math.rsqrt %150 : vector<40x1xf32>
    %152 = vector.broadcast %151 : vector<40x1xf32> to vector<40x128xf32>
    %153 = arith.mulf %148, %152 : vector<40x128xf32>
    %154 = vector.broadcast %134 : vector<1x128xf32> to vector<40x128xf32>
    %155 = arith.mulf %153, %154 : vector<40x128xf32>
    %156 = vector.broadcast %135 : vector<1x128xf32> to vector<40x128xf32>
    %157 = arith.addf %155, %156 : vector<40x128xf32>
    %c0_64 = arith.constant 0 : index
    %c0_65 = arith.constant 0 : index
    %158 = vector.load %arg4[%c0_64, %c0_65] : memref<40x128xf32, #tpu.memory_space<vmem>>, vector<40x128xf32>
    %159 = arith.addf %157, %158 : vector<40x128xf32>
    %c0_66 = arith.constant 0 : index
    %c0_67 = arith.constant 0 : index
    %160 = vector.load %arg17[%c0_66, %c0_67] : memref<30x128xf32, #tpu.memory_space<vmem>>, vector<30x128xf32>
    %c0_68 = arith.constant 0 : index
    %c0_69 = arith.constant 0 : index
    %161 = vector.load %arg20[%c0_68, %c0_69] : memref<2x128xf32, #tpu.memory_space<vmem>>, vector<2x128xf32>
    %162 = vector.extract_strided_slice %161 {offsets = [0, 0], sizes = [1, 128], strides = [1, 1]} : vector<2x128xf32> to vector<1x128xf32>
    %163 = vector.extract_strided_slice %161 {offsets = [1, 0], sizes = [1, 128], strides = [1, 1]} : vector<2x128xf32> to vector<1x128xf32>
    %cst_70 = arith.constant dense<0.000000e+00> : vector<30xf32>
    %164 = vector.multi_reduction <add>, %160, %cst_70 [1] : vector<30x128xf32> to vector<30xf32>
    %165 = vector.shape_cast %164 : vector<30xf32> to vector<30x1xf32>
    %cst_71 = arith.constant 6.250000e-02 : f32
    %166 = vector.broadcast %cst_71 : f32 to vector<30x1xf32>
    %167 = arith.mulf %165, %166 : vector<30x1xf32>
    %168 = arith.mulf %160, %160 : vector<30x128xf32>
    %cst_72 = arith.constant dense<0.000000e+00> : vector<30xf32>
    %169 = vector.multi_reduction <add>, %168, %cst_72 [1] : vector<30x128xf32> to vector<30xf32>
    %170 = vector.shape_cast %169 : vector<30xf32> to vector<30x1xf32>
    %cst_73 = arith.constant 6.250000e-02 : f32
    %171 = vector.broadcast %cst_73 : f32 to vector<30x1xf32>
    %172 = arith.mulf %170, %171 : vector<30x1xf32>
    %173 = arith.mulf %167, %167 : vector<30x1xf32>
    %174 = arith.subf %172, %173 : vector<30x1xf32>
    %175 = vector.broadcast %167 : vector<30x1xf32> to vector<30x128xf32>
    %176 = arith.subf %160, %175 : vector<30x128xf32>
    %cst_74 = arith.constant 9.99999974E-6 : f32
    %177 = vector.broadcast %cst_74 : f32 to vector<30x1xf32>
    %178 = arith.addf %174, %177 : vector<30x1xf32>
    %179 = math.rsqrt %178 : vector<30x1xf32>
    %180 = vector.broadcast %179 : vector<30x1xf32> to vector<30x128xf32>
    %181 = arith.mulf %176, %180 : vector<30x128xf32>
    %182 = vector.broadcast %162 : vector<1x128xf32> to vector<30x128xf32>
    %183 = arith.mulf %181, %182 : vector<30x128xf32>
    %184 = vector.broadcast %163 : vector<1x128xf32> to vector<30x128xf32>
    %185 = arith.addf %183, %184 : vector<30x128xf32>
    %c0_75 = arith.constant 0 : index
    %c0_76 = arith.constant 0 : index
    %186 = vector.load %arg21[%c0_75, %c0_76] : memref<128x384xf32, #tpu.memory_space<vmem>>, vector<128x384xf32>
    %cst_77 = arith.constant dense<0.000000e+00> : vector<30x384xf32>
    %187 = tpu.matmul %185, %186, %cst_77 {dimension_numbers = #tpu.dot_dimension_numbers<[1], [0], [0], [1], [0, 0, 1, 1], [], []>} : vector<30x128xf32>, vector<128x384xf32>, vector<30x384xf32> -> vector<30x384xf32>
    %c0_78 = arith.constant 0 : index
    %c0_79 = arith.constant 0 : index
    %188 = vector.load %arg22[%c0_78, %c0_79] : memref<1x384xf32, #tpu.memory_space<vmem>>, vector<1x384xf32>
    %189 = vector.broadcast %188 : vector<1x384xf32> to vector<30x384xf32>
    %190 = arith.addf %187, %189 : vector<30x384xf32>
    %191 = vector.extract_strided_slice %190 {offsets = [0, 0], sizes = [30, 128], strides = [1, 1]} : vector<30x384xf32> to vector<30x128xf32>
    %192 = vector.extract_strided_slice %190 {offsets = [0, 128], sizes = [30, 128], strides = [1, 1]} : vector<30x384xf32> to vector<30x128xf32>
    %193 = vector.extract_strided_slice %190 {offsets = [0, 256], sizes = [30, 128], strides = [1, 1]} : vector<30x384xf32> to vector<30x128xf32>
    %c0_80 = arith.constant 0 : index
    %c0_81 = arith.constant 0 : index
    %194 = vector.load %arg23[%c0_80, %c0_81] : memref<16x128xf32, #tpu.memory_space<vmem>>, vector<16x128xf32>
    %c0_82 = arith.constant 0 : index
    %c0_83 = arith.constant 0 : index
    %195 = vector.load %arg24[%c0_82, %c0_83] : memref<1x128xf32, #tpu.memory_space<vmem>>, vector<1x128xf32>
    %c0_84 = arith.constant 0 : index
    %c0_85 = arith.constant 0 : index
    %196 = vector.load %arg18[%c0_84, %c0_85] : memref<30x30xf32, #tpu.memory_space<vmem>>, vector<30x30xf32>
    %197 = vector.extract_strided_slice %191 {offsets = [0, 0], sizes = [30, 8], strides = [1, 1]} : vector<30x128xf32> to vector<30x8xf32>
    %198 = vector.extract_strided_slice %192 {offsets = [0, 0], sizes = [30, 8], strides = [1, 1]} : vector<30x128xf32> to vector<30x8xf32>
    %cst_86 = arith.constant dense<0.000000e+00> : vector<30x30xf32>
    %199 = tpu.matmul %197, %198, %cst_86 {dimension_numbers = #tpu.dot_dimension_numbers<[1], [1], [0], [0], [0, 0, 1, 0], [], []>} : vector<30x8xf32>, vector<30x8xf32>, vector<30x30xf32> -> vector<30x30xf32>
    %cst_87 = arith.constant 0.353553385 : f32
    %200 = vector.broadcast %cst_87 : f32 to vector<30x30xf32>
    %201 = arith.mulf %199, %200 : vector<30x30xf32>
    %202 = arith.addf %201, %196 : vector<30x30xf32>
    %cst_88 = arith.constant dense<0xFF800000> : vector<30xf32>
    %203 = vector.multi_reduction <maximumf>, %202, %cst_88 [1] : vector<30x30xf32> to vector<30xf32>
    %204 = vector.shape_cast %203 : vector<30xf32> to vector<30x1xf32>
    %205 = vector.broadcast %204 : vector<30x1xf32> to vector<30x30xf32>
    %206 = arith.subf %202, %205 : vector<30x30xf32>
    %207 = math.exp %206 : vector<30x30xf32>
    %cst_89 = arith.constant dense<0.000000e+00> : vector<30xf32>
    %208 = vector.multi_reduction <add>, %207, %cst_89 [1] : vector<30x30xf32> to vector<30xf32>
    %209 = vector.shape_cast %208 : vector<30xf32> to vector<30x1xf32>
    %210 = tpu.reciprocal %209 {approx = true} : vector<30x1xf32> -> vector<30x1xf32>
    %211 = vector.broadcast %210 : vector<30x1xf32> to vector<30x30xf32>
    %212 = arith.mulf %207, %211 : vector<30x30xf32>
    %213 = vector.extract_strided_slice %193 {offsets = [0, 0], sizes = [30, 8], strides = [1, 1]} : vector<30x128xf32> to vector<30x8xf32>
    %cst_90 = arith.constant dense<0.000000e+00> : vector<30x8xf32>
    %214 = tpu.matmul %212, %213, %cst_90 {dimension_numbers = #tpu.dot_dimension_numbers<[1], [0], [0], [1], [0, 0, 1, 1], [], []>} : vector<30x30xf32>, vector<30x8xf32>, vector<30x8xf32> -> vector<30x8xf32>
    %215 = vector.extract_strided_slice %191 {offsets = [0, 8], sizes = [30, 8], strides = [1, 1]} : vector<30x128xf32> to vector<30x8xf32>
    %216 = vector.extract_strided_slice %192 {offsets = [0, 8], sizes = [30, 8], strides = [1, 1]} : vector<30x128xf32> to vector<30x8xf32>
    %cst_91 = arith.constant dense<0.000000e+00> : vector<30x30xf32>
    %217 = tpu.matmul %215, %216, %cst_91 {dimension_numbers = #tpu.dot_dimension_numbers<[1], [1], [0], [0], [0, 0, 1, 0], [], []>} : vector<30x8xf32>, vector<30x8xf32>, vector<30x30xf32> -> vector<30x30xf32>
    %cst_92 = arith.constant 0.353553385 : f32
    %218 = vector.broadcast %cst_92 : f32 to vector<30x30xf32>
    %219 = arith.mulf %217, %218 : vector<30x30xf32>
    %220 = arith.addf %219, %196 : vector<30x30xf32>
    %cst_93 = arith.constant dense<0xFF800000> : vector<30xf32>
    %221 = vector.multi_reduction <maximumf>, %220, %cst_93 [1] : vector<30x30xf32> to vector<30xf32>
    %222 = vector.shape_cast %221 : vector<30xf32> to vector<30x1xf32>
    %223 = vector.broadcast %222 : vector<30x1xf32> to vector<30x30xf32>
    %224 = arith.subf %220, %223 : vector<30x30xf32>
    %225 = math.exp %224 : vector<30x30xf32>
    %cst_94 = arith.constant dense<0.000000e+00> : vector<30xf32>
    %226 = vector.multi_reduction <add>, %225, %cst_94 [1] : vector<30x30xf32> to vector<30xf32>
    %227 = vector.shape_cast %226 : vector<30xf32> to vector<30x1xf32>
    %228 = tpu.reciprocal %227 {approx = true} : vector<30x1xf32> -> vector<30x1xf32>
    %229 = vector.broadcast %228 : vector<30x1xf32> to vector<30x30xf32>
    %230 = arith.mulf %225, %229 : vector<30x30xf32>
    %231 = vector.extract_strided_slice %193 {offsets = [0, 8], sizes = [30, 8], strides = [1, 1]} : vector<30x128xf32> to vector<30x8xf32>
    %cst_95 = arith.constant dense<0.000000e+00> : vector<30x8xf32>
    %232 = tpu.matmul %230, %231, %cst_95 {dimension_numbers = #tpu.dot_dimension_numbers<[1], [0], [0], [1], [0, 0, 1, 1], [], []>} : vector<30x30xf32>, vector<30x8xf32>, vector<30x8xf32> -> vector<30x8xf32>
    %233 = tpu.concatenate %214, %232 in 1 : vector<30x8xf32>, vector<30x8xf32> -> vector<30x16xf32>
    %cst_96 = arith.constant dense<0.000000e+00> : vector<30x128xf32>
    %234 = tpu.matmul %233, %194, %cst_96 {dimension_numbers = #tpu.dot_dimension_numbers<[1], [0], [0], [1], [0, 0, 1, 1], [], []>} : vector<30x16xf32>, vector<16x128xf32>, vector<30x128xf32> -> vector<30x128xf32>
    %235 = vector.broadcast %195 : vector<1x128xf32> to vector<30x128xf32>
    %236 = arith.addf %234, %235 : vector<30x128xf32>
    %237 = arith.addf %185, %236 : vector<30x128xf32>
    %c0_97 = arith.constant 0 : index
    %c0_98 = arith.constant 0 : index
    %238 = vector.load %arg25[%c0_97, %c0_98] : memref<2x128xf32, #tpu.memory_space<vmem>>, vector<2x128xf32>
    %239 = vector.extract_strided_slice %238 {offsets = [0, 0], sizes = [1, 128], strides = [1, 1]} : vector<2x128xf32> to vector<1x128xf32>
    %240 = vector.extract_strided_slice %238 {offsets = [1, 0], sizes = [1, 128], strides = [1, 1]} : vector<2x128xf32> to vector<1x128xf32>
    %cst_99 = arith.constant dense<0.000000e+00> : vector<30xf32>
    %241 = vector.multi_reduction <add>, %237, %cst_99 [1] : vector<30x128xf32> to vector<30xf32>
    %242 = vector.shape_cast %241 : vector<30xf32> to vector<30x1xf32>
    %cst_100 = arith.constant 6.250000e-02 : f32
    %243 = vector.broadcast %cst_100 : f32 to vector<30x1xf32>
    %244 = arith.mulf %242, %243 : vector<30x1xf32>
    %245 = arith.mulf %237, %237 : vector<30x128xf32>
    %cst_101 = arith.constant dense<0.000000e+00> : vector<30xf32>
    %246 = vector.multi_reduction <add>, %245, %cst_101 [1] : vector<30x128xf32> to vector<30xf32>
    %247 = vector.shape_cast %246 : vector<30xf32> to vector<30x1xf32>
    %cst_102 = arith.constant 6.250000e-02 : f32
    %248 = vector.broadcast %cst_102 : f32 to vector<30x1xf32>
    %249 = arith.mulf %247, %248 : vector<30x1xf32>
    %250 = arith.mulf %244, %244 : vector<30x1xf32>
    %251 = arith.subf %249, %250 : vector<30x1xf32>
    %252 = vector.broadcast %244 : vector<30x1xf32> to vector<30x128xf32>
    %253 = arith.subf %237, %252 : vector<30x128xf32>
    %cst_103 = arith.constant 9.99999974E-6 : f32
    %254 = vector.broadcast %cst_103 : f32 to vector<30x1xf32>
    %255 = arith.addf %251, %254 : vector<30x1xf32>
    %256 = math.rsqrt %255 : vector<30x1xf32>
    %257 = vector.broadcast %256 : vector<30x1xf32> to vector<30x128xf32>
    %258 = arith.mulf %253, %257 : vector<30x128xf32>
    %259 = vector.broadcast %239 : vector<1x128xf32> to vector<30x128xf32>
    %260 = arith.mulf %258, %259 : vector<30x128xf32>
    %261 = vector.broadcast %240 : vector<1x128xf32> to vector<30x128xf32>
    %262 = arith.addf %260, %261 : vector<30x128xf32>
    %263 = vector.extract_strided_slice %262 {offsets = [0, 0], sizes = [18, 128], strides = [1, 1]} : vector<30x128xf32> to vector<18x128xf32>
    %c0_104 = arith.constant 0 : index
    %c0_105 = arith.constant 0 : index
    %264 = vector.load %arg26[%c0_104, %c0_105] : memref<128x128xf32, #tpu.memory_space<vmem>>, vector<128x128xf32>
    %cst_106 = arith.constant dense<0.000000e+00> : vector<18x128xf32>
    %265 = tpu.matmul %263, %264, %cst_106 {dimension_numbers = #tpu.dot_dimension_numbers<[1], [0], [0], [1], [0, 0, 1, 1], [], []>} : vector<18x128xf32>, vector<128x128xf32>, vector<18x128xf32> -> vector<18x128xf32>
    %c0_107 = arith.constant 0 : index
    %c0_108 = arith.constant 0 : index
    %266 = vector.load %arg27[%c0_107, %c0_108] : memref<1x128xf32, #tpu.memory_space<vmem>>, vector<1x128xf32>
    %267 = vector.broadcast %266 : vector<1x128xf32> to vector<18x128xf32>
    %268 = arith.addf %265, %267 : vector<18x128xf32>
    %c0_109 = arith.constant 0 : index
    %c0_110 = arith.constant 0 : index
    %269 = vector.load %arg28[%c0_109, %c0_110] : memref<128x256xf32, #tpu.memory_space<vmem>>, vector<128x256xf32>
    %cst_111 = arith.constant dense<0.000000e+00> : vector<40x256xf32>
    %270 = tpu.matmul %159, %269, %cst_111 {dimension_numbers = #tpu.dot_dimension_numbers<[1], [0], [0], [1], [0, 0, 1, 1], [], []>} : vector<40x128xf32>, vector<128x256xf32>, vector<40x256xf32> -> vector<40x256xf32>
    %c0_112 = arith.constant 0 : index
    %c0_113 = arith.constant 0 : index
    %271 = vector.load %arg29[%c0_112, %c0_113] : memref<1x256xf32, #tpu.memory_space<vmem>>, vector<1x256xf32>
    %272 = vector.broadcast %271 : vector<1x256xf32> to vector<40x256xf32>
    %273 = arith.addf %270, %272 : vector<40x256xf32>
    %274 = vector.extract_strided_slice %273 {offsets = [0, 0], sizes = [40, 128], strides = [1, 1]} : vector<40x256xf32> to vector<40x128xf32>
    %275 = vector.extract_strided_slice %273 {offsets = [0, 128], sizes = [40, 128], strides = [1, 1]} : vector<40x256xf32> to vector<40x128xf32>
    %c0_114 = arith.constant 0 : index
    %c0_115 = arith.constant 0 : index
    %276 = vector.load %arg30[%c0_114, %c0_115] : memref<16x128xf32, #tpu.memory_space<vmem>>, vector<16x128xf32>
    %c0_116 = arith.constant 0 : index
    %c0_117 = arith.constant 0 : index
    %277 = vector.load %arg31[%c0_116, %c0_117] : memref<1x128xf32, #tpu.memory_space<vmem>>, vector<1x128xf32>
    %c0_118 = arith.constant 0 : index
    %c0_119 = arith.constant 0 : index
    %278 = vector.load %arg19[%c0_118, %c0_119] : memref<18x40xf32, #tpu.memory_space<vmem>>, vector<18x40xf32>
    %279 = vector.extract_strided_slice %268 {offsets = [0, 0], sizes = [18, 8], strides = [1, 1]} : vector<18x128xf32> to vector<18x8xf32>
    %280 = vector.extract_strided_slice %274 {offsets = [0, 0], sizes = [40, 8], strides = [1, 1]} : vector<40x128xf32> to vector<40x8xf32>
    %cst_120 = arith.constant dense<0.000000e+00> : vector<18x40xf32>
    %281 = tpu.matmul %279, %280, %cst_120 {dimension_numbers = #tpu.dot_dimension_numbers<[1], [1], [0], [0], [0, 0, 1, 0], [], []>} : vector<18x8xf32>, vector<40x8xf32>, vector<18x40xf32> -> vector<18x40xf32>
    %cst_121 = arith.constant 0.353553385 : f32
    %282 = vector.broadcast %cst_121 : f32 to vector<18x40xf32>
    %283 = arith.mulf %281, %282 : vector<18x40xf32>
    %284 = arith.addf %283, %278 : vector<18x40xf32>
    %cst_122 = arith.constant dense<0xFF800000> : vector<18xf32>
    %285 = vector.multi_reduction <maximumf>, %284, %cst_122 [1] : vector<18x40xf32> to vector<18xf32>
    %286 = vector.shape_cast %285 : vector<18xf32> to vector<18x1xf32>
    %287 = vector.broadcast %286 : vector<18x1xf32> to vector<18x40xf32>
    %288 = arith.subf %284, %287 : vector<18x40xf32>
    %289 = math.exp %288 : vector<18x40xf32>
    %cst_123 = arith.constant dense<0.000000e+00> : vector<18xf32>
    %290 = vector.multi_reduction <add>, %289, %cst_123 [1] : vector<18x40xf32> to vector<18xf32>
    %291 = vector.shape_cast %290 : vector<18xf32> to vector<18x1xf32>
    %292 = tpu.reciprocal %291 {approx = true} : vector<18x1xf32> -> vector<18x1xf32>
    %293 = vector.broadcast %292 : vector<18x1xf32> to vector<18x40xf32>
    %294 = arith.mulf %289, %293 : vector<18x40xf32>
    %295 = vector.extract_strided_slice %275 {offsets = [0, 0], sizes = [40, 8], strides = [1, 1]} : vector<40x128xf32> to vector<40x8xf32>
    %cst_124 = arith.constant dense<0.000000e+00> : vector<18x8xf32>
    %296 = tpu.matmul %294, %295, %cst_124 {dimension_numbers = #tpu.dot_dimension_numbers<[1], [0], [0], [1], [0, 0, 1, 1], [], []>} : vector<18x40xf32>, vector<40x8xf32>, vector<18x8xf32> -> vector<18x8xf32>
    %297 = vector.extract_strided_slice %268 {offsets = [0, 8], sizes = [18, 8], strides = [1, 1]} : vector<18x128xf32> to vector<18x8xf32>
    %298 = vector.extract_strided_slice %274 {offsets = [0, 8], sizes = [40, 8], strides = [1, 1]} : vector<40x128xf32> to vector<40x8xf32>
    %cst_125 = arith.constant dense<0.000000e+00> : vector<18x40xf32>
    %299 = tpu.matmul %297, %298, %cst_125 {dimension_numbers = #tpu.dot_dimension_numbers<[1], [1], [0], [0], [0, 0, 1, 0], [], []>} : vector<18x8xf32>, vector<40x8xf32>, vector<18x40xf32> -> vector<18x40xf32>
    %cst_126 = arith.constant 0.353553385 : f32
    %300 = vector.broadcast %cst_126 : f32 to vector<18x40xf32>
    %301 = arith.mulf %299, %300 : vector<18x40xf32>
    %302 = arith.addf %301, %278 : vector<18x40xf32>
    %cst_127 = arith.constant dense<0xFF800000> : vector<18xf32>
    %303 = vector.multi_reduction <maximumf>, %302, %cst_127 [1] : vector<18x40xf32> to vector<18xf32>
    %304 = vector.shape_cast %303 : vector<18xf32> to vector<18x1xf32>
    %305 = vector.broadcast %304 : vector<18x1xf32> to vector<18x40xf32>
    %306 = arith.subf %302, %305 : vector<18x40xf32>
    %307 = math.exp %306 : vector<18x40xf32>
    %cst_128 = arith.constant dense<0.000000e+00> : vector<18xf32>
    %308 = vector.multi_reduction <add>, %307, %cst_128 [1] : vector<18x40xf32> to vector<18xf32>
    %309 = vector.shape_cast %308 : vector<18xf32> to vector<18x1xf32>
    %310 = tpu.reciprocal %309 {approx = true} : vector<18x1xf32> -> vector<18x1xf32>
    %311 = vector.broadcast %310 : vector<18x1xf32> to vector<18x40xf32>
    %312 = arith.mulf %307, %311 : vector<18x40xf32>
    %313 = vector.extract_strided_slice %275 {offsets = [0, 8], sizes = [40, 8], strides = [1, 1]} : vector<40x128xf32> to vector<40x8xf32>
    %cst_129 = arith.constant dense<0.000000e+00> : vector<18x8xf32>
    %314 = tpu.matmul %312, %313, %cst_129 {dimension_numbers = #tpu.dot_dimension_numbers<[1], [0], [0], [1], [0, 0, 1, 1], [], []>} : vector<18x40xf32>, vector<40x8xf32>, vector<18x8xf32> -> vector<18x8xf32>
    %315 = tpu.concatenate %296, %314 in 1 : vector<18x8xf32>, vector<18x8xf32> -> vector<18x16xf32>
    %cst_130 = arith.constant dense<0.000000e+00> : vector<18x128xf32>
    %316 = tpu.matmul %315, %276, %cst_130 {dimension_numbers = #tpu.dot_dimension_numbers<[1], [0], [0], [1], [0, 0, 1, 1], [], []>} : vector<18x16xf32>, vector<16x128xf32>, vector<18x128xf32> -> vector<18x128xf32>
    %317 = vector.broadcast %277 : vector<1x128xf32> to vector<18x128xf32>
    %318 = arith.addf %316, %317 : vector<18x128xf32>
    %319 = arith.addf %263, %318 : vector<18x128xf32>
    %c0_131 = arith.constant 0 : index
    %c0_132 = arith.constant 0 : index
    %320 = vector.load %arg32[%c0_131, %c0_132] : memref<2x128xf32, #tpu.memory_space<vmem>>, vector<2x128xf32>
    %321 = vector.extract_strided_slice %320 {offsets = [0, 0], sizes = [1, 128], strides = [1, 1]} : vector<2x128xf32> to vector<1x128xf32>
    %322 = vector.extract_strided_slice %320 {offsets = [1, 0], sizes = [1, 128], strides = [1, 1]} : vector<2x128xf32> to vector<1x128xf32>
    %cst_133 = arith.constant dense<0.000000e+00> : vector<18xf32>
    %323 = vector.multi_reduction <add>, %319, %cst_133 [1] : vector<18x128xf32> to vector<18xf32>
    %324 = vector.shape_cast %323 : vector<18xf32> to vector<18x1xf32>
    %cst_134 = arith.constant 6.250000e-02 : f32
    %325 = vector.broadcast %cst_134 : f32 to vector<18x1xf32>
    %326 = arith.mulf %324, %325 : vector<18x1xf32>
    %327 = arith.mulf %319, %319 : vector<18x128xf32>
    %cst_135 = arith.constant dense<0.000000e+00> : vector<18xf32>
    %328 = vector.multi_reduction <add>, %327, %cst_135 [1] : vector<18x128xf32> to vector<18xf32>
    %329 = vector.shape_cast %328 : vector<18xf32> to vector<18x1xf32>
    %cst_136 = arith.constant 6.250000e-02 : f32
    %330 = vector.broadcast %cst_136 : f32 to vector<18x1xf32>
    %331 = arith.mulf %329, %330 : vector<18x1xf32>
    %332 = arith.mulf %326, %326 : vector<18x1xf32>
    %333 = arith.subf %331, %332 : vector<18x1xf32>
    %334 = vector.broadcast %326 : vector<18x1xf32> to vector<18x128xf32>
    %335 = arith.subf %319, %334 : vector<18x128xf32>
    %cst_137 = arith.constant 9.99999974E-6 : f32
    %336 = vector.broadcast %cst_137 : f32 to vector<18x1xf32>
    %337 = arith.addf %333, %336 : vector<18x1xf32>
    %338 = math.rsqrt %337 : vector<18x1xf32>
    %339 = vector.broadcast %338 : vector<18x1xf32> to vector<18x128xf32>
    %340 = arith.mulf %335, %339 : vector<18x128xf32>
    %341 = vector.broadcast %321 : vector<1x128xf32> to vector<18x128xf32>
    %342 = arith.mulf %340, %341 : vector<18x128xf32>
    %343 = vector.broadcast %322 : vector<1x128xf32> to vector<18x128xf32>
    %344 = arith.addf %342, %343 : vector<18x128xf32>
    %c0_138 = arith.constant 0 : index
    %c0_139 = arith.constant 0 : index
    %345 = vector.load %arg33[%c0_138, %c0_139] : memref<128x128xf32, #tpu.memory_space<vmem>>, vector<128x128xf32>
    %c0_140 = arith.constant 0 : index
    %c0_141 = arith.constant 0 : index
    %346 = vector.load %arg34[%c0_140, %c0_141] : memref<1x128xf32, #tpu.memory_space<vmem>>, vector<1x128xf32>
    %c0_142 = arith.constant 0 : index
    %c0_143 = arith.constant 0 : index
    %347 = vector.load %arg35[%c0_142, %c0_143] : memref<128x128xf32, #tpu.memory_space<vmem>>, vector<128x128xf32>
    %c0_144 = arith.constant 0 : index
    %c0_145 = arith.constant 0 : index
    %348 = vector.load %arg36[%c0_144, %c0_145] : memref<1x128xf32, #tpu.memory_space<vmem>>, vector<1x128xf32>
    %cst_146 = arith.constant dense<0.000000e+00> : vector<18x128xf32>
    %349 = tpu.matmul %344, %345, %cst_146 {dimension_numbers = #tpu.dot_dimension_numbers<[1], [0], [0], [1], [0, 0, 1, 1], [], []>} : vector<18x128xf32>, vector<128x128xf32>, vector<18x128xf32> -> vector<18x128xf32>
    %350 = vector.broadcast %346 : vector<1x128xf32> to vector<18x128xf32>
    %351 = arith.addf %349, %350 : vector<18x128xf32>
    %352 = arith.mulf %351, %351 : vector<18x128xf32>
    %353 = arith.mulf %351, %352 : vector<18x128xf32>
    %cst_147 = arith.constant 4.471500e-02 : f32
    %354 = vector.broadcast %cst_147 : f32 to vector<18x128xf32>
    %355 = arith.mulf %354, %353 : vector<18x128xf32>
    %356 = arith.addf %351, %355 : vector<18x128xf32>
    %cst_148 = arith.constant 0.797884583 : f32
    %357 = vector.broadcast %cst_148 : f32 to vector<18x128xf32>
    %358 = arith.mulf %357, %356 : vector<18x128xf32>
    %359 = math.tanh %358 : vector<18x128xf32>
    %cst_149 = arith.constant 1.000000e+00 : f32
    %360 = vector.broadcast %cst_149 : f32 to vector<18x128xf32>
    %361 = arith.addf %360, %359 : vector<18x128xf32>
    %cst_150 = arith.constant 5.000000e-01 : f32
    %362 = vector.broadcast %cst_150 : f32 to vector<18x128xf32>
    %363 = arith.mulf %362, %361 : vector<18x128xf32>
    %364 = arith.mulf %351, %363 : vector<18x128xf32>
    %cst_151 = arith.constant dense<0.000000e+00> : vector<18x128xf32>
    %365 = tpu.matmul %364, %347, %cst_151 {dimension_numbers = #tpu.dot_dimension_numbers<[1], [0], [0], [1], [0, 0, 1, 1], [], []>} : vector<18x128xf32>, vector<128x128xf32>, vector<18x128xf32> -> vector<18x128xf32>
    %366 = vector.broadcast %348 : vector<1x128xf32> to vector<18x128xf32>
    %367 = arith.addf %365, %366 : vector<18x128xf32>
    %368 = arith.addf %344, %367 : vector<18x128xf32>
    %c0_152 = arith.constant 0 : index
    %c0_153 = arith.constant 0 : index
    %369 = vector.load %arg37[%c0_152, %c0_153] : memref<2x128xf32, #tpu.memory_space<vmem>>, vector<2x128xf32>
    %370 = vector.extract_strided_slice %369 {offsets = [0, 0], sizes = [1, 128], strides = [1, 1]} : vector<2x128xf32> to vector<1x128xf32>
    %371 = vector.extract_strided_slice %369 {offsets = [1, 0], sizes = [1, 128], strides = [1, 1]} : vector<2x128xf32> to vector<1x128xf32>
    %cst_154 = arith.constant dense<0.000000e+00> : vector<18xf32>
    %372 = vector.multi_reduction <add>, %368, %cst_154 [1] : vector<18x128xf32> to vector<18xf32>
    %373 = vector.shape_cast %372 : vector<18xf32> to vector<18x1xf32>
    %cst_155 = arith.constant 6.250000e-02 : f32
    %374 = vector.broadcast %cst_155 : f32 to vector<18x1xf32>
    %375 = arith.mulf %373, %374 : vector<18x1xf32>
    %376 = arith.mulf %368, %368 : vector<18x128xf32>
    %cst_156 = arith.constant dense<0.000000e+00> : vector<18xf32>
    %377 = vector.multi_reduction <add>, %376, %cst_156 [1] : vector<18x128xf32> to vector<18xf32>
    %378 = vector.shape_cast %377 : vector<18xf32> to vector<18x1xf32>
    %cst_157 = arith.constant 6.250000e-02 : f32
    %379 = vector.broadcast %cst_157 : f32 to vector<18x1xf32>
    %380 = arith.mulf %378, %379 : vector<18x1xf32>
    %381 = arith.mulf %375, %375 : vector<18x1xf32>
    %382 = arith.subf %380, %381 : vector<18x1xf32>
    %383 = vector.broadcast %375 : vector<18x1xf32> to vector<18x128xf32>
    %384 = arith.subf %368, %383 : vector<18x128xf32>
    %cst_158 = arith.constant 9.99999974E-6 : f32
    %385 = vector.broadcast %cst_158 : f32 to vector<18x1xf32>
    %386 = arith.addf %382, %385 : vector<18x1xf32>
    %387 = math.rsqrt %386 : vector<18x1xf32>
    %388 = vector.broadcast %387 : vector<18x1xf32> to vector<18x128xf32>
    %389 = arith.mulf %384, %388 : vector<18x128xf32>
    %390 = vector.broadcast %370 : vector<1x128xf32> to vector<18x128xf32>
    %391 = arith.mulf %389, %390 : vector<18x128xf32>
    %392 = vector.broadcast %371 : vector<1x128xf32> to vector<18x128xf32>
    %393 = arith.addf %391, %392 : vector<18x128xf32>
    %394 = vector.extract_strided_slice %393 {offsets = [0, 0], sizes = [8, 128], strides = [1, 1]} : vector<18x128xf32> to vector<8x128xf32>
    %c0_159 = arith.constant 0 : index
    %c0_160 = arith.constant 0 : index
    %395 = vector.load %arg38[%c0_159, %c0_160] : memref<128x128xf32, #tpu.memory_space<vmem>>, vector<128x128xf32>
    %cst_161 = arith.constant dense<0.000000e+00> : vector<8x128xf32>
    %396 = tpu.matmul %394, %395, %cst_161 {dimension_numbers = #tpu.dot_dimension_numbers<[1], [0], [0], [1], [0, 0, 1, 1], [], []>} : vector<8x128xf32>, vector<128x128xf32>, vector<8x128xf32> -> vector<8x128xf32>
    %c0_162 = arith.constant 0 : index
    %c0_163 = arith.constant 0 : index
    %397 = vector.load %arg39[%c0_162, %c0_163] : memref<1x128xf32, #tpu.memory_space<vmem>>, vector<1x128xf32>
    %398 = vector.broadcast %397 : vector<1x128xf32> to vector<8x128xf32>
    %399 = arith.addf %396, %398 : vector<8x128xf32>
    %c0_164 = arith.constant 0 : index
    %c0_165 = arith.constant 0 : index
    %400 = vector.load %arg40[%c0_164, %c0_165] : memref<18x128xf32, #tpu.memory_space<vmem>>, vector<18x128xf32>
    %401 = tpu.concatenate %400, %399 in 0 : vector<18x128xf32>, vector<8x128xf32> -> vector<26x128xf32>
    %c0_166 = arith.constant 0 : index
    %c0_167 = arith.constant 0 : index
    %402 = vector.load %arg42[%c0_166, %c0_167] : memref<2x128xf32, #tpu.memory_space<vmem>>, vector<2x128xf32>
    %403 = vector.extract_strided_slice %402 {offsets = [0, 0], sizes = [1, 128], strides = [1, 1]} : vector<2x128xf32> to vector<1x128xf32>
    %404 = vector.extract_strided_slice %402 {offsets = [1, 0], sizes = [1, 128], strides = [1, 1]} : vector<2x128xf32> to vector<1x128xf32>
    %cst_168 = arith.constant dense<0.000000e+00> : vector<26xf32>
    %405 = vector.multi_reduction <add>, %401, %cst_168 [1] : vector<26x128xf32> to vector<26xf32>
    %406 = vector.shape_cast %405 : vector<26xf32> to vector<26x1xf32>
    %cst_169 = arith.constant 3.125000e-02 : f32
    %407 = vector.broadcast %cst_169 : f32 to vector<26x1xf32>
    %408 = arith.mulf %406, %407 : vector<26x1xf32>
    %409 = arith.mulf %401, %401 : vector<26x128xf32>
    %cst_170 = arith.constant dense<0.000000e+00> : vector<26xf32>
    %410 = vector.multi_reduction <add>, %409, %cst_170 [1] : vector<26x128xf32> to vector<26xf32>
    %411 = vector.shape_cast %410 : vector<26xf32> to vector<26x1xf32>
    %cst_171 = arith.constant 3.125000e-02 : f32
    %412 = vector.broadcast %cst_171 : f32 to vector<26x1xf32>
    %413 = arith.mulf %411, %412 : vector<26x1xf32>
    %414 = arith.mulf %408, %408 : vector<26x1xf32>
    %415 = arith.subf %413, %414 : vector<26x1xf32>
    %416 = vector.broadcast %408 : vector<26x1xf32> to vector<26x128xf32>
    %417 = arith.subf %401, %416 : vector<26x128xf32>
    %cst_172 = arith.constant 9.99999974E-6 : f32
    %418 = vector.broadcast %cst_172 : f32 to vector<26x1xf32>
    %419 = arith.addf %415, %418 : vector<26x1xf32>
    %420 = math.rsqrt %419 : vector<26x1xf32>
    %421 = vector.broadcast %420 : vector<26x1xf32> to vector<26x128xf32>
    %422 = arith.mulf %417, %421 : vector<26x128xf32>
    %423 = vector.broadcast %403 : vector<1x128xf32> to vector<26x128xf32>
    %424 = arith.mulf %422, %423 : vector<26x128xf32>
    %425 = vector.broadcast %404 : vector<1x128xf32> to vector<26x128xf32>
    %426 = arith.addf %424, %425 : vector<26x128xf32>
    %c0_173 = arith.constant 0 : index
    %c0_174 = arith.constant 0 : index
    %427 = vector.load %arg43[%c0_173, %c0_174] : memref<128x384xf32, #tpu.memory_space<vmem>>, vector<128x384xf32>
    %cst_175 = arith.constant dense<0.000000e+00> : vector<26x384xf32>
    %428 = tpu.matmul %426, %427, %cst_175 {dimension_numbers = #tpu.dot_dimension_numbers<[1], [0], [0], [1], [0, 0, 1, 1], [], []>} : vector<26x128xf32>, vector<128x384xf32>, vector<26x384xf32> -> vector<26x384xf32>
    %c0_176 = arith.constant 0 : index
    %c0_177 = arith.constant 0 : index
    %429 = vector.load %arg44[%c0_176, %c0_177] : memref<1x384xf32, #tpu.memory_space<vmem>>, vector<1x384xf32>
    %430 = vector.broadcast %429 : vector<1x384xf32> to vector<26x384xf32>
    %431 = arith.addf %428, %430 : vector<26x384xf32>
    %432 = vector.extract_strided_slice %431 {offsets = [0, 0], sizes = [26, 128], strides = [1, 1]} : vector<26x384xf32> to vector<26x128xf32>
    %433 = vector.extract_strided_slice %431 {offsets = [0, 128], sizes = [26, 128], strides = [1, 1]} : vector<26x384xf32> to vector<26x128xf32>
    %434 = vector.extract_strided_slice %431 {offsets = [0, 256], sizes = [26, 128], strides = [1, 1]} : vector<26x384xf32> to vector<26x128xf32>
    %c0_178 = arith.constant 0 : index
    %c0_179 = arith.constant 0 : index
    %435 = vector.load %arg45[%c0_178, %c0_179] : memref<32x128xf32, #tpu.memory_space<vmem>>, vector<32x128xf32>
    %c0_180 = arith.constant 0 : index
    %c0_181 = arith.constant 0 : index
    %436 = vector.load %arg46[%c0_180, %c0_181] : memref<1x128xf32, #tpu.memory_space<vmem>>, vector<1x128xf32>
    %c0_182 = arith.constant 0 : index
    %c0_183 = arith.constant 0 : index
    %437 = vector.load %arg41[%c0_182, %c0_183] : memref<26x26xf32, #tpu.memory_space<vmem>>, vector<26x26xf32>
    %438 = vector.extract_strided_slice %432 {offsets = [0, 0], sizes = [26, 16], strides = [1, 1]} : vector<26x128xf32> to vector<26x16xf32>
    %439 = vector.extract_strided_slice %433 {offsets = [0, 0], sizes = [26, 16], strides = [1, 1]} : vector<26x128xf32> to vector<26x16xf32>
    %cst_184 = arith.constant dense<0.000000e+00> : vector<26x26xf32>
    %440 = tpu.matmul %438, %439, %cst_184 {dimension_numbers = #tpu.dot_dimension_numbers<[1], [1], [0], [0], [0, 0, 1, 0], [], []>} : vector<26x16xf32>, vector<26x16xf32>, vector<26x26xf32> -> vector<26x26xf32>
    %cst_185 = arith.constant 2.500000e-01 : f32
    %441 = vector.broadcast %cst_185 : f32 to vector<26x26xf32>
    %442 = arith.mulf %440, %441 : vector<26x26xf32>
    %443 = arith.addf %442, %437 : vector<26x26xf32>
    %cst_186 = arith.constant dense<0xFF800000> : vector<26xf32>
    %444 = vector.multi_reduction <maximumf>, %443, %cst_186 [1] : vector<26x26xf32> to vector<26xf32>
    %445 = vector.shape_cast %444 : vector<26xf32> to vector<26x1xf32>
    %446 = vector.broadcast %445 : vector<26x1xf32> to vector<26x26xf32>
    %447 = arith.subf %443, %446 : vector<26x26xf32>
    %448 = math.exp %447 : vector<26x26xf32>
    %cst_187 = arith.constant dense<0.000000e+00> : vector<26xf32>
    %449 = vector.multi_reduction <add>, %448, %cst_187 [1] : vector<26x26xf32> to vector<26xf32>
    %450 = vector.shape_cast %449 : vector<26xf32> to vector<26x1xf32>
    %451 = tpu.reciprocal %450 {approx = true} : vector<26x1xf32> -> vector<26x1xf32>
    %452 = vector.broadcast %451 : vector<26x1xf32> to vector<26x26xf32>
    %453 = arith.mulf %448, %452 : vector<26x26xf32>
    %454 = vector.extract_strided_slice %434 {offsets = [0, 0], sizes = [26, 16], strides = [1, 1]} : vector<26x128xf32> to vector<26x16xf32>
    %cst_188 = arith.constant dense<0.000000e+00> : vector<26x16xf32>
    %455 = tpu.matmul %453, %454, %cst_188 {dimension_numbers = #tpu.dot_dimension_numbers<[1], [0], [0], [1], [0, 0, 1, 1], [], []>} : vector<26x26xf32>, vector<26x16xf32>, vector<26x16xf32> -> vector<26x16xf32>
    %456 = vector.extract_strided_slice %432 {offsets = [0, 16], sizes = [26, 16], strides = [1, 1]} : vector<26x128xf32> to vector<26x16xf32>
    %457 = vector.extract_strided_slice %433 {offsets = [0, 16], sizes = [26, 16], strides = [1, 1]} : vector<26x128xf32> to vector<26x16xf32>
    %cst_189 = arith.constant dense<0.000000e+00> : vector<26x26xf32>
    %458 = tpu.matmul %456, %457, %cst_189 {dimension_numbers = #tpu.dot_dimension_numbers<[1], [1], [0], [0], [0, 0, 1, 0], [], []>} : vector<26x16xf32>, vector<26x16xf32>, vector<26x26xf32> -> vector<26x26xf32>
    %cst_190 = arith.constant 2.500000e-01 : f32
    %459 = vector.broadcast %cst_190 : f32 to vector<26x26xf32>
    %460 = arith.mulf %458, %459 : vector<26x26xf32>
    %461 = arith.addf %460, %437 : vector<26x26xf32>
    %cst_191 = arith.constant dense<0xFF800000> : vector<26xf32>
    %462 = vector.multi_reduction <maximumf>, %461, %cst_191 [1] : vector<26x26xf32> to vector<26xf32>
    %463 = vector.shape_cast %462 : vector<26xf32> to vector<26x1xf32>
    %464 = vector.broadcast %463 : vector<26x1xf32> to vector<26x26xf32>
    %465 = arith.subf %461, %464 : vector<26x26xf32>
    %466 = math.exp %465 : vector<26x26xf32>
    %cst_192 = arith.constant dense<0.000000e+00> : vector<26xf32>
    %467 = vector.multi_reduction <add>, %466, %cst_192 [1] : vector<26x26xf32> to vector<26xf32>
    %468 = vector.shape_cast %467 : vector<26xf32> to vector<26x1xf32>
    %469 = tpu.reciprocal %468 {approx = true} : vector<26x1xf32> -> vector<26x1xf32>
    %470 = vector.broadcast %469 : vector<26x1xf32> to vector<26x26xf32>
    %471 = arith.mulf %466, %470 : vector<26x26xf32>
    %472 = vector.extract_strided_slice %434 {offsets = [0, 16], sizes = [26, 16], strides = [1, 1]} : vector<26x128xf32> to vector<26x16xf32>
    %cst_193 = arith.constant dense<0.000000e+00> : vector<26x16xf32>
    %473 = tpu.matmul %471, %472, %cst_193 {dimension_numbers = #tpu.dot_dimension_numbers<[1], [0], [0], [1], [0, 0, 1, 1], [], []>} : vector<26x26xf32>, vector<26x16xf32>, vector<26x16xf32> -> vector<26x16xf32>
    %474 = tpu.concatenate %455, %473 in 1 : vector<26x16xf32>, vector<26x16xf32> -> vector<26x32xf32>
    %cst_194 = arith.constant dense<0.000000e+00> : vector<26x128xf32>
    %475 = tpu.matmul %474, %435, %cst_194 {dimension_numbers = #tpu.dot_dimension_numbers<[1], [0], [0], [1], [0, 0, 1, 1], [], []>} : vector<26x32xf32>, vector<32x128xf32>, vector<26x128xf32> -> vector<26x128xf32>
    %476 = vector.broadcast %436 : vector<1x128xf32> to vector<26x128xf32>
    %477 = arith.addf %475, %476 : vector<26x128xf32>
    %478 = arith.addf %401, %477 : vector<26x128xf32>
    %c0_195 = arith.constant 0 : index
    %c0_196 = arith.constant 0 : index
    %479 = vector.load %arg47[%c0_195, %c0_196] : memref<2x128xf32, #tpu.memory_space<vmem>>, vector<2x128xf32>
    %480 = vector.extract_strided_slice %479 {offsets = [0, 0], sizes = [1, 128], strides = [1, 1]} : vector<2x128xf32> to vector<1x128xf32>
    %481 = vector.extract_strided_slice %479 {offsets = [1, 0], sizes = [1, 128], strides = [1, 1]} : vector<2x128xf32> to vector<1x128xf32>
    %cst_197 = arith.constant dense<0.000000e+00> : vector<26xf32>
    %482 = vector.multi_reduction <add>, %478, %cst_197 [1] : vector<26x128xf32> to vector<26xf32>
    %483 = vector.shape_cast %482 : vector<26xf32> to vector<26x1xf32>
    %cst_198 = arith.constant 3.125000e-02 : f32
    %484 = vector.broadcast %cst_198 : f32 to vector<26x1xf32>
    %485 = arith.mulf %483, %484 : vector<26x1xf32>
    %486 = arith.mulf %478, %478 : vector<26x128xf32>
    %cst_199 = arith.constant dense<0.000000e+00> : vector<26xf32>
    %487 = vector.multi_reduction <add>, %486, %cst_199 [1] : vector<26x128xf32> to vector<26xf32>
    %488 = vector.shape_cast %487 : vector<26xf32> to vector<26x1xf32>
    %cst_200 = arith.constant 3.125000e-02 : f32
    %489 = vector.broadcast %cst_200 : f32 to vector<26x1xf32>
    %490 = arith.mulf %488, %489 : vector<26x1xf32>
    %491 = arith.mulf %485, %485 : vector<26x1xf32>
    %492 = arith.subf %490, %491 : vector<26x1xf32>
    %493 = vector.broadcast %485 : vector<26x1xf32> to vector<26x128xf32>
    %494 = arith.subf %478, %493 : vector<26x128xf32>
    %cst_201 = arith.constant 9.99999974E-6 : f32
    %495 = vector.broadcast %cst_201 : f32 to vector<26x1xf32>
    %496 = arith.addf %492, %495 : vector<26x1xf32>
    %497 = math.rsqrt %496 : vector<26x1xf32>
    %498 = vector.broadcast %497 : vector<26x1xf32> to vector<26x128xf32>
    %499 = arith.mulf %494, %498 : vector<26x128xf32>
    %500 = vector.broadcast %480 : vector<1x128xf32> to vector<26x128xf32>
    %501 = arith.mulf %499, %500 : vector<26x128xf32>
    %502 = vector.broadcast %481 : vector<1x128xf32> to vector<26x128xf32>
    %503 = arith.addf %501, %502 : vector<26x128xf32>
    %c0_202 = arith.constant 0 : index
    %c0_203 = arith.constant 0 : index
    %504 = vector.load %arg48[%c0_202, %c0_203] : memref<128x128xf32, #tpu.memory_space<vmem>>, vector<128x128xf32>
    %c0_204 = arith.constant 0 : index
    %c0_205 = arith.constant 0 : index
    %505 = vector.load %arg49[%c0_204, %c0_205] : memref<1x128xf32, #tpu.memory_space<vmem>>, vector<1x128xf32>
    %c0_206 = arith.constant 0 : index
    %c0_207 = arith.constant 0 : index
    %506 = vector.load %arg50[%c0_206, %c0_207] : memref<128x128xf32, #tpu.memory_space<vmem>>, vector<128x128xf32>
    %c0_208 = arith.constant 0 : index
    %c0_209 = arith.constant 0 : index
    %507 = vector.load %arg51[%c0_208, %c0_209] : memref<1x128xf32, #tpu.memory_space<vmem>>, vector<1x128xf32>
    %cst_210 = arith.constant dense<0.000000e+00> : vector<26x128xf32>
    %508 = tpu.matmul %503, %504, %cst_210 {dimension_numbers = #tpu.dot_dimension_numbers<[1], [0], [0], [1], [0, 0, 1, 1], [], []>} : vector<26x128xf32>, vector<128x128xf32>, vector<26x128xf32> -> vector<26x128xf32>
    %509 = vector.broadcast %505 : vector<1x128xf32> to vector<26x128xf32>
    %510 = arith.addf %508, %509 : vector<26x128xf32>
    %511 = arith.mulf %510, %510 : vector<26x128xf32>
    %512 = arith.mulf %510, %511 : vector<26x128xf32>
    %cst_211 = arith.constant 4.471500e-02 : f32
    %513 = vector.broadcast %cst_211 : f32 to vector<26x128xf32>
    %514 = arith.mulf %513, %512 : vector<26x128xf32>
    %515 = arith.addf %510, %514 : vector<26x128xf32>
    %cst_212 = arith.constant 0.797884583 : f32
    %516 = vector.broadcast %cst_212 : f32 to vector<26x128xf32>
    %517 = arith.mulf %516, %515 : vector<26x128xf32>
    %518 = math.tanh %517 : vector<26x128xf32>
    %cst_213 = arith.constant 1.000000e+00 : f32
    %519 = vector.broadcast %cst_213 : f32 to vector<26x128xf32>
    %520 = arith.addf %519, %518 : vector<26x128xf32>
    %cst_214 = arith.constant 5.000000e-01 : f32
    %521 = vector.broadcast %cst_214 : f32 to vector<26x128xf32>
    %522 = arith.mulf %521, %520 : vector<26x128xf32>
    %523 = arith.mulf %510, %522 : vector<26x128xf32>
    %cst_215 = arith.constant dense<0.000000e+00> : vector<26x128xf32>
    %524 = tpu.matmul %523, %506, %cst_215 {dimension_numbers = #tpu.dot_dimension_numbers<[1], [0], [0], [1], [0, 0, 1, 1], [], []>} : vector<26x128xf32>, vector<128x128xf32>, vector<26x128xf32> -> vector<26x128xf32>
    %525 = vector.broadcast %507 : vector<1x128xf32> to vector<26x128xf32>
    %526 = arith.addf %524, %525 : vector<26x128xf32>
    %527 = arith.addf %478, %526 : vector<26x128xf32>
    %c0_216 = arith.constant 0 : index
    %c0_217 = arith.constant 0 : index
    %528 = vector.load %arg52[%c0_216, %c0_217] : memref<2x128xf32, #tpu.memory_space<vmem>>, vector<2x128xf32>
    %529 = vector.extract_strided_slice %528 {offsets = [0, 0], sizes = [1, 128], strides = [1, 1]} : vector<2x128xf32> to vector<1x128xf32>
    %530 = vector.extract_strided_slice %528 {offsets = [1, 0], sizes = [1, 128], strides = [1, 1]} : vector<2x128xf32> to vector<1x128xf32>
    %cst_218 = arith.constant dense<0.000000e+00> : vector<26xf32>
    %531 = vector.multi_reduction <add>, %527, %cst_218 [1] : vector<26x128xf32> to vector<26xf32>
    %532 = vector.shape_cast %531 : vector<26xf32> to vector<26x1xf32>
    %cst_219 = arith.constant 3.125000e-02 : f32
    %533 = vector.broadcast %cst_219 : f32 to vector<26x1xf32>
    %534 = arith.mulf %532, %533 : vector<26x1xf32>
    %535 = arith.mulf %527, %527 : vector<26x128xf32>
    %cst_220 = arith.constant dense<0.000000e+00> : vector<26xf32>
    %536 = vector.multi_reduction <add>, %535, %cst_220 [1] : vector<26x128xf32> to vector<26xf32>
    %537 = vector.shape_cast %536 : vector<26xf32> to vector<26x1xf32>
    %cst_221 = arith.constant 3.125000e-02 : f32
    %538 = vector.broadcast %cst_221 : f32 to vector<26x1xf32>
    %539 = arith.mulf %537, %538 : vector<26x1xf32>
    %540 = arith.mulf %534, %534 : vector<26x1xf32>
    %541 = arith.subf %539, %540 : vector<26x1xf32>
    %542 = vector.broadcast %534 : vector<26x1xf32> to vector<26x128xf32>
    %543 = arith.subf %527, %542 : vector<26x128xf32>
    %cst_222 = arith.constant 9.99999974E-6 : f32
    %544 = vector.broadcast %cst_222 : f32 to vector<26x1xf32>
    %545 = arith.addf %541, %544 : vector<26x1xf32>
    %546 = math.rsqrt %545 : vector<26x1xf32>
    %547 = vector.broadcast %546 : vector<26x1xf32> to vector<26x128xf32>
    %548 = arith.mulf %543, %547 : vector<26x128xf32>
    %549 = vector.broadcast %529 : vector<1x128xf32> to vector<26x128xf32>
    %550 = arith.mulf %548, %549 : vector<26x128xf32>
    %551 = vector.broadcast %530 : vector<1x128xf32> to vector<26x128xf32>
    %552 = arith.addf %550, %551 : vector<26x128xf32>
    %553 = vector.extract_strided_slice %552 {offsets = [0, 0], sizes = [16, 128], strides = [1, 1]} : vector<26x128xf32> to vector<16x128xf32>
    %c0_223 = arith.constant 0 : index
    %c0_224 = arith.constant 0 : index
    %554 = vector.load %arg53[%c0_223, %c0_224] : memref<128x128xf32, #tpu.memory_space<vmem>>, vector<128x128xf32>
    %cst_225 = arith.constant dense<0.000000e+00> : vector<16x128xf32>
    %555 = tpu.matmul %553, %554, %cst_225 {dimension_numbers = #tpu.dot_dimension_numbers<[1], [0], [0], [1], [0, 0, 1, 1], [], []>} : vector<16x128xf32>, vector<128x128xf32>, vector<16x128xf32> -> vector<16x128xf32>
    %c0_226 = arith.constant 0 : index
    %c0_227 = arith.constant 0 : index
    %556 = vector.load %arg54[%c0_226, %c0_227] : memref<1x128xf32, #tpu.memory_space<vmem>>, vector<1x128xf32>
    %557 = vector.broadcast %556 : vector<1x128xf32> to vector<16x128xf32>
    %558 = arith.addf %555, %557 : vector<16x128xf32>
    %cst_228 = arith.constant dense<0xFF800000> : vector<16xf32>
    %559 = vector.multi_reduction <maximumf>, %558, %cst_228 [1] : vector<16x128xf32> to vector<16xf32>
    %560 = vector.shape_cast %559 : vector<16xf32> to vector<16x1xf32>
    %561 = vector.broadcast %560 : vector<16x1xf32> to vector<16x128xf32>
    %562 = arith.subf %558, %561 : vector<16x128xf32>
    %563 = math.exp %562 : vector<16x128xf32>
    %cst_229 = arith.constant dense<0.000000e+00> : vector<16xf32>
    %564 = vector.multi_reduction <add>, %563, %cst_229 [1] : vector<16x128xf32> to vector<16xf32>
    %565 = vector.shape_cast %564 : vector<16xf32> to vector<16x1xf32>
    %566 = math.log %565 : vector<16x1xf32>
    %567 = arith.addf %566, %560 : vector<16x1xf32>
    %c0_230 = arith.constant 0 : index
    %c0_231 = arith.constant 0 : index
    %568 = vector.load %arg55[%c0_230, %c0_231] : memref<16x1xi32, #tpu.memory_space<vmem>>, vector<16x1xi32>
    %569 = tpu.iota {dimensions = array<i32: 1>} : vector<16x128xi32>
    %570 = vector.broadcast %568 : vector<16x1xi32> to vector<16x128xi32>
    %571 = arith.cmpi eq, %570, %569 : vector<16x128xi32>
    %572 = arith.extui %571 : vector<16x128xi1> to vector<16x128xi32>
    %573 = arith.sitofp %572 : vector<16x128xi32> to vector<16x128xf32>
    %574 = arith.mulf %558, %573 : vector<16x128xf32>
    %cst_232 = arith.constant dense<0.000000e+00> : vector<16xf32>
    %575 = vector.multi_reduction <add>, %574, %cst_232 [1] : vector<16x128xf32> to vector<16xf32>
    %576 = vector.shape_cast %575 : vector<16xf32> to vector<16x1xf32>
    %577 = arith.subf %567, %576 : vector<16x1xf32>
    %c0_233 = arith.constant 0 : index
    %c0_234 = arith.constant 0 : index
    %578 = vector.load %arg56[%c0_233, %c0_234] : memref<16x1xf32, #tpu.memory_space<vmem>>, vector<16x1xf32>
    %579 = arith.mulf %577, %578 : vector<16x1xf32>
    %cst_235 = arith.constant dense<0.000000e+00> : vector<1xf32>
    %580 = vector.multi_reduction <add>, %579, %cst_235 [0] : vector<16x1xf32> to vector<1xf32>
    %581 = vector.shape_cast %580 : vector<1xf32> to vector<1x1xf32>
    %c0_236 = arith.constant 0 : index
    %c0_237 = arith.constant 0 : index
    %582 = vector.load %arg56[%c0_236, %c0_237] : memref<16x1xf32, #tpu.memory_space<vmem>>, vector<16x1xf32>
    %cst_238 = arith.constant dense<0.000000e+00> : vector<1xf32>
    %583 = vector.multi_reduction <add>, %582, %cst_238 [0] : vector<16x1xf32> to vector<1xf32>
    %584 = vector.shape_cast %583 : vector<1xf32> to vector<1x1xf32>
    %585 = arith.divf %581, %584 : vector<1x1xf32>
    %c0_239 = arith.constant 0 : index
    %c0_240 = arith.constant 0 : index
    %586 = vector.load %arg57[%c0_239, %c0_240] : memref<1x1xf32, #tpu.memory_space<vmem>>, vector<1x1xf32>
    tpu.vector_store %arg57[%c0_239, %c0_240], %585 {strides = array<i32>} : memref<1x1xf32, #tpu.memory_space<vmem>>, vector<1x1xf32>,
    return
  }
}

</mosaic_0001>

<llo_original>
// kernel: osm_forward.1
$region0: #{osm_forward.1}
  #allocation0 [shape = 'u32[]', space=smem, size = 0x4, offset = 0x4, fixed_abs, tag = 'smem constant byte address 0x4 - core index']
  #allocation1 [shape = 'u32[72,128]{1,0:T(1,128)}', space=vmem, size = 0x9000, scoped, tag = 'internal scratch']
  %s0 = inlined_call_operand.smem [shape: u32[58], index: -1, kind: input, shape index: {}]
  %s1 = sld [smem:[%s0]]
  %s2 = scalar_lea.smem %s0, 1
  %s3 = sld [smem:[%s2]]
  %s4 = scalar_lea.smem %s0, 2
  %s5 = sld [smem:[%s4]]
  %s6 = scalar_lea.smem %s0, 3
  %s7 = sld [smem:[%s6]]
  %s8 = scalar_lea.smem %s0, 4
  %s9 = sld [smem:[%s8]]
  %s10 = scalar_lea.smem %s0, 5
  %s11 = sld [smem:[%s10]]
  %s12 = scalar_lea.smem %s0, 6
  %s13 = sld [smem:[%s12]]
  %s14 = scalar_lea.smem %s0, 7
  %s15 = sld [smem:[%s14]]
  %s16 = scalar_lea.smem %s0, 8
  %s17 = sld [smem:[%s16]]
  %s18 = scalar_lea.smem %s0, 9
  %s19 = sld [smem:[%s18]]
  %s20 = scalar_lea.smem %s0, 10
  %s21 = sld [smem:[%s20]]
  %s22 = scalar_lea.smem %s0, 11
  %s23 = sld [smem:[%s22]]
  %s24 = scalar_lea.smem %s0, 12
  %s25 = sld [smem:[%s24]]
  %s26 = scalar_lea.smem %s0, 13
  %s27 = sld [smem:[%s26]]
  %s28 = scalar_lea.smem %s0, 14
  %s29 = sld [smem:[%s28]]
  %s30 = scalar_lea.smem %s0, 15
  %s31 = sld [smem:[%s30]]
  %s32 = scalar_lea.smem %s0, 16
  %s33 = sld [smem:[%s32]]
  %s34 = scalar_lea.smem %s0, 17
  %s35 = sld [smem:[%s34]]
  %s36 = scalar_lea.smem %s0, 18
  %s37 = sld [smem:[%s36]]
  %s38 = scalar_lea.smem %s0, 19
  %s39 = sld [smem:[%s38]]
  %s40 = scalar_lea.smem %s0, 20
  %s41 = sld [smem:[%s40]]
  %s42 = scalar_lea.smem %s0, 21
  %s43 = sld [smem:[%s42]]
  %s44 = scalar_lea.smem %s0, 22
  %s45 = sld [smem:[%s44]]
  %s46 = scalar_lea.smem %s0, 23
  %s47 = sld [smem:[%s46]]
  %s48 = scalar_lea.smem %s0, 24
  %s49 = sld [smem:[%s48]]
  %s50 = scalar_lea.smem %s0, 25
  %s51 = sld [smem:[%s50]]
  %s52 = scalar_lea.smem %s0, 26
  %s53 = sld [smem:[%s52]]
  %s54 = scalar_lea.smem %s0, 27
  %s55 = sld [smem:[%s54]]
  %s56 = scalar_lea.smem %s0, 28
  %s57 = sld [smem:[%s56]]
  %s58 = scalar_lea.smem %s0, 29
  %s59 = sld [smem:[%s58]]
  %s60 = scalar_lea.smem %s0, 30
  %s61 = sld [smem:[%s60]]
  %s62 = scalar_lea.smem %s0, 31
  %s63 = sld [smem:[%s62]]
  %s64 = scalar_lea.smem %s0, 32
  %s65 = sld [smem:[%s64]]
  %s66 = scalar_lea.smem %s0, 33
  %s67 = sld [smem:[%s66]]
  %s68 = scalar_lea.smem %s0, 34
  %s69 = sld [smem:[%s68]]
  %s70 = scalar_lea.smem %s0, 35
  %s71 = sld [smem:[%s70]]
  %s72 = scalar_lea.smem %s0, 36
  %s73 = sld [smem:[%s72]]
  %s74 = scalar_lea.smem %s0, 37
  %s75 = sld [smem:[%s74]]
  %s76 = scalar_lea.smem %s0, 38
  %s77 = sld [smem:[%s76]]
  %s78 = scalar_lea.smem %s0, 39
  %s79 = sld [smem:[%s78]]
  %s80 = scalar_lea.smem %s0, 40
  %s81 = sld [smem:[%s80]]
  %s82 = scalar_lea.smem %s0, 41
  %s83 = sld [smem:[%s82]]
  %s84 = scalar_lea.smem %s0, 42
  %s85 = sld [smem:[%s84]]
  %s86 = scalar_lea.smem %s0, 43
  %s87 = sld [smem:[%s86]]
  %s88 = scalar_lea.smem %s0, 44
  %s89 = sld [smem:[%s88]]
  %s90 = scalar_lea.smem %s0, 45
  %s91 = sld [smem:[%s90]]
  %s92 = scalar_lea.smem %s0, 46
  %s93 = sld [smem:[%s92]]
  %s94 = scalar_lea.smem %s0, 47
  %s95 = sld [smem:[%s94]]
  %s96 = scalar_lea.smem %s0, 48
  %s97 = sld [smem:[%s96]]
  %s98 = scalar_lea.smem %s0, 49
  %s99 = sld [smem:[%s98]]
  %s100 = scalar_lea.smem %s0, 50
  %s101 = sld [smem:[%s100]]
  %s102 = scalar_lea.smem %s0, 51
  %s103 = sld [smem:[%s102]]
  %s104 = scalar_lea.smem %s0, 52
  %s105 = sld [smem:[%s104]]
  %s106 = scalar_lea.smem %s0, 53
  %s107 = sld [smem:[%s106]]
  %s108 = scalar_lea.smem %s0, 54
  %s109 = sld [smem:[%s108]]
  %s110 = scalar_lea.smem %s0, 55
  %s111 = sld [smem:[%s110]]
  %s112 = scalar_lea.smem %s0, 56
  %s113 = sld [smem:[%s112]]
  %s114 = scalar_lea.smem %s0, 57
  %s115 = sld [smem:[%s114]]
  %s116 = sld [smem:[#allocation0]]
  $region318: #{osm_forward.1} parent=0
    _
  %s118 = ssub.s32 1, %s116
  %s119 = scalar_select 0, %s118, %s116
  $region1: #{osm_forward.1} parent=0
    #allocation2 [shape = 'u8[512]{0}', space=vmem, size = 0x400, scoped, tag = 'input window, operand 10, single buffered']
    #allocation3 [shape = 's32[1]{0}', space=sflag, size = 0x4, scoped, tag = 'scoped memory for osm_forward.1']
    #allocation4 [shape = 's32[1]{0}', space=sflag, size = 0x4, scoped, tag = 'scoped memory for osm_forward.1']
    #allocation5 [shape = 'u8[512]{0}', space=vmem, size = 0x400, scoped, tag = 'input window, operand 13, single buffered']
    #allocation6 [shape = 's32[1]{0}', space=sflag, size = 0x4, scoped, tag = 'scoped memory for osm_forward.1']
    #allocation7 [shape = 'u8[512]{0}', space=vmem, size = 0x400, scoped, tag = 'input window, operand 15, single buffered']
    #allocation8 [shape = 'u8[512]{0}', space=vmem, size = 0x400, scoped, tag = 'input window, operand 24, single buffered']
    #allocation9 [shape = 's32[1]{0}', space=sflag, size = 0x4, scoped, tag = 'scoped memory for osm_forward.1']
    #allocation10 [shape = 'u8[1024]{0}', space=vmem, size = 0x400, scoped, tag = 'input window, operand 25, single buffered']
    #allocation11 [shape = 'u8[512]{0}', space=vmem, size = 0x400, scoped, tag = 'input window, operand 27, single buffered']
    #allocation12 [shape = 's32[1]{0}', space=sflag, size = 0x4, scoped, tag = 'scoped memory for osm_forward.1']
    #allocation13 [shape = 'u8[1024]{0}', space=vmem, size = 0x400, scoped, tag = 'input window, operand 29, single buffered']
    #allocation14 [shape = 'u8[512]{0}', space=vmem, size = 0x400, scoped, tag = 'input window, operand 31, single buffered']
    #allocation15 [shape = 's32[1]{0}', space=sflag, size = 0x4, scoped, tag = 'scoped memory for osm_forward.1']
    #allocation16 [shape = 'u8[1024]{0}', space=vmem, size = 0x400, scoped, tag = 'input window, operand 32, single buffered']
    #allocation17 [shape = 'u8[512]{0}', space=vmem, size = 0x400, scoped, tag = 'input window, operand 34, single buffered']
    #allocation18 [shape = 's32[1]{0}', space=sflag, size = 0x4, scoped, tag = 'scoped memory for osm_forward.1']
    #allocation19 [shape = 'u8[512]{0}', space=vmem, size = 0x400, scoped, tag = 'input window, operand 36, single buffered']
    #allocation20 [shape = 'u8[1024]{0}', space=vmem, size = 0x400, scoped, tag = 'input window, operand 37, single buffered']
    #allocation21 [shape = 's32[1]{0}', space=sflag, size = 0x4, scoped, tag = 'scoped memory for osm_forward.1']
    #allocation22 [shape = 'u8[512]{0}', space=vmem, size = 0x400, scoped, tag = 'input window, operand 39, single buffered']
    #allocation23 [shape = 'u8[1024]{0}', space=vmem, size = 0x400, scoped, tag = 'input window, operand 42, single buffered']
    #allocation24 [shape = 's32[1]{0}', space=sflag, size = 0x4, scoped, tag = 'scoped memory for osm_forward.1']
    #allocation25 [shape = 'u8[512]{0}', space=vmem, size = 0x400, scoped, tag = 'input window, operand 46, single buffered']
    #allocation26 [shape = 'u8[1024]{0}', space=vmem, size = 0x400, scoped, tag = 'input window, operand 47, single buffered']
    #allocation27 [shape = 's32[1]{0}', space=sflag, size = 0x4, scoped, tag = 'scoped memory for osm_forward.1']
    #allocation28 [shape = 'u8[512]{0}', space=vmem, size = 0x400, scoped, tag = 'input window, operand 49, single buffered']
    #allocation29 [shape = 'u8[512]{0}', space=vmem, size = 0x400, scoped, tag = 'input window, operand 51, single buffered']
    #allocation30 [shape = 's32[1]{0}', space=sflag, size = 0x4, scoped, tag = 'scoped memory for osm_forward.1']
    #allocation31 [shape = 'u8[1024]{0}', space=vmem, size = 0x400, scoped, tag = 'input window, operand 52, single buffered']
    #allocation32 [shape = 'u8[512]{0}', space=vmem, size = 0x400, scoped, tag = 'input window, operand 54, single buffered']
    #allocation33 [shape = 's32[1]{0}', space=sflag, size = 0x4, scoped, tag = 'scoped memory for osm_forward.1']
    #allocation34 [shape = 'u8[512]{0}', space=vmem, size = 0x400, scoped, tag = 'output window, operand 0, single buffered']
    %120 = vsyncpa [#allocation3], 0
    %121 = vsyncpa [#allocation6], 0
    %122 = vsyncpa [#allocation9], 0
    %123 = vsyncpa [#allocation12], 0
    %124 = vsyncpa [#allocation15], 0
    %125 = vsyncpa [#allocation18], 0
    %126 = vsyncpa [#allocation21], 0
    %127 = vsyncpa [#allocation24], 0
    %128 = vsyncpa [#allocation27], 0
    %129 = vsyncpa [#allocation30], 0
    %130 = vsyncpa [#allocation33], 0
    %131 = vsyncpa [#allocation4], 0
    // Predicated region
    $region2: #{osm_forward.1} parent=1 // pred_check
      _
    $region3: #{osm_forward.1} parent=1 // pred_check_branch
      %133 = sbr.rel (0) target = $region5
    $region4: #{osm_forward.1} parent=1 // pred_region
      _
    $region5: #{osm_forward.1} parent=1 // pred_fallthru
      _
    // Predicated region
    $region6: #{osm_forward.1} parent=1 // pred_check
      _
    $region7: #{osm_forward.1} parent=1 // pred_check_branch
      %135 = sbr.rel (0) target = $region9
    $region8: #{osm_forward.1} parent=1 // pred_region
      _
    $region9: #{osm_forward.1} parent=1 // pred_fallthru
      _
    // Predicated region
    $region10: #{osm_forward.1} parent=1 // pred_check
      _
    $region11: #{osm_forward.1} parent=1 // pred_check_branch
      %137 = sbr.rel (0) target = $region13
    $region12: #{osm_forward.1} parent=1 // pred_region
      _
    $region13: #{osm_forward.1} parent=1 // pred_fallthru
      _
    // Predicated region
    $region14: #{osm_forward.1} parent=1 // pred_check
      _
    $region15: #{osm_forward.1} parent=1 // pred_check_branch
      %139 = sbr.rel (0) target = $region17
    $region16: #{osm_forward.1} parent=1 // pred_region
      _
    $region17: #{osm_forward.1} parent=1 // pred_fallthru
      _
    // Predicated region
    $region18: #{osm_forward.1} parent=1 // pred_check
      _
    $region19: #{osm_forward.1} parent=1 // pred_check_branch
      %141 = sbr.rel (0) target = $region21
    $region20: #{osm_forward.1} parent=1 // pred_region
      _
    $region21: #{osm_forward.1} parent=1 // pred_fallthru
      _
    // Predicated region
    $region22: #{osm_forward.1} parent=1 // pred_check
      _
    $region23: #{osm_forward.1} parent=1 // pred_check_branch
      %143 = sbr.rel (0) target = $region25
    $region24: #{osm_forward.1} parent=1 // pred_region
      _
    $region25: #{osm_forward.1} parent=1 // pred_fallthru
      _
    // Predicated region
    $region26: #{osm_forward.1} parent=1 // pred_check
      _
    $region27: #{osm_forward.1} parent=1 // pred_check_branch
      %145 = sbr.rel (0) target = $region29
    $region28: #{osm_forward.1} parent=1 // pred_region
      _
    $region29: #{osm_forward.1} parent=1 // pred_fallthru
      _
    // Predicated region
    $region30: #{osm_forward.1} parent=1 // pred_check
      _
    $region31: #{osm_forward.1} parent=1 // pred_check_branch
      %147 = sbr.rel (0) target = $region33
    $region32: #{osm_forward.1} parent=1 // pred_region
      _
    $region33: #{osm_forward.1} parent=1 // pred_fallthru
      _
    // Predicated region
    $region34: #{osm_forward.1} parent=1 // pred_check
      _
    $region35: #{osm_forward.1} parent=1 // pred_check_branch
      %149 = sbr.rel (0) target = $region37
    $region36: #{osm_forward.1} parent=1 // pred_region
      _
    $region37: #{osm_forward.1} parent=1 // pred_fallthru
      _
    // Predicated region
    $region38: #{osm_forward.1} parent=1 // pred_check
      _
    $region39: #{osm_forward.1} parent=1 // pred_check_branch
      %151 = sbr.rel (0) target = $region41
    $region40: #{osm_forward.1} parent=1 // pred_region
      _
    $region41: #{osm_forward.1} parent=1 // pred_fallthru
      _
    // Predicated region
    $region42: #{osm_forward.1} parent=1 // pred_check
      _
    $region43: #{osm_forward.1} parent=1 // pred_check_branch
      %153 = sbr.rel (0) target = $region45
    $region44: #{osm_forward.1} parent=1 // pred_region
      %155 = vsyncadd [#allocation3], 0
      %s157 = sshll.u32 %s21, 4
      %s158 = int_to_ptr.hbm [resolvable:$true] %s157
      %s159 = sshll.u32 [#allocation2], 4
      %s160 = int_to_ptr.vmem [resolvable:$true] %s159
      %162 = dma.hbm_to_vmem [thread:$0]  %s158, 16, %s160, [#allocation3]
    $region45: #{osm_forward.1} parent=1 // pred_fallthru
      _
    // Predicated region
    $region46: #{osm_forward.1} parent=1 // pred_check
      _
    $region47: #{osm_forward.1} parent=1 // pred_check_branch
      %164 = sbr.rel (0) target = $region49
    $region48: #{osm_forward.1} parent=1 // pred_region
      _
    $region49: #{osm_forward.1} parent=1 // pred_fallthru
      _
    // Predicated region
    $region50: #{osm_forward.1} parent=1 // pred_check
      _
    $region51: #{osm_forward.1} parent=1 // pred_check_branch
      %166 = sbr.rel (0) target = $region53
    $region52: #{osm_forward.1} parent=1 // pred_region
      _
    $region53: #{osm_forward.1} parent=1 // pred_fallthru
      _
    // Predicated region
    $region54: #{osm_forward.1} parent=1 // pred_check
      _
    $region55: #{osm_forward.1} parent=1 // pred_check_branch
      %168 = sbr.rel (0) target = $region57
    $region56: #{osm_forward.1} parent=1 // pred_region
      %170 = vsyncadd [#allocation6], 0
      %s172 = sshll.u32 %s27, 4
      %s173 = int_to_ptr.hbm [resolvable:$true] %s172
      %s174 = sshll.u32 [#allocation5], 4
      %s175 = int_to_ptr.vmem [resolvable:$true] %s174
      %177 = dma.hbm_to_vmem [thread:$0]  %s173, 16, %s175, [#allocation6]
    $region57: #{osm_forward.1} parent=1 // pred_fallthru
      _
    // Predicated region
    $region58: #{osm_forward.1} parent=1 // pred_check
      _
    $region59: #{osm_forward.1} parent=1 // pred_check_branch
      %179 = sbr.rel (0) target = $region61
    $region60: #{osm_forward.1} parent=1 // pred_region
      _
    $region61: #{osm_forward.1} parent=1 // pred_fallthru
      _
    // Predicated region
    $region62: #{osm_forward.1} parent=1 // pred_check
      _
    $region63: #{osm_forward.1} parent=1 // pred_check_branch
      %181 = sbr.rel (0) target = $region65
    $region64: #{osm_forward.1} parent=1 // pred_region
      %183 = vsyncadd [#allocation6], 0
      %s185 = sshll.u32 %s31, 4
      %s186 = int_to_ptr.hbm [resolvable:$true] %s185
      %s187 = sshll.u32 [#allocation7], 4
      %s188 = int_to_ptr.vmem [resolvable:$true] %s187
      %190 = dma.hbm_to_vmem [thread:$0]  %s186, 16, %s188, [#allocation6]
    $region65: #{osm_forward.1} parent=1 // pred_fallthru
      _
    // Predicated region
    $region66: #{osm_forward.1} parent=1 // pred_check
      _
    $region67: #{osm_forward.1} parent=1 // pred_check_branch
      %192 = sbr.rel (0) target = $region69
    $region68: #{osm_forward.1} parent=1 // pred_region
      _
    $region69: #{osm_forward.1} parent=1 // pred_fallthru
      _
    // Predicated region
    $region70: #{osm_forward.1} parent=1 // pred_check
      _
    $region71: #{osm_forward.1} parent=1 // pred_check_branch
      %194 = sbr.rel (0) target = $region73
    $region72: #{osm_forward.1} parent=1 // pred_region
      _
    $region73: #{osm_forward.1} parent=1 // pred_fallthru
      _
    // Predicated region
    $region74: #{osm_forward.1} parent=1 // pred_check
      _
    $region75: #{osm_forward.1} parent=1 // pred_check_branch
      %196 = sbr.rel (0) target = $region77
    $region76: #{osm_forward.1} parent=1 // pred_region
      _
    $region77: #{osm_forward.1} parent=1 // pred_fallthru
      _
    // Predicated region
    $region78: #{osm_forward.1} parent=1 // pred_check
      _
    $region79: #{osm_forward.1} parent=1 // pred_check_branch
      %198 = sbr.rel (0) target = $region81
    $region80: #{osm_forward.1} parent=1 // pred_region
      _
    $region81: #{osm_forward.1} parent=1 // pred_fallthru
      _
    // Predicated region
    $region82: #{osm_forward.1} parent=1 // pred_check
      _
    $region83: #{osm_forward.1} parent=1 // pred_check_branch
      %200 = sbr.rel (0) target = $region85
    $region84: #{osm_forward.1} parent=1 // pred_region
      _
    $region85: #{osm_forward.1} parent=1 // pred_fallthru
      _
    // Predicated region
    $region86: #{osm_forward.1} parent=1 // pred_check
      _
    $region87: #{osm_forward.1} parent=1 // pred_check_branch
      %202 = sbr.rel (0) target = $region89
    $region88: #{osm_forward.1} parent=1 // pred_region
      _
    $region89: #{osm_forward.1} parent=1 // pred_fallthru
      _
    // Predicated region
    $region90: #{osm_forward.1} parent=1 // pred_check
      _
    $region91: #{osm_forward.1} parent=1 // pred_check_branch
      %204 = sbr.rel (0) target = $region93
    $region92: #{osm_forward.1} parent=1 // pred_region
      _
    $region93: #{osm_forward.1} parent=1 // pred_fallthru
      _
    // Predicated region
    $region94: #{osm_forward.1} parent=1 // pred_check
      _
    $region95: #{osm_forward.1} parent=1 // pred_check_branch
      %206 = sbr.rel (0) target = $region97
    $region96: #{osm_forward.1} parent=1 // pred_region
      _
    $region97: #{osm_forward.1} parent=1 // pred_fallthru
      _
    // Predicated region
    $region98: #{osm_forward.1} parent=1 // pred_check
      _
    $region99: #{osm_forward.1} parent=1 // pred_check_branch
      %208 = sbr.rel (0) target = $region101
    $region100: #{osm_forward.1} parent=1 // pred_region
      %210 = vsyncadd [#allocation9], 0
      %s212 = sshll.u32 %s49, 4
      %s213 = int_to_ptr.hbm [resolvable:$true] %s212
      %s214 = sshll.u32 [#allocation8], 4
      %s215 = int_to_ptr.vmem [resolvable:$true] %s214
      %217 = dma.hbm_to_vmem [thread:$0]  %s213, 16, %s215, [#allocation9]
    $region101: #{osm_forward.1} parent=1 // pred_fallthru
      _
    // Predicated region
    $region102: #{osm_forward.1} parent=1 // pred_check
      _
    $region103: #{osm_forward.1} parent=1 // pred_check_branch
      %219 = sbr.rel (0) target = $region105
    $region104: #{osm_forward.1} parent=1 // pred_region
      %221 = vsyncadd [#allocation9], 0
      %s223 = sshll.u32 %s51, 4
      %s224 = int_to_ptr.hbm [resolvable:$true] %s223
      %s225 = sshll.u32 [#allocation10], 4
      %s226 = int_to_ptr.vmem [resolvable:$true] %s225
      %228 = dma.hbm_to_vmem [thread:$0]  %s224, 32, %s226, [#allocation9]
    $region105: #{osm_forward.1} parent=1 // pred_fallthru
      _
    // Predicated region
    $region106: #{osm_forward.1} parent=1 // pred_check
      _
    $region107: #{osm_forward.1} parent=1 // pred_check_branch
      %230 = sbr.rel (0) target = $region109
    $region108: #{osm_forward.1} parent=1 // pred_region
      _
    $region109: #{osm_forward.1} parent=1 // pred_fallthru
      _
    // Predicated region
    $region110: #{osm_forward.1} parent=1 // pred_check
      _
    $region111: #{osm_forward.1} parent=1 // pred_check_branch
      %232 = sbr.rel (0) target = $region113
    $region112: #{osm_forward.1} parent=1 // pred_region
      %234 = vsyncadd [#allocation12], 0
      %s236 = sshll.u32 %s55, 4
      %s237 = int_to_ptr.hbm [resolvable:$true] %s236
      %s238 = sshll.u32 [#allocation11], 4
      %s239 = int_to_ptr.vmem [resolvable:$true] %s238
      %241 = dma.hbm_to_vmem [thread:$0]  %s237, 16, %s239, [#allocation12]
    $region113: #{osm_forward.1} parent=1 // pred_fallthru
      _
    // Predicated region
    $region114: #{osm_forward.1} parent=1 // pred_check
      _
    $region115: #{osm_forward.1} parent=1 // pred_check_branch
      %243 = sbr.rel (0) target = $region117
    $region116: #{osm_forward.1} parent=1 // pred_region
      _
    $region117: #{osm_forward.1} parent=1 // pred_fallthru
      _
    // Predicated region
    $region118: #{osm_forward.1} parent=1 // pred_check
      _
    $region119: #{osm_forward.1} parent=1 // pred_check_branch
      %245 = sbr.rel (0) target = $region121
    $region120: #{osm_forward.1} parent=1 // pred_region
      %247 = vsyncadd [#allocation12], 0
      %s249 = sshll.u32 %s59, 4
      %s250 = int_to_ptr.hbm [resolvable:$true] %s249
      %s251 = sshll.u32 [#allocation13], 4
      %s252 = int_to_ptr.vmem [resolvable:$true] %s251
      %254 = dma.hbm_to_vmem [thread:$0]  %s250, 32, %s252, [#allocation12]
    $region121: #{osm_forward.1} parent=1 // pred_fallthru
      _
    // Predicated region
    $region122: #{osm_forward.1} parent=1 // pred_check
      _
    $region123: #{osm_forward.1} parent=1 // pred_check_branch
      %256 = sbr.rel (0) target = $region125
    $region124: #{osm_forward.1} parent=1 // pred_region
      _
    $region125: #{osm_forward.1} parent=1 // pred_fallthru
      _
    // Predicated region
    $region126: #{osm_forward.1} parent=1 // pred_check
      _
    $region127: #{osm_forward.1} parent=1 // pred_check_branch
      %258 = sbr.rel (0) target = $region129
    $region128: #{osm_forward.1} parent=1 // pred_region
      %260 = vsyncadd [#allocation15], 0
      %s262 = sshll.u32 %s63, 4
      %s263 = int_to_ptr.hbm [resolvable:$true] %s262
      %s264 = sshll.u32 [#allocation14], 4
      %s265 = int_to_ptr.vmem [resolvable:$true] %s264
      %267 = dma.hbm_to_vmem [thread:$0]  %s263, 16, %s265, [#allocation15]
    $region129: #{osm_forward.1} parent=1 // pred_fallthru
      _
    // Predicated region
    $region130: #{osm_forward.1} parent=1 // pred_check
      _
    $region131: #{osm_forward.1} parent=1 // pred_check_branch
      %269 = sbr.rel (0) target = $region133
    $region132: #{osm_forward.1} parent=1 // pred_region
      %271 = vsyncadd [#allocation15], 0
      %s273 = sshll.u32 %s65, 4
      %s274 = int_to_ptr.hbm [resolvable:$true] %s273
      %s275 = sshll.u32 [#allocation16], 4
      %s276 = int_to_ptr.vmem [resolvable:$true] %s275
      %278 = dma.hbm_to_vmem [thread:$0]  %s274, 32, %s276, [#allocation15]
    $region133: #{osm_forward.1} parent=1 // pred_fallthru
      _
    // Predicated region
    $region134: #{osm_forward.1} parent=1 // pred_check
      _
    $region135: #{osm_forward.1} parent=1 // pred_check_branch
      %280 = sbr.rel (0) target = $region137
    $region136: #{osm_forward.1} parent=1 // pred_region
      _
    $region137: #{osm_forward.1} parent=1 // pred_fallthru
      _
    // Predicated region
    $region138: #{osm_forward.1} parent=1 // pred_check
      _
    $region139: #{osm_forward.1} parent=1 // pred_check_branch
      %282 = sbr.rel (0) target = $region141
    $region140: #{osm_forward.1} parent=1 // pred_region
      %284 = vsyncadd [#allocation18], 0
      %s286 = sshll.u32 %s69, 4
      %s287 = int_to_ptr.hbm [resolvable:$true] %s286
      %s288 = sshll.u32 [#allocation17], 4
      %s289 = int_to_ptr.vmem [resolvable:$true] %s288
      %291 = dma.hbm_to_vmem [thread:$0]  %s287, 16, %s289, [#allocation18]
    $region141: #{osm_forward.1} parent=1 // pred_fallthru
      _
    // Predicated region
    $region142: #{osm_forward.1} parent=1 // pred_check
      _
    $region143: #{osm_forward.1} parent=1 // pred_check_branch
      %293 = sbr.rel (0) target = $region145
    $region144: #{osm_forward.1} parent=1 // pred_region
      _
    $region145: #{osm_forward.1} parent=1 // pred_fallthru
      _
    // Predicated region
    $region146: #{osm_forward.1} parent=1 // pred_check
      _
    $region147: #{osm_forward.1} parent=1 // pred_check_branch
      %295 = sbr.rel (0) target = $region149
    $region148: #{osm_forward.1} parent=1 // pred_region
      %297 = vsyncadd [#allocation18], 0
      %s299 = sshll.u32 %s73, 4
      %s300 = int_to_ptr.hbm [resolvable:$true] %s299
      %s301 = sshll.u32 [#allocation19], 4
      %s302 = int_to_ptr.vmem [resolvable:$true] %s301
      %304 = dma.hbm_to_vmem [thread:$0]  %s300, 16, %s302, [#allocation18]
    $region149: #{osm_forward.1} parent=1 // pred_fallthru
      _
    // Predicated region
    $region150: #{osm_forward.1} parent=1 // pred_check
      _
    $region151: #{osm_forward.1} parent=1 // pred_check_branch
      %306 = sbr.rel (0) target = $region153
    $region152: #{osm_forward.1} parent=1 // pred_region
      %308 = vsyncadd [#allocation21], 0
      %s310 = sshll.u32 %s75, 4
      %s311 = int_to_ptr.hbm [resolvable:$true] %s310
      %s312 = sshll.u32 [#allocation20], 4
      %s313 = int_to_ptr.vmem [resolvable:$true] %s312
      %315 = dma.hbm_to_vmem [thread:$0]  %s311, 32, %s313, [#allocation21]
    $region153: #{osm_forward.1} parent=1 // pred_fallthru
      _
    // Predicated region
    $region154: #{osm_forward.1} parent=1 // pred_check
      _
    $region155: #{osm_forward.1} parent=1 // pred_check_branch
      %317 = sbr.rel (0) target = $region157
    $region156: #{osm_forward.1} parent=1 // pred_region
      _
    $region157: #{osm_forward.1} parent=1 // pred_fallthru
      _
    // Predicated region
    $region158: #{osm_forward.1} parent=1 // pred_check
      _
    $region159: #{osm_forward.1} parent=1 // pred_check_branch
      %319 = sbr.rel (0) target = $region161
    $region160: #{osm_forward.1} parent=1 // pred_region
      %321 = vsyncadd [#allocation21], 0
      %s323 = sshll.u32 %s79, 4
      %s324 = int_to_ptr.hbm [resolvable:$true] %s323
      %s325 = sshll.u32 [#allocation22], 4
      %s326 = int_to_ptr.vmem [resolvable:$true] %s325
      %328 = dma.hbm_to_vmem [thread:$0]  %s324, 16, %s326, [#allocation21]
    $region161: #{osm_forward.1} parent=1 // pred_fallthru
      _
    // Predicated region
    $region162: #{osm_forward.1} parent=1 // pred_check
      _
    $region163: #{osm_forward.1} parent=1 // pred_check_branch
      %330 = sbr.rel (0) target = $region165
    $region164: #{osm_forward.1} parent=1 // pred_region
      _
    $region165: #{osm_forward.1} parent=1 // pred_fallthru
      _
    // Predicated region
    $region166: #{osm_forward.1} parent=1 // pred_check
      _
    $region167: #{osm_forward.1} parent=1 // pred_check_branch
      %332 = sbr.rel (0) target = $region169
    $region168: #{osm_forward.1} parent=1 // pred_region
      _
    $region169: #{osm_forward.1} parent=1 // pred_fallthru
      _
    // Predicated region
    $region170: #{osm_forward.1} parent=1 // pred_check
      _
    $region171: #{osm_forward.1} parent=1 // pred_check_branch
      %334 = sbr.rel (0) target = $region173
    $region172: #{osm_forward.1} parent=1 // pred_region
      %336 = vsyncadd [#allocation24], 0
      %s338 = sshll.u32 %s85, 4
      %s339 = int_to_ptr.hbm [resolvable:$true] %s338
      %s340 = sshll.u32 [#allocation23], 4
      %s341 = int_to_ptr.vmem [resolvable:$true] %s340
      %343 = dma.hbm_to_vmem [thread:$0]  %s339, 32, %s341, [#allocation24]
    $region173: #{osm_forward.1} parent=1 // pred_fallthru
      _
    // Predicated region
    $region174: #{osm_forward.1} parent=1 // pred_check
      _
    $region175: #{osm_forward.1} parent=1 // pred_check_branch
      %345 = sbr.rel (0) target = $region177
    $region176: #{osm_forward.1} parent=1 // pred_region
      _
    $region177: #{osm_forward.1} parent=1 // pred_fallthru
      _
    // Predicated region
    $region178: #{osm_forward.1} parent=1 // pred_check
      _
    $region179: #{osm_forward.1} parent=1 // pred_check_branch
      %347 = sbr.rel (0) target = $region181
    $region180: #{osm_forward.1} parent=1 // pred_region
      _
    $region181: #{osm_forward.1} parent=1 // pred_fallthru
      _
    // Predicated region
    $region182: #{osm_forward.1} parent=1 // pred_check
      _
    $region183: #{osm_forward.1} parent=1 // pred_check_branch
      %349 = sbr.rel (0) target = $region185
    $region184: #{osm_forward.1} parent=1 // pred_region
      _
    $region185: #{osm_forward.1} parent=1 // pred_fallthru
      _
    // Predicated region
    $region186: #{osm_forward.1} parent=1 // pred_check
      _
    $region187: #{osm_forward.1} parent=1 // pred_check_branch
      %351 = sbr.rel (0) target = $region189
    $region188: #{osm_forward.1} parent=1 // pred_region
      %353 = vsyncadd [#allocation24], 0
      %s355 = sshll.u32 %s93, 4
      %s356 = int_to_ptr.hbm [resolvable:$true] %s355
      %s357 = sshll.u32 [#allocation25], 4
      %s358 = int_to_ptr.vmem [resolvable:$true] %s357
      %360 = dma.hbm_to_vmem [thread:$0]  %s356, 16, %s358, [#allocation24]
    $region189: #{osm_forward.1} parent=1 // pred_fallthru
      _
    // Predicated region
    $region190: #{osm_forward.1} parent=1 // pred_check
      _
    $region191: #{osm_forward.1} parent=1 // pred_check_branch
      %362 = sbr.rel (0) target = $region193
    $region192: #{osm_forward.1} parent=1 // pred_region
      %364 = vsyncadd [#allocation27], 0
      %s366 = sshll.u32 %s95, 4
      %s367 = int_to_ptr.hbm [resolvable:$true] %s366
      %s368 = sshll.u32 [#allocation26], 4
      %s369 = int_to_ptr.vmem [resolvable:$true] %s368
      %371 = dma.hbm_to_vmem [thread:$0]  %s367, 32, %s369, [#allocation27]
    $region193: #{osm_forward.1} parent=1 // pred_fallthru
      _
    // Predicated region
    $region194: #{osm_forward.1} parent=1 // pred_check
      _
    $region195: #{osm_forward.1} parent=1 // pred_check_branch
      %373 = sbr.rel (0) target = $region197
    $region196: #{osm_forward.1} parent=1 // pred_region
      _
    $region197: #{osm_forward.1} parent=1 // pred_fallthru
      _
    // Predicated region
    $region198: #{osm_forward.1} parent=1 // pred_check
      _
    $region199: #{osm_forward.1} parent=1 // pred_check_branch
      %375 = sbr.rel (0) target = $region201
    $region200: #{osm_forward.1} parent=1 // pred_region
      %377 = vsyncadd [#allocation27], 0
      %s379 = sshll.u32 %s99, 4
      %s380 = int_to_ptr.hbm [resolvable:$true] %s379
      %s381 = sshll.u32 [#allocation28], 4
      %s382 = int_to_ptr.vmem [resolvable:$true] %s381
      %384 = dma.hbm_to_vmem [thread:$0]  %s380, 16, %s382, [#allocation27]
    $region201: #{osm_forward.1} parent=1 // pred_fallthru
      _
    // Predicated region
    $region202: #{osm_forward.1} parent=1 // pred_check
      _
    $region203: #{osm_forward.1} parent=1 // pred_check_branch
      %386 = sbr.rel (0) target = $region205
    $region204: #{osm_forward.1} parent=1 // pred_region
      _
    $region205: #{osm_forward.1} parent=1 // pred_fallthru
      _
    // Predicated region
    $region206: #{osm_forward.1} parent=1 // pred_check
      _
    $region207: #{osm_forward.1} parent=1 // pred_check_branch
      %388 = sbr.rel (0) target = $region209
    $region208: #{osm_forward.1} parent=1 // pred_region
      %390 = vsyncadd [#allocation30], 0
      %s392 = sshll.u32 %s103, 4
      %s393 = int_to_ptr.hbm [resolvable:$true] %s392
      %s394 = sshll.u32 [#allocation29], 4
      %s395 = int_to_ptr.vmem [resolvable:$true] %s394
      %397 = dma.hbm_to_vmem [thread:$0]  %s393, 16, %s395, [#allocation30]
    $region209: #{osm_forward.1} parent=1 // pred_fallthru
      _
    // Predicated region
    $region210: #{osm_forward.1} parent=1 // pred_check
      _
    $region211: #{osm_forward.1} parent=1 // pred_check_branch
      %399 = sbr.rel (0) target = $region213
    $region212: #{osm_forward.1} parent=1 // pred_region
      %401 = vsyncadd [#allocation30], 0
      %s403 = sshll.u32 %s105, 4
      %s404 = int_to_ptr.hbm [resolvable:$true] %s403
      %s405 = sshll.u32 [#allocation31], 4
      %s406 = int_to_ptr.vmem [resolvable:$true] %s405
      %408 = dma.hbm_to_vmem [thread:$0]  %s404, 32, %s406, [#allocation30]
    $region213: #{osm_forward.1} parent=1 // pred_fallthru
      _
    // Predicated region
    $region214: #{osm_forward.1} parent=1 // pred_check
      _
    $region215: #{osm_forward.1} parent=1 // pred_check_branch
      %410 = sbr.rel (0) target = $region217
    $region216: #{osm_forward.1} parent=1 // pred_region
      _
    $region217: #{osm_forward.1} parent=1 // pred_fallthru
      _
    // Predicated region
    $region218: #{osm_forward.1} parent=1 // pred_check
      _
    $region219: #{osm_forward.1} parent=1 // pred_check_branch
      %412 = sbr.rel (0) target = $region221
    $region220: #{osm_forward.1} parent=1 // pred_region
      %414 = vsyncadd [#allocation33], 0
      %s416 = sshll.u32 %s109, 4
      %s417 = int_to_ptr.hbm [resolvable:$true] %s416
      %s418 = sshll.u32 [#allocation32], 4
      %s419 = int_to_ptr.vmem [resolvable:$true] %s418
      %421 = dma.hbm_to_vmem [thread:$0]  %s417, 16, %s419, [#allocation33]
    $region221: #{osm_forward.1} parent=1 // pred_fallthru
      _
    // Predicated region
    $region222: #{osm_forward.1} parent=1 // pred_check
      _
    $region223: #{osm_forward.1} parent=1 // pred_check_branch
      %423 = sbr.rel (0) target = $region225
    $region224: #{osm_forward.1} parent=1 // pred_region
      _
    $region225: #{osm_forward.1} parent=1 // pred_fallthru
      _
    // Predicated region
    $region226: #{osm_forward.1} parent=1 // pred_check
      _
    $region227: #{osm_forward.1} parent=1 // pred_check_branch
      %425 = sbr.rel (0) target = $region229
    $region228: #{osm_forward.1} parent=1 // pred_region
      _
    $region229: #{osm_forward.1} parent=1 // pred_fallthru
      _
    // Predicated region
    $region230: #{osm_forward.1} parent=1 // pred_check
      _
    $region231: #{osm_forward.1} parent=1 // pred_check_branch
      %427 = sbr.rel (0) target = $region233
    $region232: #{osm_forward.1} parent=1 // pred_region
      %429 = dma.done [#allocation3], 16
    $region233: #{osm_forward.1} parent=1 // pred_fallthru
      _
    // Predicated region
    $region234: #{osm_forward.1} parent=1 // pred_check
      _
    $region235: #{osm_forward.1} parent=1 // pred_check_branch
      %431 = sbr.rel (0) target = $region237
    $region236: #{osm_forward.1} parent=1 // pred_region
      %433 = dma.done [#allocation6], 16
    $region237: #{osm_forward.1} parent=1 // pred_fallthru
      _
    // Predicated region
    $region238: #{osm_forward.1} parent=1 // pred_check
      _
    $region239: #{osm_forward.1} parent=1 // pred_check_branch
      %435 = sbr.rel (0) target = $region241
    $region240: #{osm_forward.1} parent=1 // pred_region
      %437 = dma.done [#allocation6], 16
    $region241: #{osm_forward.1} parent=1 // pred_fallthru
      _
    // Predicated region
    $region242: #{osm_forward.1} parent=1 // pred_check
      _
    $region243: #{osm_forward.1} parent=1 // pred_check_branch
      %439 = sbr.rel (0) target = $region245
    $region244: #{osm_forward.1} parent=1 // pred_region
      %441 = dma.done [#allocation9], 16
    $region245: #{osm_forward.1} parent=1 // pred_fallthru
      _
    // Predicated region
    $region246: #{osm_forward.1} parent=1 // pred_check
      _
    $region247: #{osm_forward.1} parent=1 // pred_check_branch
      %443 = sbr.rel (0) target = $region249
    $region248: #{osm_forward.1} parent=1 // pred_region
      %445 = dma.done [#allocation9], 32
    $region249: #{osm_forward.1} parent=1 // pred_fallthru
      _
    // Predicated region
    $region250: #{osm_forward.1} parent=1 // pred_check
      _
    $region251: #{osm_forward.1} parent=1 // pred_check_branch
      %447 = sbr.rel (0) target = $region253
    $region252: #{osm_forward.1} parent=1 // pred_region
      %449 = dma.done [#allocation12], 16
    $region253: #{osm_forward.1} parent=1 // pred_fallthru
      _
    // Predicated region
    $region254: #{osm_forward.1} parent=1 // pred_check
      _
    $region255: #{osm_forward.1} parent=1 // pred_check_branch
      %451 = sbr.rel (0) target = $region257
    $region256: #{osm_forward.1} parent=1 // pred_region
      %453 = dma.done [#allocation12], 32
    $region257: #{osm_forward.1} parent=1 // pred_fallthru
      _
    // Predicated region
    $region258: #{osm_forward.1} parent=1 // pred_check
      _
    $region259: #{osm_forward.1} parent=1 // pred_check_branch
      %455 = sbr.rel (0) target = $region261
    $region260: #{osm_forward.1} parent=1 // pred_region
      %457 = dma.done [#allocation15], 16
    $region261: #{osm_forward.1} parent=1 // pred_fallthru
      _
    // Predicated region
    $region262: #{osm_forward.1} parent=1 // pred_check
      _
    $region263: #{osm_forward.1} parent=1 // pred_check_branch
      %459 = sbr.rel (0) target = $region265
    $region264: #{osm_forward.1} parent=1 // pred_region
      %461 = dma.done [#allocation15], 32
    $region265: #{osm_forward.1} parent=1 // pred_fallthru
      _
    // Predicated region
    $region266: #{osm_forward.1} parent=1 // pred_check
      _
    $region267: #{osm_forward.1} parent=1 // pred_check_branch
      %463 = sbr.rel (0) target = $region269
    $region268: #{osm_forward.1} parent=1 // pred_region
      %465 = dma.done [#allocation18], 16
    $region269: #{osm_forward.1} parent=1 // pred_fallthru
      _
    // Predicated region
    $region270: #{osm_forward.1} parent=1 // pred_check
      _
    $region271: #{osm_forward.1} parent=1 // pred_check_branch
      %467 = sbr.rel (0) target = $region273
    $region272: #{osm_forward.1} parent=1 // pred_region
      %469 = dma.done [#allocation18], 16
    $region273: #{osm_forward.1} parent=1 // pred_fallthru
      _
    // Predicated region
    $region274: #{osm_forward.1} parent=1 // pred_check
      _
    $region275: #{osm_forward.1} parent=1 // pred_check_branch
      %471 = sbr.rel (0) target = $region277
    $region276: #{osm_forward.1} parent=1 // pred_region
      %473 = dma.done [#allocation21], 32
    $region277: #{osm_forward.1} parent=1 // pred_fallthru
      _
    // Predicated region
    $region278: #{osm_forward.1} parent=1 // pred_check
      _
    $region279: #{osm_forward.1} parent=1 // pred_check_branch
      %475 = sbr.rel (0) target = $region281
    $region280: #{osm_forward.1} parent=1 // pred_region
      %477 = dma.done [#allocation21], 16
    $region281: #{osm_forward.1} parent=1 // pred_fallthru
      _
    // Predicated region
    $region282: #{osm_forward.1} parent=1 // pred_check
      _
    $region283: #{osm_forward.1} parent=1 // pred_check_branch
      %479 = sbr.rel (0) target = $region285
    $region284: #{osm_forward.1} parent=1 // pred_region
      %481 = dma.done [#allocation24], 32
    $region285: #{osm_forward.1} parent=1 // pred_fallthru
      _
    // Predicated region
    $region286: #{osm_forward.1} parent=1 // pred_check
      _
    $region287: #{osm_forward.1} parent=1 // pred_check_branch
      %483 = sbr.rel (0) target = $region289
    $region288: #{osm_forward.1} parent=1 // pred_region
      %485 = dma.done [#allocation24], 16
    $region289: #{osm_forward.1} parent=1 // pred_fallthru
      _
    // Predicated region
    $region290: #{osm_forward.1} parent=1 // pred_check
      _
    $region291: #{osm_forward.1} parent=1 // pred_check_branch
      %487 = sbr.rel (0) target = $region293
    $region292: #{osm_forward.1} parent=1 // pred_region
      %489 = dma.done [#allocation27], 32
    $region293: #{osm_forward.1} parent=1 // pred_fallthru
      _
    // Predicated region
    $region294: #{osm_forward.1} parent=1 // pred_check
      _
    $region295: #{osm_forward.1} parent=1 // pred_check_branch
      %491 = sbr.rel (0) target = $region297
    $region296: #{osm_forward.1} parent=1 // pred_region
      %493 = dma.done [#allocation27], 16
    $region297: #{osm_forward.1} parent=1 // pred_fallthru
      _
    // Predicated region
    $region298: #{osm_forward.1} parent=1 // pred_check
      _
    $region299: #{osm_forward.1} parent=1 // pred_check_branch
      %495 = sbr.rel (0) target = $region301
    $region300: #{osm_forward.1} parent=1 // pred_region
      %497 = dma.done [#allocation30], 16
    $region301: #{osm_forward.1} parent=1 // pred_fallthru
      _
    // Predicated region
    $region302: #{osm_forward.1} parent=1 // pred_check
      _
    $region303: #{osm_forward.1} parent=1 // pred_check_branch
      %499 = sbr.rel (0) target = $region305
    $region304: #{osm_forward.1} parent=1 // pred_region
      %501 = dma.done [#allocation30], 32
    $region305: #{osm_forward.1} parent=1 // pred_fallthru
      _
    // Predicated region
    $region306: #{osm_forward.1} parent=1 // pred_check
      _
    $region307: #{osm_forward.1} parent=1 // pred_check_branch
      %503 = sbr.rel (0) target = $region309
    $region308: #{osm_forward.1} parent=1 // pred_region
      %505 = dma.done [#allocation33], 16
    $region309: #{osm_forward.1} parent=1 // pred_fallthru
      _
    %v506 = vld [vmem:[%s1] sm:$0xff]
    %v507 = vld [vmem:[%s1 + $0x8] sm:$0xff]
    %v508 = vld [vmem:[%s1 + $0x10] sm:$0xff]
    %v509 = vld [vmem:[%s1 + $0x18] sm:$0xff]
    %v510 = vld [vmem:[%s1 + $0x20] sm:$0xff]
    %v511 = vld [vmem:[%s1 + $0x28] sm:$0xff]
    %v512 = vld [vmem:[%s1 + $0x30] sm:$0xff]
    %v513 = vld [vmem:[%s1 + $0x38] sm:$0xff]
    %v514 = vld [vmem:[%s3] sm:$0xff]
    %v515 = vld [vmem:[%s3 + $0x8] sm:$0xff]
    %v516 = vld [vmem:[%s3 + $0x10] sm:$0xff]
    %v517 = vld [vmem:[%s3 + $0x18] sm:$0xff]
    %v518 = vld [vmem:[%s3 + $0x20] sm:$0xff]
    %v519 = vld [vmem:[%s3 + $0x28] sm:$0xff]
    %v520 = vld [vmem:[%s3 + $0x30] sm:$0xff]
    %v521 = vld [vmem:[%s3 + $0x38] sm:$0xff]
    %v522 = vld [vmem:[%s3 + $0x40] sm:$0xff]
    %v523 = vld [vmem:[%s3 + $0x48] sm:$0xff]
    %v524 = vld [vmem:[%s3 + $0x50] sm:$0xff]
    %v525 = vld [vmem:[%s3 + $0x58] sm:$0xff]
    %v526 = vld [vmem:[%s3 + $0x60] sm:$0xff]
    %v527 = vld [vmem:[%s3 + $0x68] sm:$0xff]
    %v528 = vld [vmem:[%s3 + $0x70] sm:$0xff]
    %v529 = vld [vmem:[%s3 + $0x78] sm:$0xff]
    %v530 = vld [vmem:[%s3 + $0x80] sm:$0xff]
    %v531 = vld [vmem:[%s3 + $0x88] sm:$0xff]
    %v532 = vld [vmem:[%s3 + $0x90] sm:$0xff]
    %v533 = vld [vmem:[%s3 + $0x98] sm:$0xff]
    %v534 = vld [vmem:[%s3 + $0xa0] sm:$0xff]
    %v535 = vld [vmem:[%s3 + $0xa8] sm:$0xff]
    %v536 = vld [vmem:[%s3 + $0xb0] sm:$0xff]
    %v537 = vld [vmem:[%s3 + $0xb8] sm:$0xff]
    %v538 = vld [vmem:[%s3 + $0xc0] sm:$0xff]
    %v539 = vld [vmem:[%s3 + $0xc8] sm:$0xff]
    %v540 = vld [vmem:[%s3 + $0xd0] sm:$0xff]
    %v541 = vld [vmem:[%s3 + $0xd8] sm:$0xff]
    %v542 = vld [vmem:[%s3 + $0xe0] sm:$0xff]
    %v543 = vld [vmem:[%s3 + $0xe8] sm:$0xff]
    %v544 = vld [vmem:[%s3 + $0xf0] sm:$0xff]
    %v545 = vld [vmem:[%s3 + $0xf8] sm:$0xff]
    %v546 = vld [vmem:[%s5] sm:$0xff]
    %v547 = vld [vmem:[%s5 + $0x8] sm:$0xff]
    %v548 = vld [vmem:[%s5 + $0x10] sm:$0xff]
    %v549 = vld [vmem:[%s5 + $0x18] sm:$0xff]
    %550 = vmatpush.msra.mxu0 %v529
    %551 = vmatpush.msra.mxu0 %v528
    %552 = vmatpush.msra.mxu0 %v527
    %553 = vmatpush.msra.mxu0 %v526
    %554 = vmatpush.msra.mxu0 %v525
    %555 = vmatpush.msra.mxu0 %v524
    %556 = vmatpush.msra.mxu0 %v523
    %557 = vmatpush.msra.mxu0 %v522
    %558 = vmatpush.msra.mxu0 %v521
    %559 = vmatpush.msra.mxu0 %v520
    %560 = vmatpush.msra.mxu0 %v519
    %561 = vmatpush.msra.mxu0 %v518
    %562 = vmatpush.msra.mxu0 %v517
    %563 = vmatpush.msra.mxu0 %v516
    %564 = vmatpush.msra.mxu0 %v515
    %565 = vmatpush.msra.mxu0 %v514
    %566 = vmatmul.f32.gmra.mxu0 %v506
    %v567 = vpop.f32.mrf.mxu0
    %v568 = vadd.f32 %v546, %v567
    %569 = vmatmul.f32.gmra.mxu0 %v508
    %v570 = vpop.f32.mrf.mxu0
    %v571 = vadd.f32 %v547, %v570
    %572 = vmatmul.f32.gmra.mxu0 %v510
    %v573 = vpop.f32.mrf.mxu0
    %v574 = vadd.f32 %v548, %v573
    %575 = vmatmul.f32.gmra.mxu0 %v512
    %v576 = vpop.f32.mrf.mxu0
    %v577 = vadd.f32 %v549, %v576
    %578 = vdwg.mxu0
    %579 = vmatpush.msra.mxu0 %v545
    %580 = vmatpush.msra.mxu0 %v544
    %581 = vmatpush.msra.mxu0 %v543
    %582 = vmatpush.msra.mxu0 %v542
    %583 = vmatpush.msra.mxu0 %v541
    %584 = vmatpush.msra.mxu0 %v540
    %585 = vmatpush.msra.mxu0 %v539
    %586 = vmatpush.msra.mxu0 %v538
    %587 = vmatpush.msra.mxu0 %v537
    %588 = vmatpush.msra.mxu0 %v536
    %589 = vmatpush.msra.mxu0 %v535
    %590 = vmatpush.msra.mxu0 %v534
    %591 = vmatpush.msra.mxu0 %v533
    %592 = vmatpush.msra.mxu0 %v532
    %593 = vmatpush.msra.mxu0 %v531
    %594 = vmatpush.msra.mxu0 %v530
    %595 = vmatmul.f32.gmra.mxu0 %v507
    %v596 = vpop.f32.mrf.mxu0
    %v597 = vadd.f32 %v568, %v596
    %598 = vmatmul.f32.gmra.mxu0 %v509
    %v599 = vpop.f32.mrf.mxu0
    %v600 = vadd.f32 %v571, %v599
    %601 = vmatmul.f32.gmra.mxu0 %v511
    %v602 = vpop.f32.mrf.mxu0
    %v603 = vadd.f32 %v574, %v602
    %604 = vmatmul.f32.gmra.mxu0 %v513
    %v605 = vpop.f32.mrf.mxu0
    %v606 = vadd.f32 %v577, %v605
    %607 = vdwg.mxu0
    %v608 = vld [vmem:[%s7] sm:$0xff]
    %v609 = vld [vmem:[%s13] sm:$0x3]
    %610 = vadd.xlane.f32.xlu0 %v608
    %v611 = vpop.xlane.xlu0 %610
    %612 = vadd.xlane.f32.xlu0 %v597
    %v613 = vpop.xlane.xlu0 %612
    %614 = vadd.xlane.f32.xlu0 %v600
    %v615 = vpop.xlane.xlu0 %614
    %616 = vadd.xlane.f32.xlu0 %v603
    %v617 = vpop.xlane.xlu0 %616
    %618 = vadd.xlane.f32.xlu0 %v606
    %v619 = vpop.xlane.xlu0 %618
    %v620 = vmul.f32 %v611, 0.03125
    %v621 = vmul.f32 %v613, 0.03125
    %v622 = vmul.f32 %v615, 0.03125
    %v623 = vmul.f32 %v617, 0.03125
    %v624 = vmul.f32 %v619, 0.03125
    %v625 = vmul.f32 %v608, %v608
    %v626 = vmul.f32 %v597, %v597
    %v627 = vmul.f32 %v600, %v600
    %v628 = vmul.f32 %v603, %v603
    %v629 = vmul.f32 %v606, %v606
    %630 = vadd.xlane.f32.xlu0 %v625
    %v631 = vpop.xlane.xlu0 %630
    %632 = vadd.xlane.f32.xlu0 %v626
    %v633 = vpop.xlane.xlu0 %632
    %634 = vadd.xlane.f32.xlu0 %v627
    %v635 = vpop.xlane.xlu0 %634
    %636 = vadd.xlane.f32.xlu0 %v628
    %v637 = vpop.xlane.xlu0 %636
    %638 = vadd.xlane.f32.xlu0 %v629
    %v639 = vpop.xlane.xlu0 %638
    %v640 = vmul.f32 %v631, 0.03125
    %v641 = vmul.f32 %v633, 0.03125
    %v642 = vmul.f32 %v635, 0.03125
    %v643 = vmul.f32 %v637, 0.03125
    %v644 = vmul.f32 %v639, 0.03125
    %v645 = vmul.f32 %v620, %v620
    %v646 = vmul.f32 %v621, %v621
    %v647 = vmul.f32 %v622, %v622
    %v648 = vmul.f32 %v623, %v623
    %v649 = vmul.f32 %v624, %v624
    %v650 = vsub.f32 %v640, %v645
    %v651 = vsub.f32 %v641, %v646
    %v652 = vsub.f32 %v642, %v647
    %v653 = vsub.f32 %v643, %v648
    %v654 = vsub.f32 %v644, %v649
    %v655 = vsub.f32 %v608, %v620
    %v656 = vsub.f32 %v597, %v621
    %v657 = vsub.f32 %v600, %v622
    %v658 = vsub.f32 %v603, %v623
    %v659 = vsub.f32 %v606, %v624
    %v660 = vadd.f32 %v650, 1e-05
    %v661 = vadd.f32 %v651, 1e-05
    %v662 = vadd.f32 %v652, 1e-05
    %v663 = vadd.f32 %v653, 1e-05
    %v664 = vadd.f32 %v654, 1e-05
    %v665 = vrsqrt.pop %v660
    %v666 = vmul.f32 %v665, %v660
    %v667 = vmul.f32 %v666, %v665
    %v668 = vmul.f32 0.5, %v667
    %v669 = vsub.f32 1.5, %v668
    %v670 = vmul.f32 %v665, %v669
    %vm671 = vweird.f32 %v660
    %vm672 = vweird.f32 %v665
    %vm673 = vmor %vm671, %vm672
    %v674 = vsel %vm673, %v665, %v670
    %v675 = vrsqrt.pop %v661
    %v676 = vmul.f32 %v675, %v661
    %v677 = vmul.f32 %v676, %v675
    %v678 = vmul.f32 0.5, %v677
    %v679 = vsub.f32 1.5, %v678
    %v680 = vmul.f32 %v675, %v679
    %vm681 = vweird.f32 %v661
    %vm682 = vweird.f32 %v675
    %vm683 = vmor %vm681, %vm682
    %v684 = vsel %vm683, %v675, %v680
    %v685 = vrsqrt.pop %v662
    %v686 = vmul.f32 %v685, %v662
    %v687 = vmul.f32 %v686, %v685
    %v688 = vmul.f32 0.5, %v687
    %v689 = vsub.f32 1.5, %v688
    %v690 = vmul.f32 %v685, %v689
    %vm691 = vweird.f32 %v662
    %vm692 = vweird.f32 %v685
    %vm693 = vmor %vm691, %vm692
    %v694 = vsel %vm693, %v685, %v690
    %v695 = vrsqrt.pop %v663
    %v696 = vmul.f32 %v695, %v663
    %v697 = vmul.f32 %v696, %v695
    %v698 = vmul.f32 0.5, %v697
    %v699 = vsub.f32 1.5, %v698
    %v700 = vmul.f32 %v695, %v699
    %vm701 = vweird.f32 %v663
    %vm702 = vweird.f32 %v695
    %vm703 = vmor %vm701, %vm702
    %v704 = vsel %vm703, %v695, %v700
    %v705 = vrsqrt.pop %v664
    %v706 = vmul.f32 %v705, %v664
    %v707 = vmul.f32 %v706, %v705
    %v708 = vmul.f32 0.5, %v707
    %v709 = vsub.f32 1.5, %v708
    %v710 = vmul.f32 %v705, %v709
    %vm711 = vweird.f32 %v664
    %vm712 = vweird.f32 %v705
    %vm713 = vmor %vm711, %vm712
    %v714 = vsel %vm713, %v705, %v710
    %v715 = vmul.f32 %v655, %v674
    %v716 = vmul.f32 %v656, %v684
    %v717 = vmul.f32 %v657, %v694
    %v718 = vmul.f32 %v658, %v704
    %v719 = vmul.f32 %v659, %v714
    %v720 = vperm.slane %v609, 0
    %v721 = vmul.f32 %v715, %v720
    %v722 = vmul.f32 %v716, %v720
    %v723 = vmul.f32 %v717, %v720
    %v724 = vmul.f32 %v718, %v720
    %v725 = vmul.f32 %v719, %v720
    %v726 = vperm.slane %v609, 1
    %v727 = vadd.f32 %v721, %v726
    %v728 = vadd.f32 %v722, %v726
    %v729 = vadd.f32 %v723, %v726
    %v730 = vadd.f32 %v724, %v726
    %v731 = vadd.f32 %v725, %v726
    %v732 = vld [vmem:[%s15] sm:$0xff]
    %v733 = vld [vmem:[%s15 + $0x8] sm:$0xff]
    %v734 = vld [vmem:[%s15 + $0x10] sm:$0xff]
    %v735 = vld [vmem:[%s15 + $0x18] sm:$0xff]
    %v736 = vld [vmem:[%s15 + $0x20] sm:$0xff]
    %v737 = vld [vmem:[%s15 + $0x28] sm:$0xff]
    %v738 = vld [vmem:[%s15 + $0x30] sm:$0xff]
    %v739 = vld [vmem:[%s15 + $0x38] sm:$0xff]
    %v740 = vld [vmem:[%s15 + $0x40] sm:$0xff]
    %v741 = vld [vmem:[%s15 + $0x48] sm:$0xff]
    %v742 = vld [vmem:[%s15 + $0x50] sm:$0xff]
    %v743 = vld [vmem:[%s15 + $0x58] sm:$0xff]
    %v744 = vld [vmem:[%s15 + $0x60] sm:$0xff]
    %v745 = vld [vmem:[%s15 + $0x68] sm:$0xff]
    %v746 = vld [vmem:[%s15 + $0x70] sm:$0xff]
    %v747 = vld [vmem:[%s15 + $0x78] sm:$0xff]
    %v748 = vld [vmem:[%s15 + $0x80] sm:$0xff]
    %v749 = vld [vmem:[%s15 + $0x88] sm:$0xff]
    %v750 = vld [vmem:[%s15 + $0x90] sm:$0xff]
    %v751 = vld [vmem:[%s15 + $0x98] sm:$0xff]
    %v752 = vld [vmem:[%s15 + $0xa0] sm:$0xff]
    %v753 = vld [vmem:[%s15 + $0xa8] sm:$0xff]
    %v754 = vld [vmem:[%s15 + $0xb0] sm:$0xff]
    %v755 = vld [vmem:[%s15 + $0xb8] sm:$0xff]
    %v756 = vld [vmem:[%s15 + $0xc0] sm:$0xff]
    %v757 = vld [vmem:[%s15 + $0xc8] sm:$0xff]
    %v758 = vld [vmem:[%s15 + $0xd0] sm:$0xff]
    %v759 = vld [vmem:[%s15 + $0xd8] sm:$0xff]
    %v760 = vld [vmem:[%s15 + $0xe0] sm:$0xff]
    %v761 = vld [vmem:[%s15 + $0xe8] sm:$0xff]
    %v762 = vld [vmem:[%s15 + $0xf0] sm:$0xff]
    %v763 = vld [vmem:[%s15 + $0xf8] sm:$0xff]
    %v764 = vld [vmem:[%s15 + $0x100] sm:$0xff]
    %v765 = vld [vmem:[%s15 + $0x108] sm:$0xff]
    %v766 = vld [vmem:[%s15 + $0x110] sm:$0xff]
    %v767 = vld [vmem:[%s15 + $0x118] sm:$0xff]
    %v768 = vld [vmem:[%s15 + $0x120] sm:$0xff]
    %v769 = vld [vmem:[%s15 + $0x128] sm:$0xff]
    %v770 = vld [vmem:[%s15 + $0x130] sm:$0xff]
    %v771 = vld [vmem:[%s15 + $0x138] sm:$0xff]
    %v772 = vld [vmem:[%s15 + $0x140] sm:$0xff]
    %v773 = vld [vmem:[%s15 + $0x148] sm:$0xff]
    %v774 = vld [vmem:[%s15 + $0x150] sm:$0xff]
    %v775 = vld [vmem:[%s15 + $0x158] sm:$0xff]
    %v776 = vld [vmem:[%s15 + $0x160] sm:$0xff]
    %v777 = vld [vmem:[%s15 + $0x168] sm:$0xff]
    %v778 = vld [vmem:[%s15 + $0x170] sm:$0xff]
    %v779 = vld [vmem:[%s15 + $0x178] sm:$0xff]
    %v780 = vld [vmem:[%s17] sm:$0x7]
    %v782 = vperm.slane %v780, 0
    %v783 = vperm.slane %v780, 1
    %v784 = vperm.slane %v780, 2
    %788 = vmatpush.msra.mxu0 %v777
    %789 = vmatpush.msra.mxu0 %v774
    %790 = vmatpush.msra.mxu0 %v771
    %791 = vmatpush.msra.mxu0 %v768
    %792 = vmatpush.msra.mxu0 %v765
    %793 = vmatpush.msra.mxu0 %v762
    %794 = vmatpush.msra.mxu0 %v759
    %795 = vmatpush.msra.mxu0 %v756
    %796 = vmatpush.msra.mxu0 %v753
    %797 = vmatpush.msra.mxu0 %v750
    %798 = vmatpush.msra.mxu0 %v747
    %799 = vmatpush.msra.mxu0 %v744
    %800 = vmatpush.msra.mxu0 %v741
    %801 = vmatpush.msra.mxu0 %v738
    %802 = vmatpush.msra.mxu0 %v735
    %803 = vmatpush.msra.mxu0 %v732
    %804 = vmatmul.f32.gmra.mxu0 %v727
    %v805 = vpop.f32.mrf.mxu0
    %v806 = vadd.f32 %v782, %v805
    %807 = vmatmul.f32.gmra.mxu0 %v728
    %v808 = vpop.f32.mrf.mxu0
    %v809 = vadd.f32 %v782, %v808
    %810 = vmatmul.f32.gmra.mxu0 %v729
    %v811 = vpop.f32.mrf.mxu0
    %v812 = vadd.f32 %v782, %v811
    %813 = vmatmul.f32.gmra.mxu0 %v730
    %v814 = vpop.f32.mrf.mxu0
    %v815 = vadd.f32 %v782, %v814
    %816 = vmatmul.f32.gmra.mxu0 %v731
    %v817 = vpop.f32.mrf.mxu0
    %v818 = vadd.f32 %v782, %v817
    %819 = vdwg.mxu0
    %820 = vmatpush.msra.mxu0 %v778
    %821 = vmatpush.msra.mxu0 %v775
    %822 = vmatpush.msra.mxu0 %v772
    %823 = vmatpush.msra.mxu0 %v769
    %824 = vmatpush.msra.mxu0 %v766
    %825 = vmatpush.msra.mxu0 %v763
    %826 = vmatpush.msra.mxu0 %v760
    %827 = vmatpush.msra.mxu0 %v757
    %828 = vmatpush.msra.mxu0 %v754
    %829 = vmatpush.msra.mxu0 %v751
    %830 = vmatpush.msra.mxu0 %v748
    %831 = vmatpush.msra.mxu0 %v745
    %832 = vmatpush.msra.mxu0 %v742
    %833 = vmatpush.msra.mxu0 %v739
    %834 = vmatpush.msra.mxu0 %v736
    %835 = vmatpush.msra.mxu0 %v733
    %836 = vmatmul.f32.gmra.mxu0 %v727
    %v837 = vpop.f32.mrf.mxu0
    %v838 = vadd.f32 %v783, %v837
    %839 = vmatmul.f32.gmra.mxu0 %v728
    %v840 = vpop.f32.mrf.mxu0
    %v841 = vadd.f32 %v783, %v840
    %842 = vmatmul.f32.gmra.mxu0 %v729
    %v843 = vpop.f32.mrf.mxu0
    %v844 = vadd.f32 %v783, %v843
    %845 = vmatmul.f32.gmra.mxu0 %v730
    %v846 = vpop.f32.mrf.mxu0
    %v847 = vadd.f32 %v783, %v846
    %848 = vmatmul.f32.gmra.mxu0 %v731
    %v849 = vpop.f32.mrf.mxu0
    %v850 = vadd.f32 %v783, %v849
    %851 = vdwg.mxu0
    %852 = vmatpush.msra.mxu0 %v779
    %853 = vmatpush.msra.mxu0 %v776
    %854 = vmatpush.msra.mxu0 %v773
    %855 = vmatpush.msra.mxu0 %v770
    %856 = vmatpush.msra.mxu0 %v767
    %857 = vmatpush.msra.mxu0 %v764
    %858 = vmatpush.msra.mxu0 %v761
    %859 = vmatpush.msra.mxu0 %v758
    %860 = vmatpush.msra.mxu0 %v755
    %861 = vmatpush.msra.mxu0 %v752
    %862 = vmatpush.msra.mxu0 %v749
    %863 = vmatpush.msra.mxu0 %v746
    %864 = vmatpush.msra.mxu0 %v743
    %865 = vmatpush.msra.mxu0 %v740
    %866 = vmatpush.msra.mxu0 %v737
    %867 = vmatpush.msra.mxu0 %v734
    %868 = vmatmul.f32.gmra.mxu0 %v727
    %v869 = vpop.f32.mrf.mxu0
    %v870 = vadd.f32 %v784, %v869
    %871 = vmatmul.f32.gmra.mxu0 %v728
    %v872 = vpop.f32.mrf.mxu0
    %v873 = vadd.f32 %v784, %v872
    %874 = vmatmul.f32.gmra.mxu0 %v729
    %v875 = vpop.f32.mrf.mxu0
    %v876 = vadd.f32 %v784, %v875
    %877 = vmatmul.f32.gmra.mxu0 %v730
    %v878 = vpop.f32.mrf.mxu0
    %v879 = vadd.f32 %v784, %v878
    %880 = vmatmul.f32.gmra.mxu0 %v731
    %v881 = vpop.f32.mrf.mxu0
    %v882 = vadd.f32 %v784, %v881
    %883 = vdwg.mxu0
    %v884 = vld [vmem:[%s19] sm:$0xff]
    %v885 = vld [vmem:[%s19 + $0x8] sm:$0xff]
    %v886 = vld [vmem:[%s19 + $0x10] sm:$0xff]
    %v887 = vld [vmem:[%s19 + $0x18] sm:$0xff]
    %v888 = vld [vmem:[#allocation2] sm:$0x1]
    %v889 = vld [vmem:[%s11] sm:$0xff]
    %v890 = vld [vmem:[%s11 + $0x8] sm:$0xff]
    %v891 = vld [vmem:[%s11 + $0x10] sm:$0xff]
    %v892 = vld [vmem:[%s11 + $0x18] sm:$0xff]
    %v893 = vld [vmem:[%s11 + $0x20] sm:$0xff]
    %vm894 = vcmask 130048
    %v896 = vsel %vm894, %v806, 0
    %v899 = vsel %vm894, %v809, 0
    %v902 = vsel %vm894, %v812, 0
    %v905 = vsel %vm894, %v815, 0
    %v908 = vsel %vm894, %v818, 0
    %v911 = vsel %vm894, %v838, 0
    %v914 = vsel %vm894, %v841, 0
    %v917 = vsel %vm894, %v844, 0
    %v920 = vsel %vm894, %v847, 0
    %v923 = vsel %vm894, %v850, 0
    %925 = vmatpush.xpose.msra.mxu0 0.0
    %926 = vmatpush.xpose.msra.mxu0 0.0
    %927 = vmatpush.xpose.msra.mxu0 0.0
    %928 = vmatpush.xpose.msra.mxu0 0.0
    %929 = vmatpush.xpose.msra.mxu0 0.0
    %930 = vmatpush.xpose.msra.mxu0 0.0
    %931 = vmatpush.xpose.msra.mxu0 0.0
    %932 = vmatpush.xpose.msra.mxu0 0.0
    %933 = vmatpush.xpose.msra.mxu0 0.0
    %934 = vmatpush.xpose.msra.mxu0 0.0
    %935 = vmatpush.xpose.msra.mxu0 0.0
    %936 = vmatpush.xpose.msra.mxu0 %v923
    %937 = vmatpush.xpose.msra.mxu0 %v920
    %938 = vmatpush.xpose.msra.mxu0 %v917
    %939 = vmatpush.xpose.msra.mxu0 %v914
    %940 = vmatpush.xpose.msra.mxu0 %v911
    %941 = vmatmul.f32.gmra.mxu0 %v896
    %v942 = vpop.f32.mrf.mxu0
    %v943 = vadd.f32 0.0, %v942
    %944 = vmatmul.f32.gmra.mxu0 %v899
    %v945 = vpop.f32.mrf.mxu0
    %v946 = vadd.f32 0.0, %v945
    %947 = vmatmul.f32.gmra.mxu0 %v902
    %v948 = vpop.f32.mrf.mxu0
    %v949 = vadd.f32 0.0, %v948
    %950 = vmatmul.f32.gmra.mxu0 %v905
    %v951 = vpop.f32.mrf.mxu0
    %v952 = vadd.f32 0.0, %v951
    %953 = vmatmul.f32.gmra.mxu0 %v908
    %v954 = vpop.f32.mrf.mxu0
    %v955 = vadd.f32 0.0, %v954
    %956 = vdwg.mxu0
    %v957 = vmul.f32 %v943, 0.25
    %v958 = vmul.f32 %v946, 0.25
    %v959 = vmul.f32 %v949, 0.25
    %v960 = vmul.f32 %v952, 0.25
    %v961 = vmul.f32 %v955, 0.25
    %v962 = vadd.f32 %v957, %v889
    %v963 = vadd.f32 %v958, %v890
    %v964 = vadd.f32 %v959, %v891
    %v965 = vadd.f32 %v960, %v892
    %v966 = vadd.f32 %v961, %v893
    %vm967 = vcmask 326656
    %v968 = vsel %vm967, %v962, -inf
    %969 = vmax.xlane.f32.xlu0 %v968
    %v970 = vpop.xlane.xlu0 %969
    %v971 = vsel %vm967, %v963, -inf
    %972 = vmax.xlane.f32.xlu0 %v971
    %v973 = vpop.xlane.xlu0 %972
    %v974 = vsel %vm967, %v964, -inf
    %975 = vmax.xlane.f32.xlu0 %v974
    %v976 = vpop.xlane.xlu0 %975
    %v977 = vsel %vm967, %v965, -inf
    %978 = vmax.xlane.f32.xlu0 %v977
    %v979 = vpop.xlane.xlu0 %978
    %v980 = vsel %vm967, %v966, -inf
    %981 = vmax.xlane.f32.xlu0 %v980
    %v982 = vpop.xlane.xlu0 %981
    %v983 = vsub.f32 %v962, %v970
    %v984 = vsub.f32 %v963, %v973
    %v985 = vsub.f32 %v964, %v976
    %v986 = vsub.f32 %v965, %v979
    %v987 = vsub.f32 %v966, %v982
    %v988 = vmul.f32 %v983, 1.442695
    %v989 = vpow.pop %v988
    %v990 = vmul.f32 %v984, 1.442695
    %v991 = vpow.pop %v990
    %v992 = vmul.f32 %v985, 1.442695
    %v993 = vpow.pop %v992
    %v994 = vmul.f32 %v986, 1.442695
    %v995 = vpow.pop %v994
    %v996 = vmul.f32 %v987, 1.442695
    %v997 = vpow.pop %v996
    %v998 = vsel %vm967, %v989, 0.0
    %999 = vadd.xlane.f32.xlu0 %v998
    %v1000 = vpop.xlane.xlu0 %999
    %v1001 = vsel %vm967, %v991, 0.0
    %1002 = vadd.xlane.f32.xlu0 %v1001
    %v1003 = vpop.xlane.xlu0 %1002
    %v1004 = vsel %vm967, %v993, 0.0
    %1005 = vadd.xlane.f32.xlu0 %v1004
    %v1006 = vpop.xlane.xlu0 %1005
    %v1007 = vsel %vm967, %v995, 0.0
    %1008 = vadd.xlane.f32.xlu0 %v1007
    %v1009 = vpop.xlane.xlu0 %1008
    %v1010 = vsel %vm967, %v997, 0.0
    %1011 = vadd.xlane.f32.xlu0 %v1010
    %v1012 = vpop.xlane.xlu0 %1011
    %v1013 = vrcp.pop %v1000
    %v1014 = vrcp.pop %v1003
    %v1015 = vrcp.pop %v1006
    %v1016 = vrcp.pop %v1009
    %v1017 = vrcp.pop %v1012
    %v1018 = vmul.f32 %v989, %v1013
    %v1019 = vmul.f32 %v991, %v1014
    %v1020 = vmul.f32 %v993, %v1015
    %v1021 = vmul.f32 %v995, %v1016
    %v1022 = vmul.f32 %v997, %v1017
    %v1024 = vsel %vm967, %v1018, 0
    %v1027 = vsel %vm967, %v1019, 0
    %v1030 = vsel %vm967, %v1020, 0
    %v1033 = vsel %vm967, %v1021, 0
    %v1036 = vsel %vm967, %v1022, 0
    %1038 = vmatpush.msra.mxu0 0.0
    %1039 = vmatpush.msra.mxu0 0.0
    %1040 = vmatpush.msra.mxu0 0.0
    %1041 = vmatpush.msra.mxu0 0.0
    %1042 = vmatpush.msra.mxu0 0.0
    %1043 = vmatpush.msra.mxu0 0.0
    %1044 = vmatpush.msra.mxu0 0.0
    %1045 = vmatpush.msra.mxu0 0.0
    %1046 = vmatpush.msra.mxu0 0.0
    %1047 = vmatpush.msra.mxu0 0.0
    %1048 = vmatpush.msra.mxu0 0.0
    %1049 = vmatpush.msra.mxu0 %v882
    %1050 = vmatpush.msra.mxu0 %v879
    %1051 = vmatpush.msra.mxu0 %v876
    %1052 = vmatpush.msra.mxu0 %v873
    %1053 = vmatpush.msra.mxu0 %v870
    %1054 = vmatmul.f32.gmra.mxu0 %v1024
    %v1055 = vpop.f32.mrf.mxu0
    %v1056 = vadd.f32 0.0, %v1055
    %1057 = vmatmul.f32.gmra.mxu0 %v1027
    %v1058 = vpop.f32.mrf.mxu0
    %v1059 = vadd.f32 0.0, %v1058
    %1060 = vmatmul.f32.gmra.mxu0 %v1030
    %v1061 = vpop.f32.mrf.mxu0
    %v1062 = vadd.f32 0.0, %v1061
    %1063 = vmatmul.f32.gmra.mxu0 %v1033
    %v1064 = vpop.f32.mrf.mxu0
    %v1065 = vadd.f32 0.0, %v1064
    %1066 = vmatmul.f32.gmra.mxu0 %v1036
    %v1067 = vpop.f32.mrf.mxu0
    %v1068 = vadd.f32 0.0, %v1067
    %1069 = vdwg.mxu0
    %1070 = vrot.lane.b32.xlu0 %v806, 112
    %v1071 = vpop.permute.xlu0 %1070
    %1072 = vrot.lane.b32.xlu0 %v809, 112
    %v1073 = vpop.permute.xlu0 %1072
    %1074 = vrot.lane.b32.xlu0 %v812, 112
    %v1075 = vpop.permute.xlu0 %1074
    %1076 = vrot.lane.b32.xlu0 %v815, 112
    %v1077 = vpop.permute.xlu0 %1076
    %1078 = vrot.lane.b32.xlu0 %v818, 112
    %v1079 = vpop.permute.xlu0 %1078
    %1080 = vrot.lane.b32.xlu0 %v838, 112
    %v1081 = vpop.permute.xlu0 %1080
    %1082 = vrot.lane.b32.xlu0 %v841, 112
    %v1083 = vpop.permute.xlu0 %1082
    %1084 = vrot.lane.b32.xlu0 %v844, 112
    %v1085 = vpop.permute.xlu0 %1084
    %1086 = vrot.lane.b32.xlu0 %v847, 112
    %v1087 = vpop.permute.xlu0 %1086
    %1088 = vrot.lane.b32.xlu0 %v850, 112
    %v1089 = vpop.permute.xlu0 %1088
    %v1090 = vsel %vm894, %v1071, 0
    %v1092 = vsel %vm894, %v1073, 0
    %v1094 = vsel %vm894, %v1075, 0
    %v1096 = vsel %vm894, %v1077, 0
    %v1098 = vsel %vm894, %v1079, 0
    %v1100 = vsel %vm894, %v1081, 0
    %v1102 = vsel %vm894, %v1083, 0
    %v1104 = vsel %vm894, %v1085, 0
    %v1106 = vsel %vm894, %v1087, 0
    %v1108 = vsel %vm894, %v1089, 0
    %1110 = vmatpush.xpose.msra.mxu0 0.0
    %1111 = vmatpush.xpose.msra.mxu0 0.0
    %1112 = vmatpush.xpose.msra.mxu0 0.0
    %1113 = vmatpush.xpose.msra.mxu0 0.0
    %1114 = vmatpush.xpose.msra.mxu0 0.0
    %1115 = vmatpush.xpose.msra.mxu0 0.0
    %1116 = vmatpush.xpose.msra.mxu0 0.0
    %1117 = vmatpush.xpose.msra.mxu0 0.0
    %1118 = vmatpush.xpose.msra.mxu0 0.0
    %1119 = vmatpush.xpose.msra.mxu0 0.0
    %1120 = vmatpush.xpose.msra.mxu0 0.0
    %1121 = vmatpush.xpose.msra.mxu0 %v1108
    %1122 = vmatpush.xpose.msra.mxu0 %v1106
    %1123 = vmatpush.xpose.msra.mxu0 %v1104
    %1124 = vmatpush.xpose.msra.mxu0 %v1102
    %1125 = vmatpush.xpose.msra.mxu0 %v1100
    %1126 = vmatmul.f32.gmra.mxu0 %v1090
    %v1127 = vpop.f32.mrf.mxu0
    %v1128 = vadd.f32 0.0, %v1127
    %1129 = vmatmul.f32.gmra.mxu0 %v1092
    %v1130 = vpop.f32.mrf.mxu0
    %v1131 = vadd.f32 0.0, %v1130
    %1132 = vmatmul.f32.gmra.mxu0 %v1094
    %v1133 = vpop.f32.mrf.mxu0
    %v1134 = vadd.f32 0.0, %v1133
    %1135 = vmatmul.f32.gmra.mxu0 %v1096
    %v1136 = vpop.f32.mrf.mxu0
    %v1137 = vadd.f32 0.0, %v1136
    %1138 = vmatmul.f32.gmra.mxu0 %v1098
    %v1139 = vpop.f32.mrf.mxu0
    %v1140 = vadd.f32 0.0, %v1139
    %1141 = vdwg.mxu0
    %v1142 = vmul.f32 %v1128, 0.25
    %v1143 = vmul.f32 %v1131, 0.25
    %v1144 = vmul.f32 %v1134, 0.25
    %v1145 = vmul.f32 %v1137, 0.25
    %v1146 = vmul.f32 %v1140, 0.25
    %v1147 = vadd.f32 %v1142, %v889
    %v1148 = vadd.f32 %v1143, %v890
    %v1149 = vadd.f32 %v1144, %v891
    %v1150 = vadd.f32 %v1145, %v892
    %v1151 = vadd.f32 %v1146, %v893
    %v1152 = vsel %vm967, %v1147, -inf
    %1153 = vmax.xlane.f32.xlu0 %v1152
    %v1154 = vpop.xlane.xlu0 %1153
    %v1155 = vsel %vm967, %v1148, -inf
    %1156 = vmax.xlane.f32.xlu0 %v1155
    %v1157 = vpop.xlane.xlu0 %1156
    %v1158 = vsel %vm967, %v1149, -inf
    %1159 = vmax.xlane.f32.xlu0 %v1158
    %v1160 = vpop.xlane.xlu0 %1159
    %v1161 = vsel %vm967, %v1150, -inf
    %1162 = vmax.xlane.f32.xlu0 %v1161
    %v1163 = vpop.xlane.xlu0 %1162
    %v1164 = vsel %vm967, %v1151, -inf
    %1165 = vmax.xlane.f32.xlu0 %v1164
    %v1166 = vpop.xlane.xlu0 %1165
    %v1167 = vsub.f32 %v1147, %v1154
    %v1168 = vsub.f32 %v1148, %v1157
    %v1169 = vsub.f32 %v1149, %v1160
    %v1170 = vsub.f32 %v1150, %v1163
    %v1171 = vsub.f32 %v1151, %v1166
    %v1172 = vmul.f32 %v1167, 1.442695
    %v1173 = vpow.pop %v1172
    %v1174 = vmul.f32 %v1168, 1.442695
    %v1175 = vpow.pop %v1174
    %v1176 = vmul.f32 %v1169, 1.442695
    %v1177 = vpow.pop %v1176
    %v1178 = vmul.f32 %v1170, 1.442695
    %v1179 = vpow.pop %v1178
    %v1180 = vmul.f32 %v1171, 1.442695
    %v1181 = vpow.pop %v1180
    %v1182 = vsel %vm967, %v1173, 0.0
    %1183 = vadd.xlane.f32.xlu0 %v1182
    %v1184 = vpop.xlane.xlu0 %1183
    %v1185 = vsel %vm967, %v1175, 0.0
    %1186 = vadd.xlane.f32.xlu0 %v1185
    %v1187 = vpop.xlane.xlu0 %1186
    %v1188 = vsel %vm967, %v1177, 0.0
    %1189 = vadd.xlane.f32.xlu0 %v1188
    %v1190 = vpop.xlane.xlu0 %1189
    %v1191 = vsel %vm967, %v1179, 0.0
    %1192 = vadd.xlane.f32.xlu0 %v1191
    %v1193 = vpop.xlane.xlu0 %1192
    %v1194 = vsel %vm967, %v1181, 0.0
    %1195 = vadd.xlane.f32.xlu0 %v1194
    %v1196 = vpop.xlane.xlu0 %1195
    %v1197 = vrcp.pop %v1184
    %v1198 = vrcp.pop %v1187
    %v1199 = vrcp.pop %v1190
    %v1200 = vrcp.pop %v1193
    %v1201 = vrcp.pop %v1196
    %v1202 = vmul.f32 %v1173, %v1197
    %v1203 = vmul.f32 %v1175, %v1198
    %v1204 = vmul.f32 %v1177, %v1199
    %v1205 = vmul.f32 %v1179, %v1200
    %v1206 = vmul.f32 %v1181, %v1201
    %1212 = vrot.lane.b32.xlu0 %v870, 112
    %v1213 = vpop.permute.xlu0 %1212
    %1214 = vrot.lane.b32.xlu0 %v873, 112
    %v1215 = vpop.permute.xlu0 %1214
    %1216 = vrot.lane.b32.xlu0 %v876, 112
    %v1217 = vpop.permute.xlu0 %1216
    %1218 = vrot.lane.b32.xlu0 %v879, 112
    %v1219 = vpop.permute.xlu0 %1218
    %1220 = vrot.lane.b32.xlu0 %v882, 112
    %v1221 = vpop.permute.xlu0 %1220
    %v1228 = vsel %vm967, %v1202, 0
    %v1231 = vsel %vm967, %v1203, 0
    %v1234 = vsel %vm967, %v1204, 0
    %v1237 = vsel %vm967, %v1205, 0
    %v1240 = vsel %vm967, %v1206, 0
    %1242 = vmatpush.msra.mxu0 0.0
    %1243 = vmatpush.msra.mxu0 0.0
    %1244 = vmatpush.msra.mxu0 0.0
    %1245 = vmatpush.msra.mxu0 0.0
    %1246 = vmatpush.msra.mxu0 0.0
    %1247 = vmatpush.msra.mxu0 0.0
    %1248 = vmatpush.msra.mxu0 0.0
    %1249 = vmatpush.msra.mxu0 0.0
    %1250 = vmatpush.msra.mxu0 0.0
    %1251 = vmatpush.msra.mxu0 0.0
    %1252 = vmatpush.msra.mxu0 0.0
    %1253 = vmatpush.msra.mxu0 %v1221
    %1254 = vmatpush.msra.mxu0 %v1219
    %1255 = vmatpush.msra.mxu0 %v1217
    %1256 = vmatpush.msra.mxu0 %v1215
    %1257 = vmatpush.msra.mxu0 %v1213
    %1258 = vmatmul.f32.gmra.mxu0 %v1228
    %v1259 = vpop.f32.mrf.mxu0
    %v1260 = vadd.f32 0.0, %v1259
    %1261 = vmatmul.f32.gmra.mxu0 %v1231
    %v1262 = vpop.f32.mrf.mxu0
    %v1263 = vadd.f32 0.0, %v1262
    %1264 = vmatmul.f32.gmra.mxu0 %v1234
    %v1265 = vpop.f32.mrf.mxu0
    %v1266 = vadd.f32 0.0, %v1265
    %1267 = vmatmul.f32.gmra.mxu0 %v1237
    %v1268 = vpop.f32.mrf.mxu0
    %v1269 = vadd.f32 0.0, %v1268
    %1270 = vmatmul.f32.gmra.mxu0 %v1240
    %v1271 = vpop.f32.mrf.mxu0
    %v1272 = vadd.f32 0.0, %v1271
    %1273 = vdwg.mxu0
    %1279 = vrot.lane.b32.xlu0 %v1260, 16
    %v1280 = vpop.permute.xlu0 %1279
    %1281 = vrot.lane.b32.xlu0 %v1263, 16
    %v1282 = vpop.permute.xlu0 %1281
    %1283 = vrot.lane.b32.xlu0 %v1266, 16
    %v1284 = vpop.permute.xlu0 %1283
    %1285 = vrot.lane.b32.xlu0 %v1269, 16
    %v1286 = vpop.permute.xlu0 %1285
    %1287 = vrot.lane.b32.xlu0 %v1272, 16
    %v1288 = vpop.permute.xlu0 %1287
    %v1294 = vsel %vm894, %v1056, %v1280
    %v1295 = vsel %vm894, %v1059, %v1282
    %v1296 = vsel %vm894, %v1062, %v1284
    %v1297 = vsel %vm894, %v1065, %v1286
    %v1298 = vsel %vm894, %v1068, %v1288
    %v1300 = vperm.slane %v888, 0
    %vm1302 = vcmask 261120
    %v1304 = vsel %vm1302, %v1294, 0
    %v1307 = vsel %vm1302, %v1295, 0
    %v1310 = vsel %vm1302, %v1296, 0
    %v1313 = vsel %vm1302, %v1297, 0
    %v1316 = vsel %vm1302, %v1298, 0
    %1318 = vmatpush.msra.mxu0 0.0
    %1319 = vmatpush.msra.mxu0 0.0
    %1320 = vmatpush.msra.mxu0 0.0
    %1321 = vmatpush.msra.mxu0 0.0
    %1322 = vmatpush.msra.mxu0 0.0
    %1323 = vmatpush.msra.mxu0 0.0
    %1324 = vmatpush.msra.mxu0 0.0
    %1325 = vmatpush.msra.mxu0 0.0
    %1326 = vmatpush.msra.mxu0 0.0
    %1327 = vmatpush.msra.mxu0 0.0
    %1328 = vmatpush.msra.mxu0 0.0
    %1329 = vmatpush.msra.mxu0 0.0
    %1330 = vmatpush.msra.mxu0 %v887
    %1331 = vmatpush.msra.mxu0 %v886
    %1332 = vmatpush.msra.mxu0 %v885
    %1333 = vmatpush.msra.mxu0 %v884
    %1334 = vmatmul.f32.gmra.mxu0 %v1304
    %v1335 = vpop.f32.mrf.mxu0
    %v1336 = vadd.f32 %v1300, %v1335
    %1337 = vmatmul.f32.gmra.mxu0 %v1307
    %v1338 = vpop.f32.mrf.mxu0
    %v1339 = vadd.f32 %v1300, %v1338
    %1340 = vmatmul.f32.gmra.mxu0 %v1310
    %v1341 = vpop.f32.mrf.mxu0
    %v1342 = vadd.f32 %v1300, %v1341
    %1343 = vmatmul.f32.gmra.mxu0 %v1313
    %v1344 = vpop.f32.mrf.mxu0
    %v1345 = vadd.f32 %v1300, %v1344
    %1346 = vmatmul.f32.gmra.mxu0 %v1316
    %v1347 = vpop.f32.mrf.mxu0
    %v1348 = vadd.f32 %v1300, %v1347
    %1349 = vdwg.mxu0
    %v1350 = vadd.f32 %v608, %v1336
    %v1351 = vadd.f32 %v597, %v1339
    %v1352 = vadd.f32 %v600, %v1342
    %v1353 = vadd.f32 %v603, %v1345
    %v1354 = vadd.f32 %v606, %v1348
    %v1355 = vld [vmem:[%s23] sm:$0x3]
    %1356 = vadd.xlane.f32.xlu0 %v1350
    %v1357 = vpop.xlane.xlu0 %1356
    %1358 = vadd.xlane.f32.xlu0 %v1351
    %v1359 = vpop.xlane.xlu0 %1358
    %1360 = vadd.xlane.f32.xlu0 %v1352
    %v1361 = vpop.xlane.xlu0 %1360
    %1362 = vadd.xlane.f32.xlu0 %v1353
    %v1363 = vpop.xlane.xlu0 %1362
    %1364 = vadd.xlane.f32.xlu0 %v1354
    %v1365 = vpop.xlane.xlu0 %1364
    %v1366 = vmul.f32 %v1357, 0.03125
    %v1367 = vmul.f32 %v1359, 0.03125
    %v1368 = vmul.f32 %v1361, 0.03125
    %v1369 = vmul.f32 %v1363, 0.03125
    %v1370 = vmul.f32 %v1365, 0.03125
    %v1371 = vmul.f32 %v1350, %v1350
    %v1372 = vmul.f32 %v1351, %v1351
    %v1373 = vmul.f32 %v1352, %v1352
    %v1374 = vmul.f32 %v1353, %v1353
    %v1375 = vmul.f32 %v1354, %v1354
    %1376 = vadd.xlane.f32.xlu0 %v1371
    %v1377 = vpop.xlane.xlu0 %1376
    %1378 = vadd.xlane.f32.xlu0 %v1372
    %v1379 = vpop.xlane.xlu0 %1378
    %1380 = vadd.xlane.f32.xlu0 %v1373
    %v1381 = vpop.xlane.xlu0 %1380
    %1382 = vadd.xlane.f32.xlu0 %v1374
    %v1383 = vpop.xlane.xlu0 %1382
    %1384 = vadd.xlane.f32.xlu0 %v1375
    %v1385 = vpop.xlane.xlu0 %1384
    %v1386 = vmul.f32 %v1377, 0.03125
    %v1387 = vmul.f32 %v1379, 0.03125
    %v1388 = vmul.f32 %v1381, 0.03125
    %v1389 = vmul.f32 %v1383, 0.03125
    %v1390 = vmul.f32 %v1385, 0.03125
    %v1391 = vmul.f32 %v1366, %v1366
    %v1392 = vmul.f32 %v1367, %v1367
    %v1393 = vmul.f32 %v1368, %v1368
    %v1394 = vmul.f32 %v1369, %v1369
    %v1395 = vmul.f32 %v1370, %v1370
    %v1396 = vsub.f32 %v1386, %v1391
    %v1397 = vsub.f32 %v1387, %v1392
    %v1398 = vsub.f32 %v1388, %v1393
    %v1399 = vsub.f32 %v1389, %v1394
    %v1400 = vsub.f32 %v1390, %v1395
    %v1401 = vsub.f32 %v1350, %v1366
    %v1402 = vsub.f32 %v1351, %v1367
    %v1403 = vsub.f32 %v1352, %v1368
    %v1404 = vsub.f32 %v1353, %v1369
    %v1405 = vsub.f32 %v1354, %v1370
    %v1406 = vadd.f32 %v1396, 1e-05
    %v1407 = vadd.f32 %v1397, 1e-05
    %v1408 = vadd.f32 %v1398, 1e-05
    %v1409 = vadd.f32 %v1399, 1e-05
    %v1410 = vadd.f32 %v1400, 1e-05
    %v1411 = vrsqrt.pop %v1406
    %v1412 = vmul.f32 %v1411, %v1406
    %v1413 = vmul.f32 %v1412, %v1411
    %v1414 = vmul.f32 0.5, %v1413
    %v1415 = vsub.f32 1.5, %v1414
    %v1416 = vmul.f32 %v1411, %v1415
    %vm1417 = vweird.f32 %v1406
    %vm1418 = vweird.f32 %v1411
    %vm1419 = vmor %vm1417, %vm1418
    %v1420 = vsel %vm1419, %v1411, %v1416
    %v1421 = vrsqrt.pop %v1407
    %v1422 = vmul.f32 %v1421, %v1407
    %v1423 = vmul.f32 %v1422, %v1421
    %v1424 = vmul.f32 0.5, %v1423
    %v1425 = vsub.f32 1.5, %v1424
    %v1426 = vmul.f32 %v1421, %v1425
    %vm1427 = vweird.f32 %v1407
    %vm1428 = vweird.f32 %v1421
    %vm1429 = vmor %vm1427, %vm1428
    %v1430 = vsel %vm1429, %v1421, %v1426
    %v1431 = vrsqrt.pop %v1408
    %v1432 = vmul.f32 %v1431, %v1408
    %v1433 = vmul.f32 %v1432, %v1431
    %v1434 = vmul.f32 0.5, %v1433
    %v1435 = vsub.f32 1.5, %v1434
    %v1436 = vmul.f32 %v1431, %v1435
    %vm1437 = vweird.f32 %v1408
    %vm1438 = vweird.f32 %v1431
    %vm1439 = vmor %vm1437, %vm1438
    %v1440 = vsel %vm1439, %v1431, %v1436
    %v1441 = vrsqrt.pop %v1409
    %v1442 = vmul.f32 %v1441, %v1409
    %v1443 = vmul.f32 %v1442, %v1441
    %v1444 = vmul.f32 0.5, %v1443
    %v1445 = vsub.f32 1.5, %v1444
    %v1446 = vmul.f32 %v1441, %v1445
    %vm1447 = vweird.f32 %v1409
    %vm1448 = vweird.f32 %v1441
    %vm1449 = vmor %vm1447, %vm1448
    %v1450 = vsel %vm1449, %v1441, %v1446
    %v1451 = vrsqrt.pop %v1410
    %v1452 = vmul.f32 %v1451, %v1410
    %v1453 = vmul.f32 %v1452, %v1451
    %v1454 = vmul.f32 0.5, %v1453
    %v1455 = vsub.f32 1.5, %v1454
    %v1456 = vmul.f32 %v1451, %v1455
    %vm1457 = vweird.f32 %v1410
    %vm1458 = vweird.f32 %v1451
    %vm1459 = vmor %vm1457, %vm1458
    %v1460 = vsel %vm1459, %v1451, %v1456
    %v1461 = vmul.f32 %v1401, %v1420
    %v1462 = vmul.f32 %v1402, %v1430
    %v1463 = vmul.f32 %v1403, %v1440
    %v1464 = vmul.f32 %v1404, %v1450
    %v1465 = vmul.f32 %v1405, %v1460
    %v1466 = vperm.slane %v1355, 0
    %v1467 = vmul.f32 %v1461, %v1466
    %v1468 = vmul.f32 %v1462, %v1466
    %v1469 = vmul.f32 %v1463, %v1466
    %v1470 = vmul.f32 %v1464, %v1466
    %v1471 = vmul.f32 %v1465, %v1466
    %v1472 = vperm.slane %v1355, 1
    %v1473 = vadd.f32 %v1467, %v1472
    %v1474 = vadd.f32 %v1468, %v1472
    %v1475 = vadd.f32 %v1469, %v1472
    %v1476 = vadd.f32 %v1470, %v1472
    %v1477 = vadd.f32 %v1471, %v1472
    %v1478 = vld [vmem:[%s25] sm:$0xff]
    %v1479 = vld [vmem:[%s25 + $0x8] sm:$0xff]
    %v1480 = vld [vmem:[%s25 + $0x10] sm:$0xff]
    %v1481 = vld [vmem:[%s25 + $0x18] sm:$0xff]
    %v1482 = vld [vmem:[%s25 + $0x20] sm:$0xff]
    %v1483 = vld [vmem:[%s25 + $0x28] sm:$0xff]
    %v1484 = vld [vmem:[%s25 + $0x30] sm:$0xff]
    %v1485 = vld [vmem:[%s25 + $0x38] sm:$0xff]
    %v1486 = vld [vmem:[%s25 + $0x40] sm:$0xff]
    %v1487 = vld [vmem:[%s25 + $0x48] sm:$0xff]
    %v1488 = vld [vmem:[%s25 + $0x50] sm:$0xff]
    %v1489 = vld [vmem:[%s25 + $0x58] sm:$0xff]
    %v1490 = vld [vmem:[%s25 + $0x60] sm:$0xff]
    %v1491 = vld [vmem:[%s25 + $0x68] sm:$0xff]
    %v1492 = vld [vmem:[%s25 + $0x70] sm:$0xff]
    %v1493 = vld [vmem:[%s25 + $0x78] sm:$0xff]
    %v1494 = vld [vmem:[#allocation5] sm:$0x1]
    %v1495 = vld [vmem:[%s29] sm:$0xff]
    %v1496 = vld [vmem:[%s29 + $0x8] sm:$0xff]
    %v1497 = vld [vmem:[%s29 + $0x10] sm:$0xff]
    %v1498 = vld [vmem:[%s29 + $0x18] sm:$0xff]
    %v1499 = vld [vmem:[%s29 + $0x20] sm:$0xff]
    %v1500 = vld [vmem:[%s29 + $0x28] sm:$0xff]
    %v1501 = vld [vmem:[%s29 + $0x30] sm:$0xff]
    %v1502 = vld [vmem:[%s29 + $0x38] sm:$0xff]
    %v1503 = vld [vmem:[%s29 + $0x40] sm:$0xff]
    %v1504 = vld [vmem:[%s29 + $0x48] sm:$0xff]
    %v1505 = vld [vmem:[%s29 + $0x50] sm:$0xff]
    %v1506 = vld [vmem:[%s29 + $0x58] sm:$0xff]
    %v1507 = vld [vmem:[%s29 + $0x60] sm:$0xff]
    %v1508 = vld [vmem:[%s29 + $0x68] sm:$0xff]
    %v1509 = vld [vmem:[%s29 + $0x70] sm:$0xff]
    %v1510 = vld [vmem:[%s29 + $0x78] sm:$0xff]
    %v1511 = vld [vmem:[#allocation7] sm:$0x1]
    %v1513 = vperm.slane %v1494, 0
    %1515 = vmatpush.msra.mxu0 %v1493
    %1516 = vmatpush.msra.mxu0 %v1492
    %1517 = vmatpush.msra.mxu0 %v1491
    %1518 = vmatpush.msra.mxu0 %v1490
    %1519 = vmatpush.msra.mxu0 %v1489
    %1520 = vmatpush.msra.mxu0 %v1488
    %1521 = vmatpush.msra.mxu0 %v1487
    %1522 = vmatpush.msra.mxu0 %v1486
    %1523 = vmatpush.msra.mxu0 %v1485
    %1524 = vmatpush.msra.mxu0 %v1484
    %1525 = vmatpush.msra.mxu0 %v1483
    %1526 = vmatpush.msra.mxu0 %v1482
    %1527 = vmatpush.msra.mxu0 %v1481
    %1528 = vmatpush.msra.mxu0 %v1480
    %1529 = vmatpush.msra.mxu0 %v1479
    %1530 = vmatpush.msra.mxu0 %v1478
    %1531 = vmatmul.f32.gmra.mxu0 %v1473
    %v1532 = vpop.f32.mrf.mxu0
    %v1533 = vadd.f32 %v1513, %v1532
    %1534 = vmatmul.f32.gmra.mxu0 %v1474
    %v1535 = vpop.f32.mrf.mxu0
    %v1536 = vadd.f32 %v1513, %v1535
    %1537 = vmatmul.f32.gmra.mxu0 %v1475
    %v1538 = vpop.f32.mrf.mxu0
    %v1539 = vadd.f32 %v1513, %v1538
    %1540 = vmatmul.f32.gmra.mxu0 %v1476
    %v1541 = vpop.f32.mrf.mxu0
    %v1542 = vadd.f32 %v1513, %v1541
    %1543 = vmatmul.f32.gmra.mxu0 %v1477
    %v1544 = vpop.f32.mrf.mxu0
    %v1545 = vadd.f32 %v1513, %v1544
    %1546 = vdwg.mxu0
    %v1547 = vmul.f32 %v1533, %v1533
    %v1548 = vmul.f32 %v1536, %v1536
    %v1549 = vmul.f32 %v1539, %v1539
    %v1550 = vmul.f32 %v1542, %v1542
    %v1551 = vmul.f32 %v1545, %v1545
    %v1552 = vmul.f32 %v1533, %v1547
    %v1553 = vmul.f32 %v1536, %v1548
    %v1554 = vmul.f32 %v1539, %v1549
    %v1555 = vmul.f32 %v1542, %v1550
    %v1556 = vmul.f32 %v1545, %v1551
    %v1557 = vmul.f32 %v1552, 0.044715
    %v1558 = vmul.f32 %v1553, 0.044715
    %v1559 = vmul.f32 %v1554, 0.044715
    %v1560 = vmul.f32 %v1555, 0.044715
    %v1561 = vmul.f32 %v1556, 0.044715
    %v1562 = vadd.f32 %v1533, %v1557
    %v1563 = vadd.f32 %v1536, %v1558
    %v1564 = vadd.f32 %v1539, %v1559
    %v1565 = vadd.f32 %v1542, %v1560
    %v1566 = vadd.f32 %v1545, %v1561
    %v1567 = vmul.f32 %v1562, 0.7978846
    %v1568 = vmul.f32 %v1563, 0.7978846
    %v1569 = vmul.f32 %v1564, 0.7978846
    %v1570 = vmul.f32 %v1565, 0.7978846
    %v1571 = vmul.f32 %v1566, 0.7978846
    %v1572 = vtanh.pop %v1567
    %v1573 = vtanh.pop %v1568
    %v1574 = vtanh.pop %v1569
    %v1575 = vtanh.pop %v1570
    %v1576 = vtanh.pop %v1571
    %v1577 = vadd.f32 %v1572, 1.0
    %v1578 = vadd.f32 %v1573, 1.0
    %v1579 = vadd.f32 %v1574, 1.0
    %v1580 = vadd.f32 %v1575, 1.0
    %v1581 = vadd.f32 %v1576, 1.0
    %v1582 = vmul.f32 %v1577, 0.5
    %v1583 = vmul.f32 %v1578, 0.5
    %v1584 = vmul.f32 %v1579, 0.5
    %v1585 = vmul.f32 %v1580, 0.5
    %v1586 = vmul.f32 %v1581, 0.5
    %v1587 = vmul.f32 %v1533, %v1582
    %v1588 = vmul.f32 %v1536, %v1583
    %v1589 = vmul.f32 %v1539, %v1584
    %v1590 = vmul.f32 %v1542, %v1585
    %v1591 = vmul.f32 %v1545, %v1586
    %v1593 = vperm.slane %v1511, 0
    %1595 = vmatpush.msra.mxu0 %v1510
    %1596 = vmatpush.msra.mxu0 %v1509
    %1597 = vmatpush.msra.mxu0 %v1508
    %1598 = vmatpush.msra.mxu0 %v1507
    %1599 = vmatpush.msra.mxu0 %v1506
    %1600 = vmatpush.msra.mxu0 %v1505
    %1601 = vmatpush.msra.mxu0 %v1504
    %1602 = vmatpush.msra.mxu0 %v1503
    %1603 = vmatpush.msra.mxu0 %v1502
    %1604 = vmatpush.msra.mxu0 %v1501
    %1605 = vmatpush.msra.mxu0 %v1500
    %1606 = vmatpush.msra.mxu0 %v1499
    %1607 = vmatpush.msra.mxu0 %v1498
    %1608 = vmatpush.msra.mxu0 %v1497
    %1609 = vmatpush.msra.mxu0 %v1496
    %1610 = vmatpush.msra.mxu0 %v1495
    %1611 = vmatmul.f32.gmra.mxu0 %v1587
    %v1612 = vpop.f32.mrf.mxu0
    %v1613 = vadd.f32 %v1593, %v1612
    %1614 = vmatmul.f32.gmra.mxu0 %v1588
    %v1615 = vpop.f32.mrf.mxu0
    %v1616 = vadd.f32 %v1593, %v1615
    %1617 = vmatmul.f32.gmra.mxu0 %v1589
    %v1618 = vpop.f32.mrf.mxu0
    %v1619 = vadd.f32 %v1593, %v1618
    %1620 = vmatmul.f32.gmra.mxu0 %v1590
    %v1621 = vpop.f32.mrf.mxu0
    %v1622 = vadd.f32 %v1593, %v1621
    %1623 = vmatmul.f32.gmra.mxu0 %v1591
    %v1624 = vpop.f32.mrf.mxu0
    %v1625 = vadd.f32 %v1593, %v1624
    %1626 = vdwg.mxu0
    %v1627 = vadd.f32 %v1350, %v1613
    %v1628 = vadd.f32 %v1351, %v1616
    %v1629 = vadd.f32 %v1352, %v1619
    %v1630 = vadd.f32 %v1353, %v1622
    %v1631 = vadd.f32 %v1354, %v1625
    %v1632 = vld [vmem:[%s33] sm:$0x3]
    %1633 = vadd.xlane.f32.xlu0 %v1627
    %v1634 = vpop.xlane.xlu0 %1633
    %1635 = vadd.xlane.f32.xlu0 %v1628
    %v1636 = vpop.xlane.xlu0 %1635
    %1637 = vadd.xlane.f32.xlu0 %v1629
    %v1638 = vpop.xlane.xlu0 %1637
    %1639 = vadd.xlane.f32.xlu0 %v1630
    %v1640 = vpop.xlane.xlu0 %1639
    %1641 = vadd.xlane.f32.xlu0 %v1631
    %v1642 = vpop.xlane.xlu0 %1641
    %v1643 = vmul.f32 %v1634, 0.03125
    %v1644 = vmul.f32 %v1636, 0.03125
    %v1645 = vmul.f32 %v1638, 0.03125
    %v1646 = vmul.f32 %v1640, 0.03125
    %v1647 = vmul.f32 %v1642, 0.03125
    %v1648 = vmul.f32 %v1627, %v1627
    %v1649 = vmul.f32 %v1628, %v1628
    %v1650 = vmul.f32 %v1629, %v1629
    %v1651 = vmul.f32 %v1630, %v1630
    %v1652 = vmul.f32 %v1631, %v1631
    %1653 = vadd.xlane.f32.xlu0 %v1648
    %v1654 = vpop.xlane.xlu0 %1653
    %1655 = vadd.xlane.f32.xlu0 %v1649
    %v1656 = vpop.xlane.xlu0 %1655
    %1657 = vadd.xlane.f32.xlu0 %v1650
    %v1658 = vpop.xlane.xlu0 %1657
    %1659 = vadd.xlane.f32.xlu0 %v1651
    %v1660 = vpop.xlane.xlu0 %1659
    %1661 = vadd.xlane.f32.xlu0 %v1652
    %v1662 = vpop.xlane.xlu0 %1661
    %v1663 = vmul.f32 %v1654, 0.03125
    %v1664 = vmul.f32 %v1656, 0.03125
    %v1665 = vmul.f32 %v1658, 0.03125
    %v1666 = vmul.f32 %v1660, 0.03125
    %v1667 = vmul.f32 %v1662, 0.03125
    %v1668 = vmul.f32 %v1643, %v1643
    %v1669 = vmul.f32 %v1644, %v1644
    %v1670 = vmul.f32 %v1645, %v1645
    %v1671 = vmul.f32 %v1646, %v1646
    %v1672 = vmul.f32 %v1647, %v1647
    %v1673 = vsub.f32 %v1663, %v1668
    %v1674 = vsub.f32 %v1664, %v1669
    %v1675 = vsub.f32 %v1665, %v1670
    %v1676 = vsub.f32 %v1666, %v1671
    %v1677 = vsub.f32 %v1667, %v1672
    %v1678 = vsub.f32 %v1627, %v1643
    %v1679 = vsub.f32 %v1628, %v1644
    %v1680 = vsub.f32 %v1629, %v1645
    %v1681 = vsub.f32 %v1630, %v1646
    %v1682 = vsub.f32 %v1631, %v1647
    %v1683 = vadd.f32 %v1673, 1e-05
    %v1684 = vadd.f32 %v1674, 1e-05
    %v1685 = vadd.f32 %v1675, 1e-05
    %v1686 = vadd.f32 %v1676, 1e-05
    %v1687 = vadd.f32 %v1677, 1e-05
    %v1688 = vrsqrt.pop %v1683
    %v1689 = vmul.f32 %v1688, %v1683
    %v1690 = vmul.f32 %v1689, %v1688
    %v1691 = vmul.f32 0.5, %v1690
    %v1692 = vsub.f32 1.5, %v1691
    %v1693 = vmul.f32 %v1688, %v1692
    %vm1694 = vweird.f32 %v1683
    %vm1695 = vweird.f32 %v1688
    %vm1696 = vmor %vm1694, %vm1695
    %v1697 = vsel %vm1696, %v1688, %v1693
    %v1698 = vrsqrt.pop %v1684
    %v1699 = vmul.f32 %v1698, %v1684
    %v1700 = vmul.f32 %v1699, %v1698
    %v1701 = vmul.f32 0.5, %v1700
    %v1702 = vsub.f32 1.5, %v1701
    %v1703 = vmul.f32 %v1698, %v1702
    %vm1704 = vweird.f32 %v1684
    %vm1705 = vweird.f32 %v1698
    %vm1706 = vmor %vm1704, %vm1705
    %v1707 = vsel %vm1706, %v1698, %v1703
    %v1708 = vrsqrt.pop %v1685
    %v1709 = vmul.f32 %v1708, %v1685
    %v1710 = vmul.f32 %v1709, %v1708
    %v1711 = vmul.f32 0.5, %v1710
    %v1712 = vsub.f32 1.5, %v1711
    %v1713 = vmul.f32 %v1708, %v1712
    %vm1714 = vweird.f32 %v1685
    %vm1715 = vweird.f32 %v1708
    %vm1716 = vmor %vm1714, %vm1715
    %v1717 = vsel %vm1716, %v1708, %v1713
    %v1718 = vrsqrt.pop %v1686
    %v1719 = vmul.f32 %v1718, %v1686
    %v1720 = vmul.f32 %v1719, %v1718
    %v1721 = vmul.f32 0.5, %v1720
    %v1722 = vsub.f32 1.5, %v1721
    %v1723 = vmul.f32 %v1718, %v1722
    %vm1724 = vweird.f32 %v1686
    %vm1725 = vweird.f32 %v1718
    %vm1726 = vmor %vm1724, %vm1725
    %v1727 = vsel %vm1726, %v1718, %v1723
    %v1728 = vrsqrt.pop %v1687
    %v1729 = vmul.f32 %v1728, %v1687
    %v1730 = vmul.f32 %v1729, %v1728
    %v1731 = vmul.f32 0.5, %v1730
    %v1732 = vsub.f32 1.5, %v1731
    %v1733 = vmul.f32 %v1728, %v1732
    %vm1734 = vweird.f32 %v1687
    %vm1735 = vweird.f32 %v1728
    %vm1736 = vmor %vm1734, %vm1735
    %v1737 = vsel %vm1736, %v1728, %v1733
    %v1738 = vmul.f32 %v1678, %v1697
    %v1739 = vmul.f32 %v1679, %v1707
    %v1740 = vmul.f32 %v1680, %v1717
    %v1741 = vmul.f32 %v1681, %v1727
    %v1742 = vmul.f32 %v1682, %v1737
    %v1743 = vperm.slane %v1632, 0
    %v1744 = vmul.f32 %v1738, %v1743
    %v1745 = vmul.f32 %v1739, %v1743
    %v1746 = vmul.f32 %v1740, %v1743
    %v1747 = vmul.f32 %v1741, %v1743
    %v1748 = vmul.f32 %v1742, %v1743
    %v1749 = vperm.slane %v1632, 1
    %v1750 = vadd.f32 %v1744, %v1749
    %v1751 = vadd.f32 %v1745, %v1749
    %v1752 = vadd.f32 %v1746, %v1749
    %v1753 = vadd.f32 %v1747, %v1749
    %v1754 = vadd.f32 %v1748, %v1749
    %v1755 = vld [vmem:[%s9] sm:$0xff]
    %v1756 = vld [vmem:[%s9 + $0x8] sm:$0xff]
    %v1757 = vld [vmem:[%s9 + $0x10] sm:$0xff]
    %v1758 = vld [vmem:[%s9 + $0x18] sm:$0xff]
    %v1759 = vld [vmem:[%s9 + $0x20] sm:$0xff]
    %v1760 = vadd.f32 %v1750, %v1755
    %v1761 = vadd.f32 %v1751, %v1756
    %v1762 = vadd.f32 %v1752, %v1757
    %v1763 = vadd.f32 %v1753, %v1758
    %v1764 = vadd.f32 %v1754, %v1759
    %v1765 = vld [vmem:[%s35] sm:$0xff]
    %v1766 = vld [vmem:[%s35 + $0x8] sm:$0xff]
    %v1767 = vld [vmem:[%s35 + $0x10] sm:$0xff]
    %v1768 = vld [vmem:[%s35 + $0x18] sm:$0x3f]
    %v1769 = vld [vmem:[%s41] sm:$0x3]
    %1770 = vadd.xlane.f32.xlu0 %v1765
    %v1771 = vpop.xlane.xlu0 %1770
    %1772 = vadd.xlane.f32.xlu0 %v1766
    %v1773 = vpop.xlane.xlu0 %1772
    %1774 = vadd.xlane.f32.xlu0 %v1767
    %v1775 = vpop.xlane.xlu0 %1774
    %vm1776 = vcmask 1045504
    %v1777 = vsel %vm1776, %v1768, 0.0
    %1778 = vadd.xlane.f32.xlu0 %v1777
    %v1779 = vpop.xlane.xlu0 %1778
    %v1780 = vmul.f32 %v1771, 0.0625
    %v1781 = vmul.f32 %v1773, 0.0625
    %v1782 = vmul.f32 %v1775, 0.0625
    %v1783 = vmul.f32 %v1779, 0.0625
    %v1784 = vmul.f32 %v1765, %v1765
    %v1785 = vmul.f32 %v1766, %v1766
    %v1786 = vmul.f32 %v1767, %v1767
    %v1787 = vmul.f32 %v1768, %v1768
    %1788 = vadd.xlane.f32.xlu0 %v1784
    %v1789 = vpop.xlane.xlu0 %1788
    %1790 = vadd.xlane.f32.xlu0 %v1785
    %v1791 = vpop.xlane.xlu0 %1790
    %1792 = vadd.xlane.f32.xlu0 %v1786
    %v1793 = vpop.xlane.xlu0 %1792
    %v1794 = vsel %vm1776, %v1787, 0.0
    %1795 = vadd.xlane.f32.xlu0 %v1794
    %v1796 = vpop.xlane.xlu0 %1795
    %v1797 = vmul.f32 %v1789, 0.0625
    %v1798 = vmul.f32 %v1791, 0.0625
    %v1799 = vmul.f32 %v1793, 0.0625
    %v1800 = vmul.f32 %v1796, 0.0625
    %v1801 = vmul.f32 %v1780, %v1780
    %v1802 = vmul.f32 %v1781, %v1781
    %v1803 = vmul.f32 %v1782, %v1782
    %v1804 = vmul.f32 %v1783, %v1783
    %v1805 = vsub.f32 %v1797, %v1801
    %v1806 = vsub.f32 %v1798, %v1802
    %v1807 = vsub.f32 %v1799, %v1803
    %v1808 = vsub.f32 %v1800, %v1804
    %v1809 = vsub.f32 %v1765, %v1780
    %v1810 = vsub.f32 %v1766, %v1781
    %v1811 = vsub.f32 %v1767, %v1782
    %v1812 = vsub.f32 %v1768, %v1783
    %v1813 = vadd.f32 %v1805, 1e-05
    %v1814 = vadd.f32 %v1806, 1e-05
    %v1815 = vadd.f32 %v1807, 1e-05
    %v1816 = vadd.f32 %v1808, 1e-05
    %v1817 = vrsqrt.pop %v1813
    %v1818 = vmul.f32 %v1817, %v1813
    %v1819 = vmul.f32 %v1818, %v1817
    %v1820 = vmul.f32 0.5, %v1819
    %v1821 = vsub.f32 1.5, %v1820
    %v1822 = vmul.f32 %v1817, %v1821
    %vm1823 = vweird.f32 %v1813
    %vm1824 = vweird.f32 %v1817
    %vm1825 = vmor %vm1823, %vm1824
    %v1826 = vsel %vm1825, %v1817, %v1822
    %v1827 = vrsqrt.pop %v1814
    %v1828 = vmul.f32 %v1827, %v1814
    %v1829 = vmul.f32 %v1828, %v1827
    %v1830 = vmul.f32 0.5, %v1829
    %v1831 = vsub.f32 1.5, %v1830
    %v1832 = vmul.f32 %v1827, %v1831
    %vm1833 = vweird.f32 %v1814
    %vm1834 = vweird.f32 %v1827
    %vm1835 = vmor %vm1833, %vm1834
    %v1836 = vsel %vm1835, %v1827, %v1832
    %v1837 = vrsqrt.pop %v1815
    %v1838 = vmul.f32 %v1837, %v1815
    %v1839 = vmul.f32 %v1838, %v1837
    %v1840 = vmul.f32 0.5, %v1839
    %v1841 = vsub.f32 1.5, %v1840
    %v1842 = vmul.f32 %v1837, %v1841
    %vm1843 = vweird.f32 %v1815
    %vm1844 = vweird.f32 %v1837
    %vm1845 = vmor %vm1843, %vm1844
    %v1846 = vsel %vm1845, %v1837, %v1842
    %v1847 = vrsqrt.pop %v1816
    %v1848 = vmul.f32 %v1847, %v1816
    %v1849 = vmul.f32 %v1848, %v1847
    %v1850 = vmul.f32 0.5, %v1849
    %v1851 = vsub.f32 1.5, %v1850
    %v1852 = vmul.f32 %v1847, %v1851
    %vm1853 = vweird.f32 %v1816
    %vm1854 = vweird.f32 %v1847
    %vm1855 = vmor %vm1853, %vm1854
    %v1856 = vsel %vm1855, %v1847, %v1852
    %v1857 = vmul.f32 %v1809, %v1826
    %v1858 = vmul.f32 %v1810, %v1836
    %v1859 = vmul.f32 %v1811, %v1846
    %v1860 = vmul.f32 %v1812, %v1856
    %v1861 = vperm.slane %v1769, 0
    %v1862 = vmul.f32 %v1857, %v1861
    %v1863 = vmul.f32 %v1858, %v1861
    %v1864 = vmul.f32 %v1859, %v1861
    %v1865 = vmul.f32 %v1860, %v1861
    %v1866 = vperm.slane %v1769, 1
    %v1867 = vadd.f32 %v1862, %v1866
    %v1868 = vadd.f32 %v1863, %v1866
    %v1869 = vadd.f32 %v1864, %v1866
    %v1870 = vadd.f32 %v1865, %v1866
    %v1871 = vld [vmem:[%s43] sm:$0xff]
    %v1872 = vld [vmem:[%s43 + $0x8] sm:$0xff]
    %v1873 = vld [vmem:[%s43 + $0x10] sm:$0xff]
    %v1874 = vld [vmem:[%s43 + $0x18] sm:$0xff]
    %v1875 = vld [vmem:[%s43 + $0x20] sm:$0xff]
    %v1876 = vld [vmem:[%s43 + $0x28] sm:$0xff]
    %v1877 = vld [vmem:[%s43 + $0x30] sm:$0xff]
    %v1878 = vld [vmem:[%s43 + $0x38] sm:$0xff]
    %v1879 = vld [vmem:[%s43 + $0x40] sm:$0xff]
    %v1880 = vld [vmem:[%s43 + $0x48] sm:$0xff]
    %v1881 = vld [vmem:[%s43 + $0x50] sm:$0xff]
    %v1882 = vld [vmem:[%s43 + $0x58] sm:$0xff]
    %v1883 = vld [vmem:[%s43 + $0x60] sm:$0xff]
    %v1884 = vld [vmem:[%s43 + $0x68] sm:$0xff]
    %v1885 = vld [vmem:[%s43 + $0x70] sm:$0xff]
    %v1886 = vld [vmem:[%s43 + $0x78] sm:$0xff]
    %v1887 = vld [vmem:[%s43 + $0x80] sm:$0xff]
    %v1888 = vld [vmem:[%s43 + $0x88] sm:$0xff]
    %v1889 = vld [vmem:[%s43 + $0x90] sm:$0xff]
    %v1890 = vld [vmem:[%s43 + $0x98] sm:$0xff]
    %v1891 = vld [vmem:[%s43 + $0xa0] sm:$0xff]
    %v1892 = vld [vmem:[%s43 + $0xa8] sm:$0xff]
    %v1893 = vld [vmem:[%s43 + $0xb0] sm:$0xff]
    %v1894 = vld [vmem:[%s43 + $0xb8] sm:$0xff]
    %v1895 = vld [vmem:[%s43 + $0xc0] sm:$0xff]
    %v1896 = vld [vmem:[%s43 + $0xc8] sm:$0xff]
    %v1897 = vld [vmem:[%s43 + $0xd0] sm:$0xff]
    %v1898 = vld [vmem:[%s43 + $0xd8] sm:$0xff]
    %v1899 = vld [vmem:[%s43 + $0xe0] sm:$0xff]
    %v1900 = vld [vmem:[%s43 + $0xe8] sm:$0xff]
    %v1901 = vld [vmem:[%s43 + $0xf0] sm:$0xff]
    %v1902 = vld [vmem:[%s43 + $0xf8] sm:$0xff]
    %v1903 = vld [vmem:[%s43 + $0x100] sm:$0xff]
    %v1904 = vld [vmem:[%s43 + $0x108] sm:$0xff]
    %v1905 = vld [vmem:[%s43 + $0x110] sm:$0xff]
    %v1906 = vld [vmem:[%s43 + $0x118] sm:$0xff]
    %v1907 = vld [vmem:[%s43 + $0x120] sm:$0xff]
    %v1908 = vld [vmem:[%s43 + $0x128] sm:$0xff]
    %v1909 = vld [vmem:[%s43 + $0x130] sm:$0xff]
    %v1910 = vld [vmem:[%s43 + $0x138] sm:$0xff]
    %v1911 = vld [vmem:[%s43 + $0x140] sm:$0xff]
    %v1912 = vld [vmem:[%s43 + $0x148] sm:$0xff]
    %v1913 = vld [vmem:[%s43 + $0x150] sm:$0xff]
    %v1914 = vld [vmem:[%s43 + $0x158] sm:$0xff]
    %v1915 = vld [vmem:[%s43 + $0x160] sm:$0xff]
    %v1916 = vld [vmem:[%s43 + $0x168] sm:$0xff]
    %v1917 = vld [vmem:[%s43 + $0x170] sm:$0xff]
    %v1918 = vld [vmem:[%s43 + $0x178] sm:$0xff]
    %v1919 = vld [vmem:[%s45] sm:$0x7]
    %v1921 = vperm.slane %v1919, 0
    %v1922 = vperm.slane %v1919, 1
    %v1923 = vperm.slane %v1919, 2
    %1927 = vmatpush.msra.mxu0 %v1916
    %1928 = vmatpush.msra.mxu0 %v1913
    %1929 = vmatpush.msra.mxu0 %v1910
    %1930 = vmatpush.msra.mxu0 %v1907
    %1931 = vmatpush.msra.mxu0 %v1904
    %1932 = vmatpush.msra.mxu0 %v1901
    %1933 = vmatpush.msra.mxu0 %v1898
    %1934 = vmatpush.msra.mxu0 %v1895
    %1935 = vmatpush.msra.mxu0 %v1892
    %1936 = vmatpush.msra.mxu0 %v1889
    %1937 = vmatpush.msra.mxu0 %v1886
    %1938 = vmatpush.msra.mxu0 %v1883
    %1939 = vmatpush.msra.mxu0 %v1880
    %1940 = vmatpush.msra.mxu0 %v1877
    %1941 = vmatpush.msra.mxu0 %v1874
    %1942 = vmatpush.msra.mxu0 %v1871
    %1943 = vmatmul.f32.gmra.mxu0 %v1867
    %v1944 = vpop.f32.mrf.mxu0
    %v1945 = vadd.f32 %v1921, %v1944
    %1946 = vmatmul.f32.gmra.mxu0 %v1868
    %v1947 = vpop.f32.mrf.mxu0
    %v1948 = vadd.f32 %v1921, %v1947
    %1949 = vmatmul.f32.gmra.mxu0 %v1869
    %v1950 = vpop.f32.mrf.mxu0
    %v1951 = vadd.f32 %v1921, %v1950
    %1952 = vmatmul.f32.gmra.mxu0 %v1870
    %v1953 = vpop.f32.mrf.mxu0
    %v1954 = vadd.f32 %v1921, %v1953
    %1955 = vdwg.mxu0
    %1956 = vmatpush.msra.mxu0 %v1917
    %1957 = vmatpush.msra.mxu0 %v1914
    %1958 = vmatpush.msra.mxu0 %v1911
    %1959 = vmatpush.msra.mxu0 %v1908
    %1960 = vmatpush.msra.mxu0 %v1905
    %1961 = vmatpush.msra.mxu0 %v1902
    %1962 = vmatpush.msra.mxu0 %v1899
    %1963 = vmatpush.msra.mxu0 %v1896
    %1964 = vmatpush.msra.mxu0 %v1893
    %1965 = vmatpush.msra.mxu0 %v1890
    %1966 = vmatpush.msra.mxu0 %v1887
    %1967 = vmatpush.msra.mxu0 %v1884
    %1968 = vmatpush.msra.mxu0 %v1881
    %1969 = vmatpush.msra.mxu0 %v1878
    %1970 = vmatpush.msra.mxu0 %v1875
    %1971 = vmatpush.msra.mxu0 %v1872
    %1972 = vmatmul.f32.gmra.mxu0 %v1867
    %v1973 = vpop.f32.mrf.mxu0
    %v1974 = vadd.f32 %v1922, %v1973
    %1975 = vmatmul.f32.gmra.mxu0 %v1868
    %v1976 = vpop.f32.mrf.mxu0
    %v1977 = vadd.f32 %v1922, %v1976
    %1978 = vmatmul.f32.gmra.mxu0 %v1869
    %v1979 = vpop.f32.mrf.mxu0
    %v1980 = vadd.f32 %v1922, %v1979
    %1981 = vmatmul.f32.gmra.mxu0 %v1870
    %v1982 = vpop.f32.mrf.mxu0
    %v1983 = vadd.f32 %v1922, %v1982
    %1984 = vdwg.mxu0
    %1985 = vmatpush.msra.mxu0 %v1918
    %1986 = vmatpush.msra.mxu0 %v1915
    %1987 = vmatpush.msra.mxu0 %v1912
    %1988 = vmatpush.msra.mxu0 %v1909
    %1989 = vmatpush.msra.mxu0 %v1906
    %1990 = vmatpush.msra.mxu0 %v1903
    %1991 = vmatpush.msra.mxu0 %v1900
    %1992 = vmatpush.msra.mxu0 %v1897
    %1993 = vmatpush.msra.mxu0 %v1894
    %1994 = vmatpush.msra.mxu0 %v1891
    %1995 = vmatpush.msra.mxu0 %v1888
    %1996 = vmatpush.msra.mxu0 %v1885
    %1997 = vmatpush.msra.mxu0 %v1882
    %1998 = vmatpush.msra.mxu0 %v1879
    %1999 = vmatpush.msra.mxu0 %v1876
    %2000 = vmatpush.msra.mxu0 %v1873
    %2001 = vmatmul.f32.gmra.mxu0 %v1867
    %v2002 = vpop.f32.mrf.mxu0
    %v2003 = vadd.f32 %v1923, %v2002
    %2004 = vmatmul.f32.gmra.mxu0 %v1868
    %v2005 = vpop.f32.mrf.mxu0
    %v2006 = vadd.f32 %v1923, %v2005
    %2007 = vmatmul.f32.gmra.mxu0 %v1869
    %v2008 = vpop.f32.mrf.mxu0
    %v2009 = vadd.f32 %v1923, %v2008
    %2010 = vmatmul.f32.gmra.mxu0 %v1870
    %v2011 = vpop.f32.mrf.mxu0
    %v2012 = vadd.f32 %v1923, %v2011
    %2013 = vdwg.mxu0
    %v2014 = vld [vmem:[%s47] sm:$0xff]
    %v2015 = vld [vmem:[%s47 + $0x8] sm:$0xff]
    %v2016 = vld [vmem:[#allocation8] sm:$0x1]
    %v2017 = vld [vmem:[%s37] sm:$0xff]
    %v2018 = vld [vmem:[%s37 + $0x8] sm:$0xff]
    %v2019 = vld [vmem:[%s37 + $0x10] sm:$0xff]
    %v2020 = vld [vmem:[%s37 + $0x18] sm:$0x3f]
    %vm2021 = vcmask 64512
    %v2023 = vsel %vm2021, %v1945, 0
    %v2026 = vsel %vm2021, %v1948, 0
    %v2029 = vsel %vm2021, %v1951, 0
    %v2032 = vsel %vm2021, %v1954, 0
    %v2035 = vsel %vm2021, %v1974, 0
    %v2038 = vsel %vm2021, %v1977, 0
    %v2041 = vsel %vm2021, %v1980, 0
    %v2044 = vsel %vm2021, %v1983, 0
    %2046 = vmatpush.xpose.msra.mxu0 0.0
    %2047 = vmatpush.xpose.msra.mxu0 0.0
    %2048 = vmatpush.xpose.msra.mxu0 0.0
    %2049 = vmatpush.xpose.msra.mxu0 0.0
    %2050 = vmatpush.xpose.msra.mxu0 0.0
    %2051 = vmatpush.xpose.msra.mxu0 0.0
    %2052 = vmatpush.xpose.msra.mxu0 0.0
    %2053 = vmatpush.xpose.msra.mxu0 0.0
    %2054 = vmatpush.xpose.msra.mxu0 0.0
    %2055 = vmatpush.xpose.msra.mxu0 0.0
    %2056 = vmatpush.xpose.msra.mxu0 0.0
    %2057 = vmatpush.xpose.msra.mxu0 0.0
    %2058 = vmatpush.xpose.msra.mxu0 %v2044
    %2059 = vmatpush.xpose.msra.mxu0 %v2041
    %2060 = vmatpush.xpose.msra.mxu0 %v2038
    %2061 = vmatpush.xpose.msra.mxu0 %v2035
    %2062 = vmatmul.f32.gmra.mxu0 %v2023
    %v2063 = vpop.f32.mrf.mxu0
    %v2064 = vadd.f32 0.0, %v2063
    %2065 = vmatmul.f32.gmra.mxu0 %v2026
    %v2066 = vpop.f32.mrf.mxu0
    %v2067 = vadd.f32 0.0, %v2066
    %2068 = vmatmul.f32.gmra.mxu0 %v2029
    %v2069 = vpop.f32.mrf.mxu0
    %v2070 = vadd.f32 0.0, %v2069
    %2071 = vmatmul.f32.gmra.mxu0 %v2032
    %v2072 = vpop.f32.mrf.mxu0
    %v2073 = vadd.f32 0.0, %v2072
    %2074 = vdwg.mxu0
    %v2075 = vmul.f32 %v2064, 0.35355338
    %v2076 = vmul.f32 %v2067, 0.35355338
    %v2077 = vmul.f32 %v2070, 0.35355338
    %v2078 = vmul.f32 %v2073, 0.35355338
    %v2079 = vadd.f32 %v2075, %v2017
    %v2080 = vadd.f32 %v2076, %v2018
    %v2081 = vadd.f32 %v2077, %v2019
    %v2082 = vadd.f32 %v2078, %v2020
    %vm2083 = vcmask 244736
    %v2084 = vsel %vm2083, %v2079, -inf
    %2085 = vmax.xlane.f32.xlu0 %v2084
    %v2086 = vpop.xlane.xlu0 %2085
    %v2087 = vsel %vm2083, %v2080, -inf
    %2088 = vmax.xlane.f32.xlu0 %v2087
    %v2089 = vpop.xlane.xlu0 %2088
    %v2090 = vsel %vm2083, %v2081, -inf
    %2091 = vmax.xlane.f32.xlu0 %v2090
    %v2092 = vpop.xlane.xlu0 %2091
    %vm2093 = vcmask 242688
    %v2094 = vsel %vm2093, %v2082, -inf
    %2095 = vmax.xlane.f32.xlu0 %v2094
    %v2096 = vpop.xlane.xlu0 %2095
    %v2097 = vsub.f32 %v2079, %v2086
    %v2098 = vsub.f32 %v2080, %v2089
    %v2099 = vsub.f32 %v2081, %v2092
    %v2100 = vsub.f32 %v2082, %v2096
    %v2101 = vmul.f32 %v2097, 1.442695
    %v2102 = vpow.pop %v2101
    %v2103 = vmul.f32 %v2098, 1.442695
    %v2104 = vpow.pop %v2103
    %v2105 = vmul.f32 %v2099, 1.442695
    %v2106 = vpow.pop %v2105
    %v2107 = vmul.f32 %v2100, 1.442695
    %v2108 = vpow.pop %v2107
    %v2109 = vsel %vm2083, %v2102, 0.0
    %2110 = vadd.xlane.f32.xlu0 %v2109
    %v2111 = vpop.xlane.xlu0 %2110
    %v2112 = vsel %vm2083, %v2104, 0.0
    %2113 = vadd.xlane.f32.xlu0 %v2112
    %v2114 = vpop.xlane.xlu0 %2113
    %v2115 = vsel %vm2083, %v2106, 0.0
    %2116 = vadd.xlane.f32.xlu0 %v2115
    %v2117 = vpop.xlane.xlu0 %2116
    %v2118 = vsel %vm2093, %v2108, 0.0
    %2119 = vadd.xlane.f32.xlu0 %v2118
    %v2120 = vpop.xlane.xlu0 %2119
    %v2121 = vrcp.pop %v2111
    %v2122 = vrcp.pop %v2114
    %v2123 = vrcp.pop %v2117
    %v2124 = vrcp.pop %v2120
    %v2125 = vmul.f32 %v2102, %v2121
    %v2126 = vmul.f32 %v2104, %v2122
    %v2127 = vmul.f32 %v2106, %v2123
    %v2128 = vmul.f32 %v2108, %v2124
    %v2130 = vsel %vm2083, %v2125, 0
    %v2133 = vsel %vm2083, %v2126, 0
    %v2136 = vsel %vm2083, %v2127, 0
    %v2139 = vsel %vm2083, %v2128, 0
    %v2142 = vsel %vm1776, %v2012, 0
    %2144 = vmatpush.msra.mxu0 0.0
    %2145 = vmatpush.msra.mxu0 0.0
    %2146 = vmatpush.msra.mxu0 0.0
    %2147 = vmatpush.msra.mxu0 0.0
    %2148 = vmatpush.msra.mxu0 0.0
    %2149 = vmatpush.msra.mxu0 0.0
    %2150 = vmatpush.msra.mxu0 0.0
    %2151 = vmatpush.msra.mxu0 0.0
    %2152 = vmatpush.msra.mxu0 0.0
    %2153 = vmatpush.msra.mxu0 0.0
    %2154 = vmatpush.msra.mxu0 0.0
    %2155 = vmatpush.msra.mxu0 0.0
    %2156 = vmatpush.msra.mxu0 %v2142
    %2157 = vmatpush.msra.mxu0 %v2009
    %2158 = vmatpush.msra.mxu0 %v2006
    %2159 = vmatpush.msra.mxu0 %v2003
    %2160 = vmatmul.f32.gmra.mxu0 %v2130
    %v2161 = vpop.f32.mrf.mxu0
    %v2162 = vadd.f32 0.0, %v2161
    %2163 = vmatmul.f32.gmra.mxu0 %v2133
    %v2164 = vpop.f32.mrf.mxu0
    %v2165 = vadd.f32 0.0, %v2164
    %2166 = vmatmul.f32.gmra.mxu0 %v2136
    %v2167 = vpop.f32.mrf.mxu0
    %v2168 = vadd.f32 0.0, %v2167
    %2169 = vmatmul.f32.gmra.mxu0 %v2139
    %v2170 = vpop.f32.mrf.mxu0
    %v2171 = vadd.f32 0.0, %v2170
    %2172 = vdwg.mxu0
    %2173 = vrot.lane.b32.xlu0 %v1945, 120
    %v2174 = vpop.permute.xlu0 %2173
    %2175 = vrot.lane.b32.xlu0 %v1948, 120
    %v2176 = vpop.permute.xlu0 %2175
    %2177 = vrot.lane.b32.xlu0 %v1951, 120
    %v2178 = vpop.permute.xlu0 %2177
    %2179 = vrot.lane.b32.xlu0 %v1954, 120
    %v2180 = vpop.permute.xlu0 %2179
    %2181 = vrot.lane.b32.xlu0 %v1974, 120
    %v2182 = vpop.permute.xlu0 %2181
    %2183 = vrot.lane.b32.xlu0 %v1977, 120
    %v2184 = vpop.permute.xlu0 %2183
    %2185 = vrot.lane.b32.xlu0 %v1980, 120
    %v2186 = vpop.permute.xlu0 %2185
    %2187 = vrot.lane.b32.xlu0 %v1983, 120
    %v2188 = vpop.permute.xlu0 %2187
    %v2189 = vsel %vm2021, %v2174, 0
    %v2191 = vsel %vm2021, %v2176, 0
    %v2193 = vsel %vm2021, %v2178, 0
    %v2195 = vsel %vm2021, %v2180, 0
    %v2197 = vsel %vm2021, %v2182, 0
    %v2199 = vsel %vm2021, %v2184, 0
    %v2201 = vsel %vm2021, %v2186, 0
    %v2203 = vsel %vm2021, %v2188, 0
    %2205 = vmatpush.xpose.msra.mxu0 0.0
    %2206 = vmatpush.xpose.msra.mxu0 0.0
    %2207 = vmatpush.xpose.msra.mxu0 0.0
    %2208 = vmatpush.xpose.msra.mxu0 0.0
    %2209 = vmatpush.xpose.msra.mxu0 0.0
    %2210 = vmatpush.xpose.msra.mxu0 0.0
    %2211 = vmatpush.xpose.msra.mxu0 0.0
    %2212 = vmatpush.xpose.msra.mxu0 0.0
    %2213 = vmatpush.xpose.msra.mxu0 0.0
    %2214 = vmatpush.xpose.msra.mxu0 0.0
    %2215 = vmatpush.xpose.msra.mxu0 0.0
    %2216 = vmatpush.xpose.msra.mxu0 0.0
    %2217 = vmatpush.xpose.msra.mxu0 %v2203
    %2218 = vmatpush.xpose.msra.mxu0 %v2201
    %2219 = vmatpush.xpose.msra.mxu0 %v2199
    %2220 = vmatpush.xpose.msra.mxu0 %v2197
    %2221 = vmatmul.f32.gmra.mxu0 %v2189
    %v2222 = vpop.f32.mrf.mxu0
    %v2223 = vadd.f32 0.0, %v2222
    %2224 = vmatmul.f32.gmra.mxu0 %v2191
    %v2225 = vpop.f32.mrf.mxu0
    %v2226 = vadd.f32 0.0, %v2225
    %2227 = vmatmul.f32.gmra.mxu0 %v2193
    %v2228 = vpop.f32.mrf.mxu0
    %v2229 = vadd.f32 0.0, %v2228
    %2230 = vmatmul.f32.gmra.mxu0 %v2195
    %v2231 = vpop.f32.mrf.mxu0
    %v2232 = vadd.f32 0.0, %v2231
    %2233 = vdwg.mxu0
    %v2234 = vmul.f32 %v2223, 0.35355338
    %v2235 = vmul.f32 %v2226, 0.35355338
    %v2236 = vmul.f32 %v2229, 0.35355338
    %v2237 = vmul.f32 %v2232, 0.35355338
    %v2238 = vadd.f32 %v2234, %v2017
    %v2239 = vadd.f32 %v2235, %v2018
    %v2240 = vadd.f32 %v2236, %v2019
    %v2241 = vadd.f32 %v2237, %v2020
    %v2242 = vsel %vm2083, %v2238, -inf
    %2243 = vmax.xlane.f32.xlu0 %v2242
    %v2244 = vpop.xlane.xlu0 %2243
    %v2245 = vsel %vm2083, %v2239, -inf
    %2246 = vmax.xlane.f32.xlu0 %v2245
    %v2247 = vpop.xlane.xlu0 %2246
    %v2248 = vsel %vm2083, %v2240, -inf
    %2249 = vmax.xlane.f32.xlu0 %v2248
    %v2250 = vpop.xlane.xlu0 %2249
    %v2251 = vsel %vm2093, %v2241, -inf
    %2252 = vmax.xlane.f32.xlu0 %v2251
    %v2253 = vpop.xlane.xlu0 %2252
    %v2254 = vsub.f32 %v2238, %v2244
    %v2255 = vsub.f32 %v2239, %v2247
    %v2256 = vsub.f32 %v2240, %v2250
    %v2257 = vsub.f32 %v2241, %v2253
    %v2258 = vmul.f32 %v2254, 1.442695
    %v2259 = vpow.pop %v2258
    %v2260 = vmul.f32 %v2255, 1.442695
    %v2261 = vpow.pop %v2260
    %v2262 = vmul.f32 %v2256, 1.442695
    %v2263 = vpow.pop %v2262
    %v2264 = vmul.f32 %v2257, 1.442695
    %v2265 = vpow.pop %v2264
    %v2266 = vsel %vm2083, %v2259, 0.0
    %2267 = vadd.xlane.f32.xlu0 %v2266
    %v2268 = vpop.xlane.xlu0 %2267
    %v2269 = vsel %vm2083, %v2261, 0.0
    %2270 = vadd.xlane.f32.xlu0 %v2269
    %v2271 = vpop.xlane.xlu0 %2270
    %v2272 = vsel %vm2083, %v2263, 0.0
    %2273 = vadd.xlane.f32.xlu0 %v2272
    %v2274 = vpop.xlane.xlu0 %2273
    %v2275 = vsel %vm2093, %v2265, 0.0
    %2276 = vadd.xlane.f32.xlu0 %v2275
    %v2277 = vpop.xlane.xlu0 %2276
    %v2278 = vrcp.pop %v2268
    %v2279 = vrcp.pop %v2271
    %v2280 = vrcp.pop %v2274
    %v2281 = vrcp.pop %v2277
    %v2282 = vmul.f32 %v2259, %v2278
    %v2283 = vmul.f32 %v2261, %v2279
    %v2284 = vmul.f32 %v2263, %v2280
    %v2285 = vmul.f32 %v2265, %v2281
    %2289 = vrot.lane.b32.xlu0 %v2003, 120
    %v2290 = vpop.permute.xlu0 %2289
    %2291 = vrot.lane.b32.xlu0 %v2006, 120
    %v2292 = vpop.permute.xlu0 %2291
    %2293 = vrot.lane.b32.xlu0 %v2009, 120
    %v2294 = vpop.permute.xlu0 %2293
    %2295 = vrot.lane.b32.xlu0 %v2012, 120
    %v2296 = vpop.permute.xlu0 %2295
    %v2301 = vsel %vm2083, %v2282, 0
    %v2304 = vsel %vm2083, %v2283, 0
    %v2307 = vsel %vm2083, %v2284, 0
    %v2310 = vsel %vm2083, %v2285, 0
    %v2312 = vsel %vm1776, %v2296, 0
    %2314 = vmatpush.msra.mxu0 0.0
    %2315 = vmatpush.msra.mxu0 0.0
    %2316 = vmatpush.msra.mxu0 0.0
    %2317 = vmatpush.msra.mxu0 0.0
    %2318 = vmatpush.msra.mxu0 0.0
    %2319 = vmatpush.msra.mxu0 0.0
    %2320 = vmatpush.msra.mxu0 0.0
    %2321 = vmatpush.msra.mxu0 0.0
    %2322 = vmatpush.msra.mxu0 0.0
    %2323 = vmatpush.msra.mxu0 0.0
    %2324 = vmatpush.msra.mxu0 0.0
    %2325 = vmatpush.msra.mxu0 0.0
    %2326 = vmatpush.msra.mxu0 %v2312
    %2327 = vmatpush.msra.mxu0 %v2294
    %2328 = vmatpush.msra.mxu0 %v2292
    %2329 = vmatpush.msra.mxu0 %v2290
    %2330 = vmatmul.f32.gmra.mxu0 %v2301
    %v2331 = vpop.f32.mrf.mxu0
    %v2332 = vadd.f32 0.0, %v2331
    %2333 = vmatmul.f32.gmra.mxu0 %v2304
    %v2334 = vpop.f32.mrf.mxu0
    %v2335 = vadd.f32 0.0, %v2334
    %2336 = vmatmul.f32.gmra.mxu0 %v2307
    %v2337 = vpop.f32.mrf.mxu0
    %v2338 = vadd.f32 0.0, %v2337
    %2339 = vmatmul.f32.gmra.mxu0 %v2310
    %v2340 = vpop.f32.mrf.mxu0
    %v2341 = vadd.f32 0.0, %v2340
    %2342 = vdwg.mxu0
    %2347 = vrot.lane.b32.xlu0 %v2332, 8
    %v2348 = vpop.permute.xlu0 %2347
    %2349 = vrot.lane.b32.xlu0 %v2335, 8
    %v2350 = vpop.permute.xlu0 %2349
    %2351 = vrot.lane.b32.xlu0 %v2338, 8
    %v2352 = vpop.permute.xlu0 %2351
    %2353 = vrot.lane.b32.xlu0 %v2341, 8
    %v2354 = vpop.permute.xlu0 %2353
    %v2359 = vsel %vm2021, %v2162, %v2348
    %v2360 = vsel %vm2021, %v2165, %v2350
    %v2361 = vsel %vm2021, %v2168, %v2352
    %v2362 = vsel %vm2021, %v2171, %v2354
    %v2364 = vperm.slane %v2016, 0
    %v2367 = vsel %vm894, %v2359, 0
    %v2370 = vsel %vm894, %v2360, 0
    %v2373 = vsel %vm894, %v2361, 0
    %v2376 = vsel %vm894, %v2362, 0
    %2378 = vmatpush.msra.mxu0 0.0
    %2379 = vmatpush.msra.mxu0 0.0
    %2380 = vmatpush.msra.mxu0 0.0
    %2381 = vmatpush.msra.mxu0 0.0
    %2382 = vmatpush.msra.mxu0 0.0
    %2383 = vmatpush.msra.mxu0 0.0
    %2384 = vmatpush.msra.mxu0 0.0
    %2385 = vmatpush.msra.mxu0 0.0
    %2386 = vmatpush.msra.mxu0 0.0
    %2387 = vmatpush.msra.mxu0 0.0
    %2388 = vmatpush.msra.mxu0 0.0
    %2389 = vmatpush.msra.mxu0 0.0
    %2390 = vmatpush.msra.mxu0 0.0
    %2391 = vmatpush.msra.mxu0 0.0
    %2392 = vmatpush.msra.mxu0 %v2015
    %2393 = vmatpush.msra.mxu0 %v2014
    %2394 = vmatmul.f32.gmra.mxu0 %v2367
    %v2395 = vpop.f32.mrf.mxu0
    %v2396 = vadd.f32 %v2364, %v2395
    %2397 = vmatmul.f32.gmra.mxu0 %v2370
    %v2398 = vpop.f32.mrf.mxu0
    %v2399 = vadd.f32 %v2364, %v2398
    %2400 = vmatmul.f32.gmra.mxu0 %v2373
    %v2401 = vpop.f32.mrf.mxu0
    %v2402 = vadd.f32 %v2364, %v2401
    %2403 = vmatmul.f32.gmra.mxu0 %v2376
    %v2404 = vpop.f32.mrf.mxu0
    %2405 = vdwg.mxu0
    %v2406 = vadd.f32 %v1867, %v2396
    %v2407 = vadd.f32 %v1868, %v2399
    %v2408 = vadd.f32 %v1869, %v2402
    %v2409 = vld [vmem:[#allocation10] sm:$0x3]
    %2410 = vadd.xlane.f32.xlu0 %v2406
    %v2411 = vpop.xlane.xlu0 %2410
    %2412 = vadd.xlane.f32.xlu0 %v2407
    %v2413 = vpop.xlane.xlu0 %2412
    %2414 = vadd.xlane.f32.xlu0 %v2408
    %v2415 = vpop.xlane.xlu0 %2414
    %v2416 = vmul.f32 %v2411, 0.0625
    %v2417 = vmul.f32 %v2413, 0.0625
    %v2418 = vmul.f32 %v2415, 0.0625
    %v2419 = vmul.f32 %v2406, %v2406
    %v2420 = vmul.f32 %v2407, %v2407
    %v2421 = vmul.f32 %v2408, %v2408
    %2422 = vadd.xlane.f32.xlu0 %v2419
    %v2423 = vpop.xlane.xlu0 %2422
    %2424 = vadd.xlane.f32.xlu0 %v2420
    %v2425 = vpop.xlane.xlu0 %2424
    %2426 = vadd.xlane.f32.xlu0 %v2421
    %v2427 = vpop.xlane.xlu0 %2426
    %v2428 = vmul.f32 %v2423, 0.0625
    %v2429 = vmul.f32 %v2425, 0.0625
    %v2430 = vmul.f32 %v2427, 0.0625
    %v2431 = vmul.f32 %v2416, %v2416
    %v2432 = vmul.f32 %v2417, %v2417
    %v2433 = vmul.f32 %v2418, %v2418
    %v2434 = vsub.f32 %v2428, %v2431
    %v2435 = vsub.f32 %v2429, %v2432
    %v2436 = vsub.f32 %v2430, %v2433
    %v2437 = vsub.f32 %v2406, %v2416
    %v2438 = vsub.f32 %v2407, %v2417
    %v2439 = vsub.f32 %v2408, %v2418
    %v2440 = vadd.f32 %v2434, 1e-05
    %v2441 = vadd.f32 %v2435, 1e-05
    %v2442 = vadd.f32 %v2436, 1e-05
    %v2443 = vrsqrt.pop %v2440
    %v2444 = vmul.f32 %v2443, %v2440
    %v2445 = vmul.f32 %v2444, %v2443
    %v2446 = vmul.f32 0.5, %v2445
    %v2447 = vsub.f32 1.5, %v2446
    %v2448 = vmul.f32 %v2443, %v2447
    %vm2449 = vweird.f32 %v2440
    %vm2450 = vweird.f32 %v2443
    %vm2451 = vmor %vm2449, %vm2450
    %v2452 = vsel %vm2451, %v2443, %v2448
    %v2453 = vrsqrt.pop %v2441
    %v2454 = vmul.f32 %v2453, %v2441
    %v2455 = vmul.f32 %v2454, %v2453
    %v2456 = vmul.f32 0.5, %v2455
    %v2457 = vsub.f32 1.5, %v2456
    %v2458 = vmul.f32 %v2453, %v2457
    %vm2459 = vweird.f32 %v2441
    %vm2460 = vweird.f32 %v2453
    %vm2461 = vmor %vm2459, %vm2460
    %v2462 = vsel %vm2461, %v2453, %v2458
    %v2463 = vrsqrt.pop %v2442
    %v2464 = vmul.f32 %v2463, %v2442
    %v2465 = vmul.f32 %v2464, %v2463
    %v2466 = vmul.f32 0.5, %v2465
    %v2467 = vsub.f32 1.5, %v2466
    %v2468 = vmul.f32 %v2463, %v2467
    %vm2469 = vweird.f32 %v2442
    %vm2470 = vweird.f32 %v2463
    %vm2471 = vmor %vm2469, %vm2470
    %v2472 = vsel %vm2471, %v2463, %v2468
    %v2473 = vmul.f32 %v2437, %v2452
    %v2474 = vmul.f32 %v2438, %v2462
    %v2475 = vmul.f32 %v2439, %v2472
    %v2476 = vperm.slane %v2409, 0
    %v2477 = vmul.f32 %v2473, %v2476
    %v2478 = vmul.f32 %v2474, %v2476
    %v2479 = vmul.f32 %v2475, %v2476
    %v2480 = vperm.slane %v2409, 1
    %v2481 = vadd.f32 %v2477, %v2480
    %v2482 = vadd.f32 %v2478, %v2480
    %v2483 = vadd.f32 %v2479, %v2480
    %v2484 = vld [vmem:[%s53] sm:$0xff]
    %v2485 = vld [vmem:[%s53 + $0x8] sm:$0xff]
    %v2486 = vld [vmem:[%s53 + $0x10] sm:$0xff]
    %v2487 = vld [vmem:[%s53 + $0x18] sm:$0xff]
    %v2488 = vld [vmem:[%s53 + $0x20] sm:$0xff]
    %v2489 = vld [vmem:[%s53 + $0x28] sm:$0xff]
    %v2490 = vld [vmem:[%s53 + $0x30] sm:$0xff]
    %v2491 = vld [vmem:[%s53 + $0x38] sm:$0xff]
    %v2492 = vld [vmem:[%s53 + $0x40] sm:$0xff]
    %v2493 = vld [vmem:[%s53 + $0x48] sm:$0xff]
    %v2494 = vld [vmem:[%s53 + $0x50] sm:$0xff]
    %v2495 = vld [vmem:[%s53 + $0x58] sm:$0xff]
    %v2496 = vld [vmem:[%s53 + $0x60] sm:$0xff]
    %v2497 = vld [vmem:[%s53 + $0x68] sm:$0xff]
    %v2498 = vld [vmem:[%s53 + $0x70] sm:$0xff]
    %v2499 = vld [vmem:[%s53 + $0x78] sm:$0xff]
    %v2500 = vld [vmem:[#allocation11] sm:$0x1]
    %v2502 = vperm.slane %v2500, 0
    %2504 = vmatpush.msra.mxu0 %v2499
    %2505 = vmatpush.msra.mxu0 %v2498
    %2506 = vmatpush.msra.mxu0 %v2497
    %2507 = vmatpush.msra.mxu0 %v2496
    %2508 = vmatpush.msra.mxu0 %v2495
    %2509 = vmatpush.msra.mxu0 %v2494
    %2510 = vmatpush.msra.mxu0 %v2493
    %2511 = vmatpush.msra.mxu0 %v2492
    %2512 = vmatpush.msra.mxu0 %v2491
    %2513 = vmatpush.msra.mxu0 %v2490
    %2514 = vmatpush.msra.mxu0 %v2489
    %2515 = vmatpush.msra.mxu0 %v2488
    %2516 = vmatpush.msra.mxu0 %v2487
    %2517 = vmatpush.msra.mxu0 %v2486
    %2518 = vmatpush.msra.mxu0 %v2485
    %2519 = vmatpush.msra.mxu0 %v2484
    %2520 = vmatmul.f32.gmra.mxu0 %v2481
    %v2521 = vpop.f32.mrf.mxu0
    %v2522 = vadd.f32 %v2502, %v2521
    %2523 = vmatmul.f32.gmra.mxu0 %v2482
    %v2524 = vpop.f32.mrf.mxu0
    %v2525 = vadd.f32 %v2502, %v2524
    %2526 = vmatmul.f32.gmra.mxu0 %v2483
    %v2527 = vpop.f32.mrf.mxu0
    %v2528 = vadd.f32 %v2502, %v2527
    %2529 = vdwg.mxu0
    %v2530 = vld [vmem:[%s57] sm:$0xff]
    %v2531 = vld [vmem:[%s57 + $0x8] sm:$0xff]
    %v2532 = vld [vmem:[%s57 + $0x10] sm:$0xff]
    %v2533 = vld [vmem:[%s57 + $0x18] sm:$0xff]
    %v2534 = vld [vmem:[%s57 + $0x20] sm:$0xff]
    %v2535 = vld [vmem:[%s57 + $0x28] sm:$0xff]
    %v2536 = vld [vmem:[%s57 + $0x30] sm:$0xff]
    %v2537 = vld [vmem:[%s57 + $0x38] sm:$0xff]
    %v2538 = vld [vmem:[%s57 + $0x40] sm:$0xff]
    %v2539 = vld [vmem:[%s57 + $0x48] sm:$0xff]
    %v2540 = vld [vmem:[%s57 + $0x50] sm:$0xff]
    %v2541 = vld [vmem:[%s57 + $0x58] sm:$0xff]
    %v2542 = vld [vmem:[%s57 + $0x60] sm:$0xff]
    %v2543 = vld [vmem:[%s57 + $0x68] sm:$0xff]
    %v2544 = vld [vmem:[%s57 + $0x70] sm:$0xff]
    %v2545 = vld [vmem:[%s57 + $0x78] sm:$0xff]
    %v2546 = vld [vmem:[%s57 + $0x80] sm:$0xff]
    %v2547 = vld [vmem:[%s57 + $0x88] sm:$0xff]
    %v2548 = vld [vmem:[%s57 + $0x90] sm:$0xff]
    %v2549 = vld [vmem:[%s57 + $0x98] sm:$0xff]
    %v2550 = vld [vmem:[%s57 + $0xa0] sm:$0xff]
    %v2551 = vld [vmem:[%s57 + $0xa8] sm:$0xff]
    %v2552 = vld [vmem:[%s57 + $0xb0] sm:$0xff]
    %v2553 = vld [vmem:[%s57 + $0xb8] sm:$0xff]
    %v2554 = vld [vmem:[%s57 + $0xc0] sm:$0xff]
    %v2555 = vld [vmem:[%s57 + $0xc8] sm:$0xff]
    %v2556 = vld [vmem:[%s57 + $0xd0] sm:$0xff]
    %v2557 = vld [vmem:[%s57 + $0xd8] sm:$0xff]
    %v2558 = vld [vmem:[%s57 + $0xe0] sm:$0xff]
    %v2559 = vld [vmem:[%s57 + $0xe8] sm:$0xff]
    %v2560 = vld [vmem:[%s57 + $0xf0] sm:$0xff]
    %v2561 = vld [vmem:[%s57 + $0xf8] sm:$0xff]
    %v2562 = vld [vmem:[#allocation13] sm:$0x3]
    %v2564 = vperm.slane %v2562, 0
    %v2565 = vperm.slane %v2562, 1
    %2568 = vmatpush.msra.mxu0 %v2560
    %2569 = vmatpush.msra.mxu0 %v2558
    %2570 = vmatpush.msra.mxu0 %v2556
    %2571 = vmatpush.msra.mxu0 %v2554
    %2572 = vmatpush.msra.mxu0 %v2552
    %2573 = vmatpush.msra.mxu0 %v2550
    %2574 = vmatpush.msra.mxu0 %v2548
    %2575 = vmatpush.msra.mxu0 %v2546
    %2576 = vmatpush.msra.mxu0 %v2544
    %2577 = vmatpush.msra.mxu0 %v2542
    %2578 = vmatpush.msra.mxu0 %v2540
    %2579 = vmatpush.msra.mxu0 %v2538
    %2580 = vmatpush.msra.mxu0 %v2536
    %2581 = vmatpush.msra.mxu0 %v2534
    %2582 = vmatpush.msra.mxu0 %v2532
    %2583 = vmatpush.msra.mxu0 %v2530
    %2584 = vmatmul.f32.gmra.mxu0 %v1760
    %v2585 = vpop.f32.mrf.mxu0
    %v2586 = vadd.f32 %v2564, %v2585
    %2587 = vmatmul.f32.gmra.mxu0 %v1761
    %v2588 = vpop.f32.mrf.mxu0
    %v2589 = vadd.f32 %v2564, %v2588
    %2590 = vmatmul.f32.gmra.mxu0 %v1762
    %v2591 = vpop.f32.mrf.mxu0
    %v2592 = vadd.f32 %v2564, %v2591
    %2593 = vmatmul.f32.gmra.mxu0 %v1763
    %v2594 = vpop.f32.mrf.mxu0
    %v2595 = vadd.f32 %v2564, %v2594
    %2596 = vmatmul.f32.gmra.mxu0 %v1764
    %v2597 = vpop.f32.mrf.mxu0
    %v2598 = vadd.f32 %v2564, %v2597
    %2599 = vdwg.mxu0
    %2600 = vmatpush.msra.mxu0 %v2561
    %2601 = vmatpush.msra.mxu0 %v2559
    %2602 = vmatpush.msra.mxu0 %v2557
    %2603 = vmatpush.msra.mxu0 %v2555
    %2604 = vmatpush.msra.mxu0 %v2553
    %2605 = vmatpush.msra.mxu0 %v2551
    %2606 = vmatpush.msra.mxu0 %v2549
    %2607 = vmatpush.msra.mxu0 %v2547
    %2608 = vmatpush.msra.mxu0 %v2545
    %2609 = vmatpush.msra.mxu0 %v2543
    %2610 = vmatpush.msra.mxu0 %v2541
    %2611 = vmatpush.msra.mxu0 %v2539
    %2612 = vmatpush.msra.mxu0 %v2537
    %2613 = vmatpush.msra.mxu0 %v2535
    %2614 = vmatpush.msra.mxu0 %v2533
    %2615 = vmatpush.msra.mxu0 %v2531
    %2616 = vmatmul.f32.gmra.mxu0 %v1760
    %v2617 = vpop.f32.mrf.mxu0
    %v2618 = vadd.f32 %v2565, %v2617
    %2619 = vmatmul.f32.gmra.mxu0 %v1761
    %v2620 = vpop.f32.mrf.mxu0
    %v2621 = vadd.f32 %v2565, %v2620
    %2622 = vmatmul.f32.gmra.mxu0 %v1762
    %v2623 = vpop.f32.mrf.mxu0
    %v2624 = vadd.f32 %v2565, %v2623
    %2625 = vmatmul.f32.gmra.mxu0 %v1763
    %v2626 = vpop.f32.mrf.mxu0
    %v2627 = vadd.f32 %v2565, %v2626
    %2628 = vmatmul.f32.gmra.mxu0 %v1764
    %v2629 = vpop.f32.mrf.mxu0
    %v2630 = vadd.f32 %v2565, %v2629
    %2631 = vdwg.mxu0
    %v2632 = vld [vmem:[%s61] sm:$0xff]
    %v2633 = vld [vmem:[%s61 + $0x8] sm:$0xff]
    %v2634 = vld [vmem:[#allocation14] sm:$0x1]
    %v2635 = vld [vmem:[%s39] sm:$0xff]
    %v2636 = vld [vmem:[%s39 + $0x8] sm:$0xff]
    %v2637 = vld [vmem:[%s39 + $0x10] sm:$0x3]
    %v2639 = vsel %vm2021, %v2522, 0
    %v2642 = vsel %vm2021, %v2525, 0
    %v2645 = vsel %vm2021, %v2528, 0
    %v2648 = vsel %vm2021, %v2586, 0
    %v2651 = vsel %vm2021, %v2589, 0
    %v2654 = vsel %vm2021, %v2592, 0
    %v2657 = vsel %vm2021, %v2595, 0
    %v2660 = vsel %vm2021, %v2598, 0
    %2662 = vmatpush.xpose.msra.mxu0 0.0
    %2663 = vmatpush.xpose.msra.mxu0 0.0
    %2664 = vmatpush.xpose.msra.mxu0 0.0
    %2665 = vmatpush.xpose.msra.mxu0 0.0
    %2666 = vmatpush.xpose.msra.mxu0 0.0
    %2667 = vmatpush.xpose.msra.mxu0 0.0
    %2668 = vmatpush.xpose.msra.mxu0 0.0
    %2669 = vmatpush.xpose.msra.mxu0 0.0
    %2670 = vmatpush.xpose.msra.mxu0 0.0
    %2671 = vmatpush.xpose.msra.mxu0 0.0
    %2672 = vmatpush.xpose.msra.mxu0 0.0
    %2673 = vmatpush.xpose.msra.mxu0 %v2660
    %2674 = vmatpush.xpose.msra.mxu0 %v2657
    %2675 = vmatpush.xpose.msra.mxu0 %v2654
    %2676 = vmatpush.xpose.msra.mxu0 %v2651
    %2677 = vmatpush.xpose.msra.mxu0 %v2648
    %2678 = vmatmul.f32.gmra.mxu0 %v2639
    %v2679 = vpop.f32.mrf.mxu0
    %v2680 = vadd.f32 0.0, %v2679
    %2681 = vmatmul.f32.gmra.mxu0 %v2642
    %v2682 = vpop.f32.mrf.mxu0
    %v2683 = vadd.f32 0.0, %v2682
    %2684 = vmatmul.f32.gmra.mxu0 %v2645
    %v2685 = vpop.f32.mrf.mxu0
    %v2686 = vadd.f32 0.0, %v2685
    %2687 = vdwg.mxu0
    %v2688 = vmul.f32 %v2680, 0.35355338
    %v2689 = vmul.f32 %v2683, 0.35355338
    %v2690 = vmul.f32 %v2686, 0.35355338
    %v2691 = vadd.f32 %v2688, %v2635
    %v2692 = vadd.f32 %v2689, %v2636
    %v2693 = vadd.f32 %v2690, %v2637
    %v2694 = vsel %vm967, %v2691, -inf
    %2695 = vmax.xlane.f32.xlu0 %v2694
    %v2696 = vpop.xlane.xlu0 %2695
    %v2697 = vsel %vm967, %v2692, -inf
    %2698 = vmax.xlane.f32.xlu0 %v2697
    %v2699 = vpop.xlane.xlu0 %2698
    %vm2700 = vcmask 320512
    %v2701 = vsel %vm2700, %v2693, -inf
    %2702 = vmax.xlane.f32.xlu0 %v2701
    %v2703 = vpop.xlane.xlu0 %2702
    %v2704 = vsub.f32 %v2691, %v2696
    %v2705 = vsub.f32 %v2692, %v2699
    %v2706 = vsub.f32 %v2693, %v2703
    %v2707 = vmul.f32 %v2704, 1.442695
    %v2708 = vpow.pop %v2707
    %v2709 = vmul.f32 %v2705, 1.442695
    %v2710 = vpow.pop %v2709
    %v2711 = vmul.f32 %v2706, 1.442695
    %v2712 = vpow.pop %v2711
    %v2713 = vsel %vm967, %v2708, 0.0
    %2714 = vadd.xlane.f32.xlu0 %v2713
    %v2715 = vpop.xlane.xlu0 %2714
    %v2716 = vsel %vm967, %v2710, 0.0
    %2717 = vadd.xlane.f32.xlu0 %v2716
    %v2718 = vpop.xlane.xlu0 %2717
    %v2719 = vsel %vm2700, %v2712, 0.0
    %2720 = vadd.xlane.f32.xlu0 %v2719
    %v2721 = vpop.xlane.xlu0 %2720
    %v2722 = vrcp.pop %v2715
    %v2723 = vrcp.pop %v2718
    %v2724 = vrcp.pop %v2721
    %v2725 = vmul.f32 %v2708, %v2722
    %v2726 = vmul.f32 %v2710, %v2723
    %v2727 = vmul.f32 %v2712, %v2724
    %v2729 = vsel %vm967, %v2725, 0
    %v2732 = vsel %vm967, %v2726, 0
    %v2735 = vsel %vm967, %v2727, 0
    %2737 = vmatpush.msra.mxu0 0.0
    %2738 = vmatpush.msra.mxu0 0.0
    %2739 = vmatpush.msra.mxu0 0.0
    %2740 = vmatpush.msra.mxu0 0.0
    %2741 = vmatpush.msra.mxu0 0.0
    %2742 = vmatpush.msra.mxu0 0.0
    %2743 = vmatpush.msra.mxu0 0.0
    %2744 = vmatpush.msra.mxu0 0.0
    %2745 = vmatpush.msra.mxu0 0.0
    %2746 = vmatpush.msra.mxu0 0.0
    %2747 = vmatpush.msra.mxu0 0.0
    %2748 = vmatpush.msra.mxu0 %v2630
    %2749 = vmatpush.msra.mxu0 %v2627
    %2750 = vmatpush.msra.mxu0 %v2624
    %2751 = vmatpush.msra.mxu0 %v2621
    %2752 = vmatpush.msra.mxu0 %v2618
    %2753 = vmatmul.f32.gmra.mxu0 %v2729
    %v2754 = vpop.f32.mrf.mxu0
    %v2755 = vadd.f32 0.0, %v2754
    %2756 = vmatmul.f32.gmra.mxu0 %v2732
    %v2757 = vpop.f32.mrf.mxu0
    %v2758 = vadd.f32 0.0, %v2757
    %2759 = vmatmul.f32.gmra.mxu0 %v2735
    %v2760 = vpop.f32.mrf.mxu0
    %v2761 = vadd.f32 0.0, %v2760
    %2762 = vdwg.mxu0
    %2763 = vrot.lane.b32.xlu0 %v2522, 120
    %v2764 = vpop.permute.xlu0 %2763
    %2765 = vrot.lane.b32.xlu0 %v2525, 120
    %v2766 = vpop.permute.xlu0 %2765
    %2767 = vrot.lane.b32.xlu0 %v2528, 120
    %v2768 = vpop.permute.xlu0 %2767
    %2769 = vrot.lane.b32.xlu0 %v2586, 120
    %v2770 = vpop.permute.xlu0 %2769
    %2771 = vrot.lane.b32.xlu0 %v2589, 120
    %v2772 = vpop.permute.xlu0 %2771
    %2773 = vrot.lane.b32.xlu0 %v2592, 120
    %v2774 = vpop.permute.xlu0 %2773
    %2775 = vrot.lane.b32.xlu0 %v2595, 120
    %v2776 = vpop.permute.xlu0 %2775
    %2777 = vrot.lane.b32.xlu0 %v2598, 120
    %v2778 = vpop.permute.xlu0 %2777
    %v2779 = vsel %vm2021, %v2764, 0
    %v2781 = vsel %vm2021, %v2766, 0
    %v2783 = vsel %vm2021, %v2768, 0
    %v2785 = vsel %vm2021, %v2770, 0
    %v2787 = vsel %vm2021, %v2772, 0
    %v2789 = vsel %vm2021, %v2774, 0
    %v2791 = vsel %vm2021, %v2776, 0
    %v2793 = vsel %vm2021, %v2778, 0
    %2795 = vmatpush.xpose.msra.mxu0 0.0
    %2796 = vmatpush.xpose.msra.mxu0 0.0
    %2797 = vmatpush.xpose.msra.mxu0 0.0
    %2798 = vmatpush.xpose.msra.mxu0 0.0
    %2799 = vmatpush.xpose.msra.mxu0 0.0
    %2800 = vmatpush.xpose.msra.mxu0 0.0
    %2801 = vmatpush.xpose.msra.mxu0 0.0
    %2802 = vmatpush.xpose.msra.mxu0 0.0
    %2803 = vmatpush.xpose.msra.mxu0 0.0
    %2804 = vmatpush.xpose.msra.mxu0 0.0
    %2805 = vmatpush.xpose.msra.mxu0 0.0
    %2806 = vmatpush.xpose.msra.mxu0 %v2793
    %2807 = vmatpush.xpose.msra.mxu0 %v2791
    %2808 = vmatpush.xpose.msra.mxu0 %v2789
    %2809 = vmatpush.xpose.msra.mxu0 %v2787
    %2810 = vmatpush.xpose.msra.mxu0 %v2785
    %2811 = vmatmul.f32.gmra.mxu0 %v2779
    %v2812 = vpop.f32.mrf.mxu0
    %v2813 = vadd.f32 0.0, %v2812
    %2814 = vmatmul.f32.gmra.mxu0 %v2781
    %v2815 = vpop.f32.mrf.mxu0
    %v2816 = vadd.f32 0.0, %v2815
    %2817 = vmatmul.f32.gmra.mxu0 %v2783
    %v2818 = vpop.f32.mrf.mxu0
    %v2819 = vadd.f32 0.0, %v2818
    %2820 = vdwg.mxu0
    %v2821 = vmul.f32 %v2813, 0.35355338
    %v2822 = vmul.f32 %v2816, 0.35355338
    %v2823 = vmul.f32 %v2819, 0.35355338
    %v2824 = vadd.f32 %v2821, %v2635
    %v2825 = vadd.f32 %v2822, %v2636
    %v2826 = vadd.f32 %v2823, %v2637
    %v2827 = vsel %vm967, %v2824, -inf
    %2828 = vmax.xlane.f32.xlu0 %v2827
    %v2829 = vpop.xlane.xlu0 %2828
    %v2830 = vsel %vm967, %v2825, -inf
    %2831 = vmax.xlane.f32.xlu0 %v2830
    %v2832 = vpop.xlane.xlu0 %2831
    %v2833 = vsel %vm2700, %v2826, -inf
    %2834 = vmax.xlane.f32.xlu0 %v2833
    %v2835 = vpop.xlane.xlu0 %2834
    %v2836 = vsub.f32 %v2824, %v2829
    %v2837 = vsub.f32 %v2825, %v2832
    %v2838 = vsub.f32 %v2826, %v2835
    %v2839 = vmul.f32 %v2836, 1.442695
    %v2840 = vpow.pop %v2839
    %v2841 = vmul.f32 %v2837, 1.442695
    %v2842 = vpow.pop %v2841
    %v2843 = vmul.f32 %v2838, 1.442695
    %v2844 = vpow.pop %v2843
    %v2845 = vsel %vm967, %v2840, 0.0
    %2846 = vadd.xlane.f32.xlu0 %v2845
    %v2847 = vpop.xlane.xlu0 %2846
    %v2848 = vsel %vm967, %v2842, 0.0
    %2849 = vadd.xlane.f32.xlu0 %v2848
    %v2850 = vpop.xlane.xlu0 %2849
    %v2851 = vsel %vm2700, %v2844, 0.0
    %2852 = vadd.xlane.f32.xlu0 %v2851
    %v2853 = vpop.xlane.xlu0 %2852
    %v2854 = vrcp.pop %v2847
    %v2855 = vrcp.pop %v2850
    %v2856 = vrcp.pop %v2853
    %v2857 = vmul.f32 %v2840, %v2854
    %v2858 = vmul.f32 %v2842, %v2855
    %v2859 = vmul.f32 %v2844, %v2856
    %2865 = vrot.lane.b32.xlu0 %v2618, 120
    %v2866 = vpop.permute.xlu0 %2865
    %2867 = vrot.lane.b32.xlu0 %v2621, 120
    %v2868 = vpop.permute.xlu0 %2867
    %2869 = vrot.lane.b32.xlu0 %v2624, 120
    %v2870 = vpop.permute.xlu0 %2869
    %2871 = vrot.lane.b32.xlu0 %v2627, 120
    %v2872 = vpop.permute.xlu0 %2871
    %2873 = vrot.lane.b32.xlu0 %v2630, 120
    %v2874 = vpop.permute.xlu0 %2873
    %v2881 = vsel %vm967, %v2857, 0
    %v2884 = vsel %vm967, %v2858, 0
    %v2887 = vsel %vm967, %v2859, 0
    %2889 = vmatpush.msra.mxu0 0.0
    %2890 = vmatpush.msra.mxu0 0.0
    %2891 = vmatpush.msra.mxu0 0.0
    %2892 = vmatpush.msra.mxu0 0.0
    %2893 = vmatpush.msra.mxu0 0.0
    %2894 = vmatpush.msra.mxu0 0.0
    %2895 = vmatpush.msra.mxu0 0.0
    %2896 = vmatpush.msra.mxu0 0.0
    %2897 = vmatpush.msra.mxu0 0.0
    %2898 = vmatpush.msra.mxu0 0.0
    %2899 = vmatpush.msra.mxu0 0.0
    %2900 = vmatpush.msra.mxu0 %v2874
    %2901 = vmatpush.msra.mxu0 %v2872
    %2902 = vmatpush.msra.mxu0 %v2870
    %2903 = vmatpush.msra.mxu0 %v2868
    %2904 = vmatpush.msra.mxu0 %v2866
    %2905 = vmatmul.f32.gmra.mxu0 %v2881
    %v2906 = vpop.f32.mrf.mxu0
    %v2907 = vadd.f32 0.0, %v2906
    %2908 = vmatmul.f32.gmra.mxu0 %v2884
    %v2909 = vpop.f32.mrf.mxu0
    %v2910 = vadd.f32 0.0, %v2909
    %2911 = vmatmul.f32.gmra.mxu0 %v2887
    %v2912 = vpop.f32.mrf.mxu0
    %v2913 = vadd.f32 0.0, %v2912
    %2914 = vdwg.mxu0
    %2918 = vrot.lane.b32.xlu0 %v2907, 8
    %v2919 = vpop.permute.xlu0 %2918
    %2920 = vrot.lane.b32.xlu0 %v2910, 8
    %v2921 = vpop.permute.xlu0 %2920
    %2922 = vrot.lane.b32.xlu0 %v2913, 8
    %v2923 = vpop.permute.xlu0 %2922
    %v2927 = vsel %vm2021, %v2755, %v2919
    %v2928 = vsel %vm2021, %v2758, %v2921
    %v2929 = vsel %vm2021, %v2761, %v2923
    %v2931 = vperm.slane %v2634, 0
    %v2934 = vsel %vm894, %v2927, 0
    %v2937 = vsel %vm894, %v2928, 0
    %v2940 = vsel %vm894, %v2929, 0
    %2942 = vmatpush.msra.mxu0 0.0
    %2943 = vmatpush.msra.mxu0 0.0
    %2944 = vmatpush.msra.mxu0 0.0
    %2945 = vmatpush.msra.mxu0 0.0
    %2946 = vmatpush.msra.mxu0 0.0
    %2947 = vmatpush.msra.mxu0 0.0
    %2948 = vmatpush.msra.mxu0 0.0
    %2949 = vmatpush.msra.mxu0 0.0
    %2950 = vmatpush.msra.mxu0 0.0
    %2951 = vmatpush.msra.mxu0 0.0
    %2952 = vmatpush.msra.mxu0 0.0
    %2953 = vmatpush.msra.mxu0 0.0
    %2954 = vmatpush.msra.mxu0 0.0
    %2955 = vmatpush.msra.mxu0 0.0
    %2956 = vmatpush.msra.mxu0 %v2633
    %2957 = vmatpush.msra.mxu0 %v2632
    %2958 = vmatmul.f32.gmra.mxu0 %v2934
    %v2959 = vpop.f32.mrf.mxu0
    %v2960 = vadd.f32 %v2931, %v2959
    %2961 = vmatmul.f32.gmra.mxu0 %v2937
    %v2962 = vpop.f32.mrf.mxu0
    %v2963 = vadd.f32 %v2931, %v2962
    %2964 = vmatmul.f32.gmra.mxu0 %v2940
    %v2965 = vpop.f32.mrf.mxu0
    %v2966 = vadd.f32 %v2931, %v2965
    %2967 = vdwg.mxu0
    %v2968 = vadd.f32 %v2481, %v2960
    %v2969 = vadd.f32 %v2482, %v2963
    %v2970 = vadd.f32 %v2483, %v2966
    %v2971 = vld [vmem:[#allocation16] sm:$0x3]
    %2972 = vadd.xlane.f32.xlu0 %v2968
    %v2973 = vpop.xlane.xlu0 %2972
    %2974 = vadd.xlane.f32.xlu0 %v2969
    %v2975 = vpop.xlane.xlu0 %2974
    %vm2976 = vcmask 1041408
    %v2977 = vsel %vm2976, %v2970, 0.0
    %2978 = vadd.xlane.f32.xlu0 %v2977
    %v2979 = vpop.xlane.xlu0 %2978
    %v2980 = vmul.f32 %v2973, 0.0625
    %v2981 = vmul.f32 %v2975, 0.0625
    %v2982 = vmul.f32 %v2979, 0.0625
    %v2983 = vmul.f32 %v2968, %v2968
    %v2984 = vmul.f32 %v2969, %v2969
    %v2985 = vmul.f32 %v2970, %v2970
    %2986 = vadd.xlane.f32.xlu0 %v2983
    %v2987 = vpop.xlane.xlu0 %2986
    %2988 = vadd.xlane.f32.xlu0 %v2984
    %v2989 = vpop.xlane.xlu0 %2988
    %v2990 = vsel %vm2976, %v2985, 0.0
    %2991 = vadd.xlane.f32.xlu0 %v2990
    %v2992 = vpop.xlane.xlu0 %2991
    %v2993 = vmul.f32 %v2987, 0.0625
    %v2994 = vmul.f32 %v2989, 0.0625
    %v2995 = vmul.f32 %v2992, 0.0625
    %v2996 = vmul.f32 %v2980, %v2980
    %v2997 = vmul.f32 %v2981, %v2981
    %v2998 = vmul.f32 %v2982, %v2982
    %v2999 = vsub.f32 %v2993, %v2996
    %v3000 = vsub.f32 %v2994, %v2997
    %v3001 = vsub.f32 %v2995, %v2998
    %v3002 = vsub.f32 %v2968, %v2980
    %v3003 = vsub.f32 %v2969, %v2981
    %v3004 = vsub.f32 %v2970, %v2982
    %v3005 = vadd.f32 %v2999, 1e-05
    %v3006 = vadd.f32 %v3000, 1e-05
    %v3007 = vadd.f32 %v3001, 1e-05
    %v3008 = vrsqrt.pop %v3005
    %v3009 = vmul.f32 %v3008, %v3005
    %v3010 = vmul.f32 %v3009, %v3008
    %v3011 = vmul.f32 0.5, %v3010
    %v3012 = vsub.f32 1.5, %v3011
    %v3013 = vmul.f32 %v3008, %v3012
    %vm3014 = vweird.f32 %v3005
    %vm3015 = vweird.f32 %v3008
    %vm3016 = vmor %vm3014, %vm3015
    %v3017 = vsel %vm3016, %v3008, %v3013
    %v3018 = vrsqrt.pop %v3006
    %v3019 = vmul.f32 %v3018, %v3006
    %v3020 = vmul.f32 %v3019, %v3018
    %v3021 = vmul.f32 0.5, %v3020
    %v3022 = vsub.f32 1.5, %v3021
    %v3023 = vmul.f32 %v3018, %v3022
    %vm3024 = vweird.f32 %v3006
    %vm3025 = vweird.f32 %v3018
    %vm3026 = vmor %vm3024, %vm3025
    %v3027 = vsel %vm3026, %v3018, %v3023
    %v3028 = vrsqrt.pop %v3007
    %v3029 = vmul.f32 %v3028, %v3007
    %v3030 = vmul.f32 %v3029, %v3028
    %v3031 = vmul.f32 0.5, %v3030
    %v3032 = vsub.f32 1.5, %v3031
    %v3033 = vmul.f32 %v3028, %v3032
    %vm3034 = vweird.f32 %v3007
    %vm3035 = vweird.f32 %v3028
    %vm3036 = vmor %vm3034, %vm3035
    %v3037 = vsel %vm3036, %v3028, %v3033
    %v3038 = vmul.f32 %v3002, %v3017
    %v3039 = vmul.f32 %v3003, %v3027
    %v3040 = vmul.f32 %v3004, %v3037
    %v3041 = vperm.slane %v2971, 0
    %v3042 = vmul.f32 %v3038, %v3041
    %v3043 = vmul.f32 %v3039, %v3041
    %v3044 = vmul.f32 %v3040, %v3041
    %v3045 = vperm.slane %v2971, 1
    %v3046 = vadd.f32 %v3042, %v3045
    %v3047 = vadd.f32 %v3043, %v3045
    %v3048 = vadd.f32 %v3044, %v3045
    %v3049 = vld [vmem:[%s67] sm:$0xff]
    %v3050 = vld [vmem:[%s67 + $0x8] sm:$0xff]
    %v3051 = vld [vmem:[%s67 + $0x10] sm:$0xff]
    %v3052 = vld [vmem:[%s67 + $0x18] sm:$0xff]
    %v3053 = vld [vmem:[%s67 + $0x20] sm:$0xff]
    %v3054 = vld [vmem:[%s67 + $0x28] sm:$0xff]
    %v3055 = vld [vmem:[%s67 + $0x30] sm:$0xff]
    %v3056 = vld [vmem:[%s67 + $0x38] sm:$0xff]
    %v3057 = vld [vmem:[%s67 + $0x40] sm:$0xff]
    %v3058 = vld [vmem:[%s67 + $0x48] sm:$0xff]
    %v3059 = vld [vmem:[%s67 + $0x50] sm:$0xff]
    %v3060 = vld [vmem:[%s67 + $0x58] sm:$0xff]
    %v3061 = vld [vmem:[%s67 + $0x60] sm:$0xff]
    %v3062 = vld [vmem:[%s67 + $0x68] sm:$0xff]
    %v3063 = vld [vmem:[%s67 + $0x70] sm:$0xff]
    %v3064 = vld [vmem:[%s67 + $0x78] sm:$0xff]
    %v3065 = vld [vmem:[#allocation17] sm:$0x1]
    %v3066 = vld [vmem:[%s71] sm:$0xff]
    %v3067 = vld [vmem:[%s71 + $0x8] sm:$0xff]
    %v3068 = vld [vmem:[%s71 + $0x10] sm:$0xff]
    %v3069 = vld [vmem:[%s71 + $0x18] sm:$0xff]
    %v3070 = vld [vmem:[%s71 + $0x20] sm:$0xff]
    %v3071 = vld [vmem:[%s71 + $0x28] sm:$0xff]
    %v3072 = vld [vmem:[%s71 + $0x30] sm:$0xff]
    %v3073 = vld [vmem:[%s71 + $0x38] sm:$0xff]
    %v3074 = vld [vmem:[%s71 + $0x40] sm:$0xff]
    %v3075 = vld [vmem:[%s71 + $0x48] sm:$0xff]
    %v3076 = vld [vmem:[%s71 + $0x50] sm:$0xff]
    %v3077 = vld [vmem:[%s71 + $0x58] sm:$0xff]
    %v3078 = vld [vmem:[%s71 + $0x60] sm:$0xff]
    %v3079 = vld [vmem:[%s71 + $0x68] sm:$0xff]
    %v3080 = vld [vmem:[%s71 + $0x70] sm:$0xff]
    %v3081 = vld [vmem:[%s71 + $0x78] sm:$0xff]
    %v3082 = vld [vmem:[#allocation19] sm:$0x1]
    %v3084 = vperm.slane %v3065, 0
    %3086 = vmatpush.msra.mxu0 %v3064
    %3087 = vmatpush.msra.mxu0 %v3063
    %3088 = vmatpush.msra.mxu0 %v3062
    %3089 = vmatpush.msra.mxu0 %v3061
    %3090 = vmatpush.msra.mxu0 %v3060
    %3091 = vmatpush.msra.mxu0 %v3059
    %3092 = vmatpush.msra.mxu0 %v3058
    %3093 = vmatpush.msra.mxu0 %v3057
    %3094 = vmatpush.msra.mxu0 %v3056
    %3095 = vmatpush.msra.mxu0 %v3055
    %3096 = vmatpush.msra.mxu0 %v3054
    %3097 = vmatpush.msra.mxu0 %v3053
    %3098 = vmatpush.msra.mxu0 %v3052
    %3099 = vmatpush.msra.mxu0 %v3051
    %3100 = vmatpush.msra.mxu0 %v3050
    %3101 = vmatpush.msra.mxu0 %v3049
    %3102 = vmatmul.f32.gmra.mxu0 %v3046
    %v3103 = vpop.f32.mrf.mxu0
    %v3104 = vadd.f32 %v3084, %v3103
    %3105 = vmatmul.f32.gmra.mxu0 %v3047
    %v3106 = vpop.f32.mrf.mxu0
    %v3107 = vadd.f32 %v3084, %v3106
    %3108 = vmatmul.f32.gmra.mxu0 %v3048
    %v3109 = vpop.f32.mrf.mxu0
    %v3110 = vadd.f32 %v3084, %v3109
    %3111 = vdwg.mxu0
    %v3112 = vmul.f32 %v3104, %v3104
    %v3113 = vmul.f32 %v3107, %v3107
    %v3114 = vmul.f32 %v3110, %v3110
    %v3115 = vmul.f32 %v3104, %v3112
    %v3116 = vmul.f32 %v3107, %v3113
    %v3117 = vmul.f32 %v3110, %v3114
    %v3118 = vmul.f32 %v3115, 0.044715
    %v3119 = vmul.f32 %v3116, 0.044715
    %v3120 = vmul.f32 %v3117, 0.044715
    %v3121 = vadd.f32 %v3104, %v3118
    %v3122 = vadd.f32 %v3107, %v3119
    %v3123 = vadd.f32 %v3110, %v3120
    %v3124 = vmul.f32 %v3121, 0.7978846
    %v3125 = vmul.f32 %v3122, 0.7978846
    %v3126 = vmul.f32 %v3123, 0.7978846
    %v3127 = vtanh.pop %v3124
    %v3128 = vtanh.pop %v3125
    %v3129 = vtanh.pop %v3126
    %v3130 = vadd.f32 %v3127, 1.0
    %v3131 = vadd.f32 %v3128, 1.0
    %v3132 = vadd.f32 %v3129, 1.0
    %v3133 = vmul.f32 %v3130, 0.5
    %v3134 = vmul.f32 %v3131, 0.5
    %v3135 = vmul.f32 %v3132, 0.5
    %v3136 = vmul.f32 %v3104, %v3133
    %v3137 = vmul.f32 %v3107, %v3134
    %v3138 = vmul.f32 %v3110, %v3135
    %v3140 = vperm.slane %v3082, 0
    %3142 = vmatpush.msra.mxu0 %v3081
    %3143 = vmatpush.msra.mxu0 %v3080
    %3144 = vmatpush.msra.mxu0 %v3079
    %3145 = vmatpush.msra.mxu0 %v3078
    %3146 = vmatpush.msra.mxu0 %v3077
    %3147 = vmatpush.msra.mxu0 %v3076
    %3148 = vmatpush.msra.mxu0 %v3075
    %3149 = vmatpush.msra.mxu0 %v3074
    %3150 = vmatpush.msra.mxu0 %v3073
    %3151 = vmatpush.msra.mxu0 %v3072
    %3152 = vmatpush.msra.mxu0 %v3071
    %3153 = vmatpush.msra.mxu0 %v3070
    %3154 = vmatpush.msra.mxu0 %v3069
    %3155 = vmatpush.msra.mxu0 %v3068
    %3156 = vmatpush.msra.mxu0 %v3067
    %3157 = vmatpush.msra.mxu0 %v3066
    %3158 = vmatmul.f32.gmra.mxu0 %v3136
    %v3159 = vpop.f32.mrf.mxu0
    %v3160 = vadd.f32 %v3140, %v3159
    %3161 = vmatmul.f32.gmra.mxu0 %v3137
    %v3162 = vpop.f32.mrf.mxu0
    %3163 = vmatmul.f32.gmra.mxu0 %v3138
    %v3164 = vpop.f32.mrf.mxu0
    %3165 = vdwg.mxu0
    %v3166 = vadd.f32 %v3046, %v3160
    %v3167 = vld [vmem:[#allocation20] sm:$0x3]
    %3168 = vadd.xlane.f32.xlu0 %v3166
    %v3169 = vpop.xlane.xlu0 %3168
    %v3170 = vmul.f32 %v3169, 0.0625
    %v3171 = vmul.f32 %v3166, %v3166
    %3172 = vadd.xlane.f32.xlu0 %v3171
    %v3173 = vpop.xlane.xlu0 %3172
    %v3174 = vmul.f32 %v3173, 0.0625
    %v3175 = vmul.f32 %v3170, %v3170
    %v3176 = vsub.f32 %v3174, %v3175
    %v3177 = vsub.f32 %v3166, %v3170
    %v3178 = vadd.f32 %v3176, 1e-05
    %v3179 = vrsqrt.pop %v3178
    %v3180 = vmul.f32 %v3179, %v3178
    %v3181 = vmul.f32 %v3180, %v3179
    %v3182 = vmul.f32 0.5, %v3181
    %v3183 = vsub.f32 1.5, %v3182
    %v3184 = vmul.f32 %v3179, %v3183
    %vm3185 = vweird.f32 %v3178
    %vm3186 = vweird.f32 %v3179
    %vm3187 = vmor %vm3185, %vm3186
    %v3188 = vsel %vm3187, %v3179, %v3184
    %v3189 = vmul.f32 %v3177, %v3188
    %v3190 = vperm.slane %v3167, 0
    %v3191 = vmul.f32 %v3189, %v3190
    %v3192 = vperm.slane %v3167, 1
    %v3193 = vadd.f32 %v3191, %v3192
    %v3194 = vld [vmem:[%s77] sm:$0xff]
    %v3195 = vld [vmem:[%s77 + $0x8] sm:$0xff]
    %v3196 = vld [vmem:[%s77 + $0x10] sm:$0xff]
    %v3197 = vld [vmem:[%s77 + $0x18] sm:$0xff]
    %v3198 = vld [vmem:[%s77 + $0x20] sm:$0xff]
    %v3199 = vld [vmem:[%s77 + $0x28] sm:$0xff]
    %v3200 = vld [vmem:[%s77 + $0x30] sm:$0xff]
    %v3201 = vld [vmem:[%s77 + $0x38] sm:$0xff]
    %v3202 = vld [vmem:[%s77 + $0x40] sm:$0xff]
    %v3203 = vld [vmem:[%s77 + $0x48] sm:$0xff]
    %v3204 = vld [vmem:[%s77 + $0x50] sm:$0xff]
    %v3205 = vld [vmem:[%s77 + $0x58] sm:$0xff]
    %v3206 = vld [vmem:[%s77 + $0x60] sm:$0xff]
    %v3207 = vld [vmem:[%s77 + $0x68] sm:$0xff]
    %v3208 = vld [vmem:[%s77 + $0x70] sm:$0xff]
    %v3209 = vld [vmem:[%s77 + $0x78] sm:$0xff]
    %v3210 = vld [vmem:[#allocation22] sm:$0x1]
    %v3212 = vperm.slane %v3210, 0
    %3214 = vmatpush.msra.mxu0 %v3209
    %3215 = vmatpush.msra.mxu0 %v3208
    %3216 = vmatpush.msra.mxu0 %v3207
    %3217 = vmatpush.msra.mxu0 %v3206
    %3218 = vmatpush.msra.mxu0 %v3205
    %3219 = vmatpush.msra.mxu0 %v3204
    %3220 = vmatpush.msra.mxu0 %v3203
    %3221 = vmatpush.msra.mxu0 %v3202
    %3222 = vmatpush.msra.mxu0 %v3201
    %3223 = vmatpush.msra.mxu0 %v3200
    %3224 = vmatpush.msra.mxu0 %v3199
    %3225 = vmatpush.msra.mxu0 %v3198
    %3226 = vmatpush.msra.mxu0 %v3197
    %3227 = vmatpush.msra.mxu0 %v3196
    %3228 = vmatpush.msra.mxu0 %v3195
    %3229 = vmatpush.msra.mxu0 %v3194
    %3230 = vmatmul.f32.gmra.mxu0 %v3193
    %v3231 = vpop.f32.mrf.mxu0
    %v3232 = vadd.f32 %v3212, %v3231
    %3233 = vdwg.mxu0
    %v3234 = vld [vmem:[%s81] sm:$0xff]
    %v3235 = vld [vmem:[%s81 + $0x8] sm:$0xff]
    %v3236 = vld [vmem:[%s81 + $0x10] sm:$0x3]
    %v3238 = vrot.slane %v3232, 6
    %v3240 = vsel %vm2976, %v3236, %v3238
    %v3241 = vld [vmem:[#allocation23] sm:$0x3]
    %3242 = vadd.xlane.f32.xlu0 %v3234
    %v3243 = vpop.xlane.xlu0 %3242
    %3244 = vadd.xlane.f32.xlu0 %v3235
    %v3245 = vpop.xlane.xlu0 %3244
    %3246 = vadd.xlane.f32.xlu0 %v3240
    %v3247 = vpop.xlane.xlu0 %3246
    %v3248 = vsel %vm2976, %v3238, 0.0
    %3249 = vadd.xlane.f32.xlu0 %v3248
    %v3250 = vpop.xlane.xlu0 %3249
    %v3251 = vmul.f32 %v3243, 0.03125
    %v3252 = vmul.f32 %v3245, 0.03125
    %v3253 = vmul.f32 %v3247, 0.03125
    %v3254 = vmul.f32 %v3250, 0.03125
    %v3255 = vmul.f32 %v3234, %v3234
    %v3256 = vmul.f32 %v3235, %v3235
    %v3257 = vmul.f32 %v3240, %v3240
    %v3258 = vmul.f32 %v3238, %v3238
    %3259 = vadd.xlane.f32.xlu0 %v3255
    %v3260 = vpop.xlane.xlu0 %3259
    %3261 = vadd.xlane.f32.xlu0 %v3256
    %v3262 = vpop.xlane.xlu0 %3261
    %3263 = vadd.xlane.f32.xlu0 %v3257
    %v3264 = vpop.xlane.xlu0 %3263
    %v3265 = vsel %vm2976, %v3258, 0.0
    %3266 = vadd.xlane.f32.xlu0 %v3265
    %v3267 = vpop.xlane.xlu0 %3266
    %v3268 = vmul.f32 %v3260, 0.03125
    %v3269 = vmul.f32 %v3262, 0.03125
    %v3270 = vmul.f32 %v3264, 0.03125
    %v3271 = vmul.f32 %v3267, 0.03125
    %v3272 = vmul.f32 %v3251, %v3251
    %v3273 = vmul.f32 %v3252, %v3252
    %v3274 = vmul.f32 %v3253, %v3253
    %v3275 = vmul.f32 %v3254, %v3254
    %v3276 = vsub.f32 %v3268, %v3272
    %v3277 = vsub.f32 %v3269, %v3273
    %v3278 = vsub.f32 %v3270, %v3274
    %v3279 = vsub.f32 %v3271, %v3275
    %v3280 = vsub.f32 %v3234, %v3251
    %v3281 = vsub.f32 %v3235, %v3252
    %v3282 = vsub.f32 %v3240, %v3253
    %v3283 = vsub.f32 %v3238, %v3254
    %v3284 = vadd.f32 %v3276, 1e-05
    %v3285 = vadd.f32 %v3277, 1e-05
    %v3286 = vadd.f32 %v3278, 1e-05
    %v3287 = vadd.f32 %v3279, 1e-05
    %v3288 = vrsqrt.pop %v3284
    %v3289 = vmul.f32 %v3288, %v3284
    %v3290 = vmul.f32 %v3289, %v3288
    %v3291 = vmul.f32 0.5, %v3290
    %v3292 = vsub.f32 1.5, %v3291
    %v3293 = vmul.f32 %v3288, %v3292
    %vm3294 = vweird.f32 %v3284
    %vm3295 = vweird.f32 %v3288
    %vm3296 = vmor %vm3294, %vm3295
    %v3297 = vsel %vm3296, %v3288, %v3293
    %v3298 = vrsqrt.pop %v3285
    %v3299 = vmul.f32 %v3298, %v3285
    %v3300 = vmul.f32 %v3299, %v3298
    %v3301 = vmul.f32 0.5, %v3300
    %v3302 = vsub.f32 1.5, %v3301
    %v3303 = vmul.f32 %v3298, %v3302
    %vm3304 = vweird.f32 %v3285
    %vm3305 = vweird.f32 %v3298
    %vm3306 = vmor %vm3304, %vm3305
    %v3307 = vsel %vm3306, %v3298, %v3303
    %v3308 = vrsqrt.pop %v3286
    %v3309 = vmul.f32 %v3308, %v3286
    %v3310 = vmul.f32 %v3309, %v3308
    %v3311 = vmul.f32 0.5, %v3310
    %v3312 = vsub.f32 1.5, %v3311
    %v3313 = vmul.f32 %v3308, %v3312
    %vm3314 = vweird.f32 %v3286
    %vm3315 = vweird.f32 %v3308
    %vm3316 = vmor %vm3314, %vm3315
    %v3317 = vsel %vm3316, %v3308, %v3313
    %v3318 = vrsqrt.pop %v3287
    %v3319 = vmul.f32 %v3318, %v3287
    %v3320 = vmul.f32 %v3319, %v3318
    %v3321 = vmul.f32 0.5, %v3320
    %v3322 = vsub.f32 1.5, %v3321
    %v3323 = vmul.f32 %v3318, %v3322
    %vm3324 = vweird.f32 %v3287
    %vm3325 = vweird.f32 %v3318
    %vm3326 = vmor %vm3324, %vm3325
    %v3327 = vsel %vm3326, %v3318, %v3323
    %v3328 = vmul.f32 %v3280, %v3297
    %v3329 = vmul.f32 %v3281, %v3307
    %v3330 = vmul.f32 %v3282, %v3317
    %v3331 = vmul.f32 %v3283, %v3327
    %v3332 = vperm.slane %v3241, 0
    %v3333 = vmul.f32 %v3328, %v3332
    %v3334 = vmul.f32 %v3329, %v3332
    %v3335 = vmul.f32 %v3330, %v3332
    %v3336 = vmul.f32 %v3331, %v3332
    %v3337 = vperm.slane %v3241, 1
    %v3338 = vadd.f32 %v3333, %v3337
    %v3339 = vadd.f32 %v3334, %v3337
    %v3340 = vadd.f32 %v3335, %v3337
    %v3341 = vadd.f32 %v3336, %v3337
    %v3342 = vld [vmem:[%s87] sm:$0xff]
    %v3343 = vld [vmem:[%s87 + $0x8] sm:$0xff]
    %v3344 = vld [vmem:[%s87 + $0x10] sm:$0xff]
    %v3345 = vld [vmem:[%s87 + $0x18] sm:$0xff]
    %v3346 = vld [vmem:[%s87 + $0x20] sm:$0xff]
    %v3347 = vld [vmem:[%s87 + $0x28] sm:$0xff]
    %v3348 = vld [vmem:[%s87 + $0x30] sm:$0xff]
    %v3349 = vld [vmem:[%s87 + $0x38] sm:$0xff]
    %v3350 = vld [vmem:[%s87 + $0x40] sm:$0xff]
    %v3351 = vld [vmem:[%s87 + $0x48] sm:$0xff]
    %v3352 = vld [vmem:[%s87 + $0x50] sm:$0xff]
    %v3353 = vld [vmem:[%s87 + $0x58] sm:$0xff]
    %v3354 = vld [vmem:[%s87 + $0x60] sm:$0xff]
    %v3355 = vld [vmem:[%s87 + $0x68] sm:$0xff]
    %v3356 = vld [vmem:[%s87 + $0x70] sm:$0xff]
    %v3357 = vld [vmem:[%s87 + $0x78] sm:$0xff]
    %v3358 = vld [vmem:[%s87 + $0x80] sm:$0xff]
    %v3359 = vld [vmem:[%s87 + $0x88] sm:$0xff]
    %v3360 = vld [vmem:[%s87 + $0x90] sm:$0xff]
    %v3361 = vld [vmem:[%s87 + $0x98] sm:$0xff]
    %v3362 = vld [vmem:[%s87 + $0xa0] sm:$0xff]
    %v3363 = vld [vmem:[%s87 + $0xa8] sm:$0xff]
    %v3364 = vld [vmem:[%s87 + $0xb0] sm:$0xff]
    %v3365 = vld [vmem:[%s87 + $0xb8] sm:$0xff]
    %v3366 = vld [vmem:[%s87 + $0xc0] sm:$0xff]
    %v3367 = vld [vmem:[%s87 + $0xc8] sm:$0xff]
    %v3368 = vld [vmem:[%s87 + $0xd0] sm:$0xff]
    %v3369 = vld [vmem:[%s87 + $0xd8] sm:$0xff]
    %v3370 = vld [vmem:[%s87 + $0xe0] sm:$0xff]
    %v3371 = vld [vmem:[%s87 + $0xe8] sm:$0xff]
    %v3372 = vld [vmem:[%s87 + $0xf0] sm:$0xff]
    %v3373 = vld [vmem:[%s87 + $0xf8] sm:$0xff]
    %v3374 = vld [vmem:[%s87 + $0x100] sm:$0xff]
    %v3375 = vld [vmem:[%s87 + $0x108] sm:$0xff]
    %v3376 = vld [vmem:[%s87 + $0x110] sm:$0xff]
    %v3377 = vld [vmem:[%s87 + $0x118] sm:$0xff]
    %v3378 = vld [vmem:[%s87 + $0x120] sm:$0xff]
    %v3379 = vld [vmem:[%s87 + $0x128] sm:$0xff]
    %v3380 = vld [vmem:[%s87 + $0x130] sm:$0xff]
    %v3381 = vld [vmem:[%s87 + $0x138] sm:$0xff]
    %v3382 = vld [vmem:[%s87 + $0x140] sm:$0xff]
    %v3383 = vld [vmem:[%s87 + $0x148] sm:$0xff]
    %v3384 = vld [vmem:[%s87 + $0x150] sm:$0xff]
    %v3385 = vld [vmem:[%s87 + $0x158] sm:$0xff]
    %v3386 = vld [vmem:[%s87 + $0x160] sm:$0xff]
    %v3387 = vld [vmem:[%s87 + $0x168] sm:$0xff]
    %v3388 = vld [vmem:[%s87 + $0x170] sm:$0xff]
    %v3389 = vld [vmem:[%s87 + $0x178] sm:$0xff]
    %v3390 = vld [vmem:[%s89] sm:$0x7]
    %v3392 = vperm.slane %v3390, 0
    %v3393 = vperm.slane %v3390, 1
    %v3394 = vperm.slane %v3390, 2
    %3398 = vmatpush.msra.mxu0 %v3387
    %3399 = vmatpush.msra.mxu0 %v3384
    %3400 = vmatpush.msra.mxu0 %v3381
    %3401 = vmatpush.msra.mxu0 %v3378
    %3402 = vmatpush.msra.mxu0 %v3375
    %3403 = vmatpush.msra.mxu0 %v3372
    %3404 = vmatpush.msra.mxu0 %v3369
    %3405 = vmatpush.msra.mxu0 %v3366
    %3406 = vmatpush.msra.mxu0 %v3363
    %3407 = vmatpush.msra.mxu0 %v3360
    %3408 = vmatpush.msra.mxu0 %v3357
    %3409 = vmatpush.msra.mxu0 %v3354
    %3410 = vmatpush.msra.mxu0 %v3351
    %3411 = vmatpush.msra.mxu0 %v3348
    %3412 = vmatpush.msra.mxu0 %v3345
    %3413 = vmatpush.msra.mxu0 %v3342
    %3414 = vmatmul.f32.gmra.mxu0 %v3338
    %v3415 = vpop.f32.mrf.mxu0
    %v3416 = vadd.f32 %v3392, %v3415
    %3417 = vmatmul.f32.gmra.mxu0 %v3339
    %v3418 = vpop.f32.mrf.mxu0
    %v3419 = vadd.f32 %v3392, %v3418
    %3420 = vmatmul.f32.gmra.mxu0 %v3340
    %v3421 = vpop.f32.mrf.mxu0
    %v3422 = vadd.f32 %v3392, %v3421
    %3423 = vmatmul.f32.gmra.mxu0 %v3341
    %v3424 = vpop.f32.mrf.mxu0
    %v3425 = vadd.f32 %v3392, %v3424
    %3426 = vdwg.mxu0
    %3427 = vmatpush.msra.mxu0 %v3388
    %3428 = vmatpush.msra.mxu0 %v3385
    %3429 = vmatpush.msra.mxu0 %v3382
    %3430 = vmatpush.msra.mxu0 %v3379
    %3431 = vmatpush.msra.mxu0 %v3376
    %3432 = vmatpush.msra.mxu0 %v3373
    %3433 = vmatpush.msra.mxu0 %v3370
    %3434 = vmatpush.msra.mxu0 %v3367
    %3435 = vmatpush.msra.mxu0 %v3364
    %3436 = vmatpush.msra.mxu0 %v3361
    %3437 = vmatpush.msra.mxu0 %v3358
    %3438 = vmatpush.msra.mxu0 %v3355
    %3439 = vmatpush.msra.mxu0 %v3352
    %3440 = vmatpush.msra.mxu0 %v3349
    %3441 = vmatpush.msra.mxu0 %v3346
    %3442 = vmatpush.msra.mxu0 %v3343
    %3443 = vmatmul.f32.gmra.mxu0 %v3338
    %v3444 = vpop.f32.mrf.mxu0
    %v3445 = vadd.f32 %v3393, %v3444
    %3446 = vmatmul.f32.gmra.mxu0 %v3339
    %v3447 = vpop.f32.mrf.mxu0
    %v3448 = vadd.f32 %v3393, %v3447
    %3449 = vmatmul.f32.gmra.mxu0 %v3340
    %v3450 = vpop.f32.mrf.mxu0
    %v3451 = vadd.f32 %v3393, %v3450
    %3452 = vmatmul.f32.gmra.mxu0 %v3341
    %v3453 = vpop.f32.mrf.mxu0
    %v3454 = vadd.f32 %v3393, %v3453
    %3455 = vdwg.mxu0
    %3456 = vmatpush.msra.mxu0 %v3389
    %3457 = vmatpush.msra.mxu0 %v3386
    %3458 = vmatpush.msra.mxu0 %v3383
    %3459 = vmatpush.msra.mxu0 %v3380
    %3460 = vmatpush.msra.mxu0 %v3377
    %3461 = vmatpush.msra.mxu0 %v3374
    %3462 = vmatpush.msra.mxu0 %v3371
    %3463 = vmatpush.msra.mxu0 %v3368
    %3464 = vmatpush.msra.mxu0 %v3365
    %3465 = vmatpush.msra.mxu0 %v3362
    %3466 = vmatpush.msra.mxu0 %v3359
    %3467 = vmatpush.msra.mxu0 %v3356
    %3468 = vmatpush.msra.mxu0 %v3353
    %3469 = vmatpush.msra.mxu0 %v3350
    %3470 = vmatpush.msra.mxu0 %v3347
    %3471 = vmatpush.msra.mxu0 %v3344
    %3472 = vmatmul.f32.gmra.mxu0 %v3338
    %v3473 = vpop.f32.mrf.mxu0
    %v3474 = vadd.f32 %v3394, %v3473
    %3475 = vmatmul.f32.gmra.mxu0 %v3339
    %v3476 = vpop.f32.mrf.mxu0
    %v3477 = vadd.f32 %v3394, %v3476
    %3478 = vmatmul.f32.gmra.mxu0 %v3340
    %v3479 = vpop.f32.mrf.mxu0
    %v3480 = vadd.f32 %v3394, %v3479
    %3481 = vmatmul.f32.gmra.mxu0 %v3341
    %v3482 = vpop.f32.mrf.mxu0
    %v3483 = vadd.f32 %v3394, %v3482
    %3484 = vdwg.mxu0
    %v3485 = vld [vmem:[%s91] sm:$0xff]
    %v3486 = vld [vmem:[%s91 + $0x8] sm:$0xff]
    %v3487 = vld [vmem:[%s91 + $0x10] sm:$0xff]
    %v3488 = vld [vmem:[%s91 + $0x18] sm:$0xff]
    %v3489 = vld [vmem:[#allocation25] sm:$0x1]
    %v3490 = vld [vmem:[%s83] sm:$0xff]
    %v3491 = vld [vmem:[%s83 + $0x8] sm:$0xff]
    %v3492 = vld [vmem:[%s83 + $0x10] sm:$0xff]
    %v3493 = vld [vmem:[%s83 + $0x18] sm:$0x3]
    %v3495 = vsel %vm894, %v3416, 0
    %v3498 = vsel %vm894, %v3419, 0
    %v3501 = vsel %vm894, %v3422, 0
    %v3504 = vsel %vm894, %v3425, 0
    %v3507 = vsel %vm894, %v3445, 0
    %v3510 = vsel %vm894, %v3448, 0
    %v3513 = vsel %vm894, %v3451, 0
    %v3516 = vsel %vm894, %v3454, 0
    %3518 = vmatpush.xpose.msra.mxu0 0.0
    %3519 = vmatpush.xpose.msra.mxu0 0.0
    %3520 = vmatpush.xpose.msra.mxu0 0.0
    %3521 = vmatpush.xpose.msra.mxu0 0.0
    %3522 = vmatpush.xpose.msra.mxu0 0.0
    %3523 = vmatpush.xpose.msra.mxu0 0.0
    %3524 = vmatpush.xpose.msra.mxu0 0.0
    %3525 = vmatpush.xpose.msra.mxu0 0.0
    %3526 = vmatpush.xpose.msra.mxu0 0.0
    %3527 = vmatpush.xpose.msra.mxu0 0.0
    %3528 = vmatpush.xpose.msra.mxu0 0.0
    %3529 = vmatpush.xpose.msra.mxu0 0.0
    %3530 = vmatpush.xpose.msra.mxu0 %v3516
    %3531 = vmatpush.xpose.msra.mxu0 %v3513
    %3532 = vmatpush.xpose.msra.mxu0 %v3510
    %3533 = vmatpush.xpose.msra.mxu0 %v3507
    %3534 = vmatmul.f32.gmra.mxu0 %v3495
    %v3535 = vpop.f32.mrf.mxu0
    %v3536 = vadd.f32 0.0, %v3535
    %3537 = vmatmul.f32.gmra.mxu0 %v3498
    %v3538 = vpop.f32.mrf.mxu0
    %v3539 = vadd.f32 0.0, %v3538
    %3540 = vmatmul.f32.gmra.mxu0 %v3501
    %v3541 = vpop.f32.mrf.mxu0
    %v3542 = vadd.f32 0.0, %v3541
    %3543 = vmatmul.f32.gmra.mxu0 %v3504
    %v3544 = vpop.f32.mrf.mxu0
    %v3545 = vadd.f32 0.0, %v3544
    %3546 = vdwg.mxu0
    %v3547 = vmul.f32 %v3536, 0.25
    %v3548 = vmul.f32 %v3539, 0.25
    %v3549 = vmul.f32 %v3542, 0.25
    %v3550 = vmul.f32 %v3545, 0.25
    %v3551 = vadd.f32 %v3547, %v3490
    %v3552 = vadd.f32 %v3548, %v3491
    %v3553 = vadd.f32 %v3549, %v3492
    %v3554 = vadd.f32 %v3550, %v3493
    %vm3555 = vcmask 211968
    %v3556 = vsel %vm3555, %v3551, -inf
    %3557 = vmax.xlane.f32.xlu0 %v3556
    %v3558 = vpop.xlane.xlu0 %3557
    %v3559 = vsel %vm3555, %v3552, -inf
    %3560 = vmax.xlane.f32.xlu0 %v3559
    %v3561 = vpop.xlane.xlu0 %3560
    %v3562 = vsel %vm3555, %v3553, -inf
    %3563 = vmax.xlane.f32.xlu0 %v3562
    %v3564 = vpop.xlane.xlu0 %3563
    %vm3565 = vcmask 205824
    %v3566 = vsel %vm3565, %v3554, -inf
    %3567 = vmax.xlane.f32.xlu0 %v3566
    %v3568 = vpop.xlane.xlu0 %3567
    %v3569 = vsub.f32 %v3551, %v3558
    %v3570 = vsub.f32 %v3552, %v3561
    %v3571 = vsub.f32 %v3553, %v3564
    %v3572 = vsub.f32 %v3554, %v3568
    %v3573 = vmul.f32 %v3569, 1.442695
    %v3574 = vpow.pop %v3573
    %v3575 = vmul.f32 %v3570, 1.442695
    %v3576 = vpow.pop %v3575
    %v3577 = vmul.f32 %v3571, 1.442695
    %v3578 = vpow.pop %v3577
    %v3579 = vmul.f32 %v3572, 1.442695
    %v3580 = vpow.pop %v3579
    %v3581 = vsel %vm3555, %v3574, 0.0
    %3582 = vadd.xlane.f32.xlu0 %v3581
    %v3583 = vpop.xlane.xlu0 %3582
    %v3584 = vsel %vm3555, %v3576, 0.0
    %3585 = vadd.xlane.f32.xlu0 %v3584
    %v3586 = vpop.xlane.xlu0 %3585
    %v3587 = vsel %vm3555, %v3578, 0.0
    %3588 = vadd.xlane.f32.xlu0 %v3587
    %v3589 = vpop.xlane.xlu0 %3588
    %v3590 = vsel %vm3565, %v3580, 0.0
    %3591 = vadd.xlane.f32.xlu0 %v3590
    %v3592 = vpop.xlane.xlu0 %3591
    %v3593 = vrcp.pop %v3583
    %v3594 = vrcp.pop %v3586
    %v3595 = vrcp.pop %v3589
    %v3596 = vrcp.pop %v3592
    %v3597 = vmul.f32 %v3574, %v3593
    %v3598 = vmul.f32 %v3576, %v3594
    %v3599 = vmul.f32 %v3578, %v3595
    %v3600 = vmul.f32 %v3580, %v3596
    %v3602 = vsel %vm3555, %v3597, 0
    %v3605 = vsel %vm3555, %v3598, 0
    %v3608 = vsel %vm3555, %v3599, 0
    %v3611 = vsel %vm3555, %v3600, 0
    %v3614 = vsel %vm2976, %v3483, 0
    %3616 = vmatpush.msra.mxu0 0.0
    %3617 = vmatpush.msra.mxu0 0.0
    %3618 = vmatpush.msra.mxu0 0.0
    %3619 = vmatpush.msra.mxu0 0.0
    %3620 = vmatpush.msra.mxu0 0.0
    %3621 = vmatpush.msra.mxu0 0.0
    %3622 = vmatpush.msra.mxu0 0.0
    %3623 = vmatpush.msra.mxu0 0.0
    %3624 = vmatpush.msra.mxu0 0.0
    %3625 = vmatpush.msra.mxu0 0.0
    %3626 = vmatpush.msra.mxu0 0.0
    %3627 = vmatpush.msra.mxu0 0.0
    %3628 = vmatpush.msra.mxu0 %v3614
    %3629 = vmatpush.msra.mxu0 %v3480
    %3630 = vmatpush.msra.mxu0 %v3477
    %3631 = vmatpush.msra.mxu0 %v3474
    %3632 = vmatmul.f32.gmra.mxu0 %v3602
    %v3633 = vpop.f32.mrf.mxu0
    %v3634 = vadd.f32 0.0, %v3633
    %3635 = vmatmul.f32.gmra.mxu0 %v3605
    %v3636 = vpop.f32.mrf.mxu0
    %v3637 = vadd.f32 0.0, %v3636
    %3638 = vmatmul.f32.gmra.mxu0 %v3608
    %v3639 = vpop.f32.mrf.mxu0
    %v3640 = vadd.f32 0.0, %v3639
    %3641 = vmatmul.f32.gmra.mxu0 %v3611
    %v3642 = vpop.f32.mrf.mxu0
    %v3643 = vadd.f32 0.0, %v3642
    %3644 = vdwg.mxu0
    %3645 = vrot.lane.b32.xlu0 %v3416, 112
    %v3646 = vpop.permute.xlu0 %3645
    %3647 = vrot.lane.b32.xlu0 %v3419, 112
    %v3648 = vpop.permute.xlu0 %3647
    %3649 = vrot.lane.b32.xlu0 %v3422, 112
    %v3650 = vpop.permute.xlu0 %3649
    %3651 = vrot.lane.b32.xlu0 %v3425, 112
    %v3652 = vpop.permute.xlu0 %3651
    %3653 = vrot.lane.b32.xlu0 %v3445, 112
    %v3654 = vpop.permute.xlu0 %3653
    %3655 = vrot.lane.b32.xlu0 %v3448, 112
    %v3656 = vpop.permute.xlu0 %3655
    %3657 = vrot.lane.b32.xlu0 %v3451, 112
    %v3658 = vpop.permute.xlu0 %3657
    %3659 = vrot.lane.b32.xlu0 %v3454, 112
    %v3660 = vpop.permute.xlu0 %3659
    %v3661 = vsel %vm894, %v3646, 0
    %v3663 = vsel %vm894, %v3648, 0
    %v3665 = vsel %vm894, %v3650, 0
    %v3667 = vsel %vm894, %v3652, 0
    %v3669 = vsel %vm894, %v3654, 0
    %v3671 = vsel %vm894, %v3656, 0
    %v3673 = vsel %vm894, %v3658, 0
    %v3675 = vsel %vm894, %v3660, 0
    %3677 = vmatpush.xpose.msra.mxu0 0.0
    %3678 = vmatpush.xpose.msra.mxu0 0.0
    %3679 = vmatpush.xpose.msra.mxu0 0.0
    %3680 = vmatpush.xpose.msra.mxu0 0.0
    %3681 = vmatpush.xpose.msra.mxu0 0.0
    %3682 = vmatpush.xpose.msra.mxu0 0.0
    %3683 = vmatpush.xpose.msra.mxu0 0.0
    %3684 = vmatpush.xpose.msra.mxu0 0.0
    %3685 = vmatpush.xpose.msra.mxu0 0.0
    %3686 = vmatpush.xpose.msra.mxu0 0.0
    %3687 = vmatpush.xpose.msra.mxu0 0.0
    %3688 = vmatpush.xpose.msra.mxu0 0.0
    %3689 = vmatpush.xpose.msra.mxu0 %v3675
    %3690 = vmatpush.xpose.msra.mxu0 %v3673
    %3691 = vmatpush.xpose.msra.mxu0 %v3671
    %3692 = vmatpush.xpose.msra.mxu0 %v3669
    %3693 = vmatmul.f32.gmra.mxu0 %v3661
    %v3694 = vpop.f32.mrf.mxu0
    %v3695 = vadd.f32 0.0, %v3694
    %3696 = vmatmul.f32.gmra.mxu0 %v3663
    %v3697 = vpop.f32.mrf.mxu0
    %v3698 = vadd.f32 0.0, %v3697
    %3699 = vmatmul.f32.gmra.mxu0 %v3665
    %v3700 = vpop.f32.mrf.mxu0
    %v3701 = vadd.f32 0.0, %v3700
    %3702 = vmatmul.f32.gmra.mxu0 %v3667
    %v3703 = vpop.f32.mrf.mxu0
    %v3704 = vadd.f32 0.0, %v3703
    %3705 = vdwg.mxu0
    %v3706 = vmul.f32 %v3695, 0.25
    %v3707 = vmul.f32 %v3698, 0.25
    %v3708 = vmul.f32 %v3701, 0.25
    %v3709 = vmul.f32 %v3704, 0.25
    %v3710 = vadd.f32 %v3706, %v3490
    %v3711 = vadd.f32 %v3707, %v3491
    %v3712 = vadd.f32 %v3708, %v3492
    %v3713 = vadd.f32 %v3709, %v3493
    %v3714 = vsel %vm3555, %v3710, -inf
    %3715 = vmax.xlane.f32.xlu0 %v3714
    %v3716 = vpop.xlane.xlu0 %3715
    %v3717 = vsel %vm3555, %v3711, -inf
    %3718 = vmax.xlane.f32.xlu0 %v3717
    %v3719 = vpop.xlane.xlu0 %3718
    %v3720 = vsel %vm3555, %v3712, -inf
    %3721 = vmax.xlane.f32.xlu0 %v3720
    %v3722 = vpop.xlane.xlu0 %3721
    %v3723 = vsel %vm3565, %v3713, -inf
    %3724 = vmax.xlane.f32.xlu0 %v3723
    %v3725 = vpop.xlane.xlu0 %3724
    %v3726 = vsub.f32 %v3710, %v3716
    %v3727 = vsub.f32 %v3711, %v3719
    %v3728 = vsub.f32 %v3712, %v3722
    %v3729 = vsub.f32 %v3713, %v3725
    %v3730 = vmul.f32 %v3726, 1.442695
    %v3731 = vpow.pop %v3730
    %v3732 = vmul.f32 %v3727, 1.442695
    %v3733 = vpow.pop %v3732
    %v3734 = vmul.f32 %v3728, 1.442695
    %v3735 = vpow.pop %v3734
    %v3736 = vmul.f32 %v3729, 1.442695
    %v3737 = vpow.pop %v3736
    %v3738 = vsel %vm3555, %v3731, 0.0
    %3739 = vadd.xlane.f32.xlu0 %v3738
    %v3740 = vpop.xlane.xlu0 %3739
    %v3741 = vsel %vm3555, %v3733, 0.0
    %3742 = vadd.xlane.f32.xlu0 %v3741
    %v3743 = vpop.xlane.xlu0 %3742
    %v3744 = vsel %vm3555, %v3735, 0.0
    %3745 = vadd.xlane.f32.xlu0 %v3744
    %v3746 = vpop.xlane.xlu0 %3745
    %v3747 = vsel %vm3565, %v3737, 0.0
    %3748 = vadd.xlane.f32.xlu0 %v3747
    %v3749 = vpop.xlane.xlu0 %3748
    %v3750 = vrcp.pop %v3740
    %v3751 = vrcp.pop %v3743
    %v3752 = vrcp.pop %v3746
    %v3753 = vrcp.pop %v3749
    %v3754 = vmul.f32 %v3731, %v3750
    %v3755 = vmul.f32 %v3733, %v3751
    %v3756 = vmul.f32 %v3735, %v3752
    %v3757 = vmul.f32 %v3737, %v3753
    %3761 = vrot.lane.b32.xlu0 %v3474, 112
    %v3762 = vpop.permute.xlu0 %3761
    %3763 = vrot.lane.b32.xlu0 %v3477, 112
    %v3764 = vpop.permute.xlu0 %3763
    %3765 = vrot.lane.b32.xlu0 %v3480, 112
    %v3766 = vpop.permute.xlu0 %3765
    %3767 = vrot.lane.b32.xlu0 %v3483, 112
    %v3768 = vpop.permute.xlu0 %3767
    %v3773 = vsel %vm3555, %v3754, 0
    %v3776 = vsel %vm3555, %v3755, 0
    %v3779 = vsel %vm3555, %v3756, 0
    %v3782 = vsel %vm3555, %v3757, 0
    %v3784 = vsel %vm2976, %v3768, 0
    %3786 = vmatpush.msra.mxu0 0.0
    %3787 = vmatpush.msra.mxu0 0.0
    %3788 = vmatpush.msra.mxu0 0.0
    %3789 = vmatpush.msra.mxu0 0.0
    %3790 = vmatpush.msra.mxu0 0.0
    %3791 = vmatpush.msra.mxu0 0.0
    %3792 = vmatpush.msra.mxu0 0.0
    %3793 = vmatpush.msra.mxu0 0.0
    %3794 = vmatpush.msra.mxu0 0.0
    %3795 = vmatpush.msra.mxu0 0.0
    %3796 = vmatpush.msra.mxu0 0.0
    %3797 = vmatpush.msra.mxu0 0.0
    %3798 = vmatpush.msra.mxu0 %v3784
    %3799 = vmatpush.msra.mxu0 %v3766
    %3800 = vmatpush.msra.mxu0 %v3764
    %3801 = vmatpush.msra.mxu0 %v3762
    %3802 = vmatmul.f32.gmra.mxu0 %v3773
    %v3803 = vpop.f32.mrf.mxu0
    %v3804 = vadd.f32 0.0, %v3803
    %3805 = vmatmul.f32.gmra.mxu0 %v3776
    %v3806 = vpop.f32.mrf.mxu0
    %v3807 = vadd.f32 0.0, %v3806
    %3808 = vmatmul.f32.gmra.mxu0 %v3779
    %v3809 = vpop.f32.mrf.mxu0
    %v3810 = vadd.f32 0.0, %v3809
    %3811 = vmatmul.f32.gmra.mxu0 %v3782
    %v3812 = vpop.f32.mrf.mxu0
    %v3813 = vadd.f32 0.0, %v3812
    %3814 = vdwg.mxu0
    %3819 = vrot.lane.b32.xlu0 %v3804, 16
    %v3820 = vpop.permute.xlu0 %3819
    %3821 = vrot.lane.b32.xlu0 %v3807, 16
    %v3822 = vpop.permute.xlu0 %3821
    %3823 = vrot.lane.b32.xlu0 %v3810, 16
    %v3824 = vpop.permute.xlu0 %3823
    %3825 = vrot.lane.b32.xlu0 %v3813, 16
    %v3826 = vpop.permute.xlu0 %3825
    %v3831 = vsel %vm894, %v3634, %v3820
    %v3832 = vsel %vm894, %v3637, %v3822
    %v3833 = vsel %vm894, %v3640, %v3824
    %v3834 = vsel %vm894, %v3643, %v3826
    %v3836 = vperm.slane %v3489, 0
    %v3839 = vsel %vm1302, %v3831, 0
    %v3842 = vsel %vm1302, %v3832, 0
    %v3845 = vsel %vm1302, %v3833, 0
    %v3848 = vsel %vm1302, %v3834, 0
    %3850 = vmatpush.msra.mxu0 0.0
    %3851 = vmatpush.msra.mxu0 0.0
    %3852 = vmatpush.msra.mxu0 0.0
    %3853 = vmatpush.msra.mxu0 0.0
    %3854 = vmatpush.msra.mxu0 0.0
    %3855 = vmatpush.msra.mxu0 0.0
    %3856 = vmatpush.msra.mxu0 0.0
    %3857 = vmatpush.msra.mxu0 0.0
    %3858 = vmatpush.msra.mxu0 0.0
    %3859 = vmatpush.msra.mxu0 0.0
    %3860 = vmatpush.msra.mxu0 0.0
    %3861 = vmatpush.msra.mxu0 0.0
    %3862 = vmatpush.msra.mxu0 %v3488
    %3863 = vmatpush.msra.mxu0 %v3487
    %3864 = vmatpush.msra.mxu0 %v3486
    %3865 = vmatpush.msra.mxu0 %v3485
    %3866 = vmatmul.f32.gmra.mxu0 %v3839
    %v3867 = vpop.f32.mrf.mxu0
    %v3868 = vadd.f32 %v3836, %v3867
    %3869 = vmatmul.f32.gmra.mxu0 %v3842
    %v3870 = vpop.f32.mrf.mxu0
    %v3871 = vadd.f32 %v3836, %v3870
    %3872 = vmatmul.f32.gmra.mxu0 %v3845
    %v3873 = vpop.f32.mrf.mxu0
    %v3874 = vadd.f32 %v3836, %v3873
    %3875 = vmatmul.f32.gmra.mxu0 %v3848
    %v3876 = vpop.f32.mrf.mxu0
    %v3877 = vadd.f32 %v3836, %v3876
    %3878 = vdwg.mxu0
    %v3879 = vadd.f32 %v3234, %v3868
    %v3880 = vadd.f32 %v3235, %v3871
    %v3881 = vadd.f32 %v3240, %v3874
    %v3882 = vadd.f32 %v3238, %v3877
    %v3883 = vld [vmem:[#allocation26] sm:$0x3]
    %3884 = vadd.xlane.f32.xlu0 %v3879
    %v3885 = vpop.xlane.xlu0 %3884
    %3886 = vadd.xlane.f32.xlu0 %v3880
    %v3887 = vpop.xlane.xlu0 %3886
    %3888 = vadd.xlane.f32.xlu0 %v3881
    %v3889 = vpop.xlane.xlu0 %3888
    %v3890 = vsel %vm2976, %v3882, 0.0
    %3891 = vadd.xlane.f32.xlu0 %v3890
    %v3892 = vpop.xlane.xlu0 %3891
    %v3893 = vmul.f32 %v3885, 0.03125
    %v3894 = vmul.f32 %v3887, 0.03125
    %v3895 = vmul.f32 %v3889, 0.03125
    %v3896 = vmul.f32 %v3892, 0.03125
    %v3897 = vmul.f32 %v3879, %v3879
    %v3898 = vmul.f32 %v3880, %v3880
    %v3899 = vmul.f32 %v3881, %v3881
    %v3900 = vmul.f32 %v3882, %v3882
    %3901 = vadd.xlane.f32.xlu0 %v3897
    %v3902 = vpop.xlane.xlu0 %3901
    %3903 = vadd.xlane.f32.xlu0 %v3898
    %v3904 = vpop.xlane.xlu0 %3903
    %3905 = vadd.xlane.f32.xlu0 %v3899
    %v3906 = vpop.xlane.xlu0 %3905
    %v3907 = vsel %vm2976, %v3900, 0.0
    %3908 = vadd.xlane.f32.xlu0 %v3907
    %v3909 = vpop.xlane.xlu0 %3908
    %v3910 = vmul.f32 %v3902, 0.03125
    %v3911 = vmul.f32 %v3904, 0.03125
    %v3912 = vmul.f32 %v3906, 0.03125
    %v3913 = vmul.f32 %v3909, 0.03125
    %v3914 = vmul.f32 %v3893, %v3893
    %v3915 = vmul.f32 %v3894, %v3894
    %v3916 = vmul.f32 %v3895, %v3895
    %v3917 = vmul.f32 %v3896, %v3896
    %v3918 = vsub.f32 %v3910, %v3914
    %v3919 = vsub.f32 %v3911, %v3915
    %v3920 = vsub.f32 %v3912, %v3916
    %v3921 = vsub.f32 %v3913, %v3917
    %v3922 = vsub.f32 %v3879, %v3893
    %v3923 = vsub.f32 %v3880, %v3894
    %v3924 = vsub.f32 %v3881, %v3895
    %v3925 = vsub.f32 %v3882, %v3896
    %v3926 = vadd.f32 %v3918, 1e-05
    %v3927 = vadd.f32 %v3919, 1e-05
    %v3928 = vadd.f32 %v3920, 1e-05
    %v3929 = vadd.f32 %v3921, 1e-05
    %v3930 = vrsqrt.pop %v3926
    %v3931 = vmul.f32 %v3930, %v3926
    %v3932 = vmul.f32 %v3931, %v3930
    %v3933 = vmul.f32 0.5, %v3932
    %v3934 = vsub.f32 1.5, %v3933
    %v3935 = vmul.f32 %v3930, %v3934
    %vm3936 = vweird.f32 %v3926
    %vm3937 = vweird.f32 %v3930
    %vm3938 = vmor %vm3936, %vm3937
    %v3939 = vsel %vm3938, %v3930, %v3935
    %v3940 = vrsqrt.pop %v3927
    %v3941 = vmul.f32 %v3940, %v3927
    %v3942 = vmul.f32 %v3941, %v3940
    %v3943 = vmul.f32 0.5, %v3942
    %v3944 = vsub.f32 1.5, %v3943
    %v3945 = vmul.f32 %v3940, %v3944
    %vm3946 = vweird.f32 %v3927
    %vm3947 = vweird.f32 %v3940
    %vm3948 = vmor %vm3946, %vm3947
    %v3949 = vsel %vm3948, %v3940, %v3945
    %v3950 = vrsqrt.pop %v3928
    %v3951 = vmul.f32 %v3950, %v3928
    %v3952 = vmul.f32 %v3951, %v3950
    %v3953 = vmul.f32 0.5, %v3952
    %v3954 = vsub.f32 1.5, %v3953
    %v3955 = vmul.f32 %v3950, %v3954
    %vm3956 = vweird.f32 %v3928
    %vm3957 = vweird.f32 %v3950
    %vm3958 = vmor %vm3956, %vm3957
    %v3959 = vsel %vm3958, %v3950, %v3955
    %v3960 = vrsqrt.pop %v3929
    %v3961 = vmul.f32 %v3960, %v3929
    %v3962 = vmul.f32 %v3961, %v3960
    %v3963 = vmul.f32 0.5, %v3962
    %v3964 = vsub.f32 1.5, %v3963
    %v3965 = vmul.f32 %v3960, %v3964
    %vm3966 = vweird.f32 %v3929
    %vm3967 = vweird.f32 %v3960
    %vm3968 = vmor %vm3966, %vm3967
    %v3969 = vsel %vm3968, %v3960, %v3965
    %v3970 = vmul.f32 %v3922, %v3939
    %v3971 = vmul.f32 %v3923, %v3949
    %v3972 = vmul.f32 %v3924, %v3959
    %v3973 = vmul.f32 %v3925, %v3969
    %v3974 = vperm.slane %v3883, 0
    %v3975 = vmul.f32 %v3970, %v3974
    %v3976 = vmul.f32 %v3971, %v3974
    %v3977 = vmul.f32 %v3972, %v3974
    %v3978 = vmul.f32 %v3973, %v3974
    %v3979 = vperm.slane %v3883, 1
    %v3980 = vadd.f32 %v3975, %v3979
    %v3981 = vadd.f32 %v3976, %v3979
    %v3982 = vadd.f32 %v3977, %v3979
    %v3983 = vadd.f32 %v3978, %v3979
    %v3984 = vld [vmem:[%s97] sm:$0xff]
    %v3985 = vld [vmem:[%s97 + $0x8] sm:$0xff]
    %v3986 = vld [vmem:[%s97 + $0x10] sm:$0xff]
    %v3987 = vld [vmem:[%s97 + $0x18] sm:$0xff]
    %v3988 = vld [vmem:[%s97 + $0x20] sm:$0xff]
    %v3989 = vld [vmem:[%s97 + $0x28] sm:$0xff]
    %v3990 = vld [vmem:[%s97 + $0x30] sm:$0xff]
    %v3991 = vld [vmem:[%s97 + $0x38] sm:$0xff]
    %v3992 = vld [vmem:[%s97 + $0x40] sm:$0xff]
    %v3993 = vld [vmem:[%s97 + $0x48] sm:$0xff]
    %v3994 = vld [vmem:[%s97 + $0x50] sm:$0xff]
    %v3995 = vld [vmem:[%s97 + $0x58] sm:$0xff]
    %v3996 = vld [vmem:[%s97 + $0x60] sm:$0xff]
    %v3997 = vld [vmem:[%s97 + $0x68] sm:$0xff]
    %v3998 = vld [vmem:[%s97 + $0x70] sm:$0xff]
    %v3999 = vld [vmem:[%s97 + $0x78] sm:$0xff]
    %v4000 = vld [vmem:[#allocation28] sm:$0x1]
    %v4001 = vld [vmem:[%s101] sm:$0xff]
    %v4002 = vld [vmem:[%s101 + $0x8] sm:$0xff]
    %v4003 = vld [vmem:[%s101 + $0x10] sm:$0xff]
    %v4004 = vld [vmem:[%s101 + $0x18] sm:$0xff]
    %v4005 = vld [vmem:[%s101 + $0x20] sm:$0xff]
    %v4006 = vld [vmem:[%s101 + $0x28] sm:$0xff]
    %v4007 = vld [vmem:[%s101 + $0x30] sm:$0xff]
    %v4008 = vld [vmem:[%s101 + $0x38] sm:$0xff]
    %v4009 = vld [vmem:[%s101 + $0x40] sm:$0xff]
    %v4010 = vld [vmem:[%s101 + $0x48] sm:$0xff]
    %v4011 = vld [vmem:[%s101 + $0x50] sm:$0xff]
    %v4012 = vld [vmem:[%s101 + $0x58] sm:$0xff]
    %v4013 = vld [vmem:[%s101 + $0x60] sm:$0xff]
    %v4014 = vld [vmem:[%s101 + $0x68] sm:$0xff]
    %v4015 = vld [vmem:[%s101 + $0x70] sm:$0xff]
    %v4016 = vld [vmem:[%s101 + $0x78] sm:$0xff]
    %v4017 = vld [vmem:[#allocation29] sm:$0x1]
    %v4019 = vperm.slane %v4000, 0
    %4021 = vmatpush.msra.mxu0 %v3999
    %4022 = vmatpush.msra.mxu0 %v3998
    %4023 = vmatpush.msra.mxu0 %v3997
    %4024 = vmatpush.msra.mxu0 %v3996
    %4025 = vmatpush.msra.mxu0 %v3995
    %4026 = vmatpush.msra.mxu0 %v3994
    %4027 = vmatpush.msra.mxu0 %v3993
    %4028 = vmatpush.msra.mxu0 %v3992
    %4029 = vmatpush.msra.mxu0 %v3991
    %4030 = vmatpush.msra.mxu0 %v3990
    %4031 = vmatpush.msra.mxu0 %v3989
    %4032 = vmatpush.msra.mxu0 %v3988
    %4033 = vmatpush.msra.mxu0 %v3987
    %4034 = vmatpush.msra.mxu0 %v3986
    %4035 = vmatpush.msra.mxu0 %v3985
    %4036 = vmatpush.msra.mxu0 %v3984
    %4037 = vmatmul.f32.gmra.mxu0 %v3980
    %v4038 = vpop.f32.mrf.mxu0
    %v4039 = vadd.f32 %v4019, %v4038
    %4040 = vmatmul.f32.gmra.mxu0 %v3981
    %v4041 = vpop.f32.mrf.mxu0
    %v4042 = vadd.f32 %v4019, %v4041
    %4043 = vmatmul.f32.gmra.mxu0 %v3982
    %v4044 = vpop.f32.mrf.mxu0
    %v4045 = vadd.f32 %v4019, %v4044
    %4046 = vmatmul.f32.gmra.mxu0 %v3983
    %v4047 = vpop.f32.mrf.mxu0
    %v4048 = vadd.f32 %v4019, %v4047
    %4049 = vdwg.mxu0
    %v4050 = vmul.f32 %v4039, %v4039
    %v4051 = vmul.f32 %v4042, %v4042
    %v4052 = vmul.f32 %v4045, %v4045
    %v4053 = vmul.f32 %v4048, %v4048
    %v4054 = vmul.f32 %v4039, %v4050
    %v4055 = vmul.f32 %v4042, %v4051
    %v4056 = vmul.f32 %v4045, %v4052
    %v4057 = vmul.f32 %v4048, %v4053
    %v4058 = vmul.f32 %v4054, 0.044715
    %v4059 = vmul.f32 %v4055, 0.044715
    %v4060 = vmul.f32 %v4056, 0.044715
    %v4061 = vmul.f32 %v4057, 0.044715
    %v4062 = vadd.f32 %v4039, %v4058
    %v4063 = vadd.f32 %v4042, %v4059
    %v4064 = vadd.f32 %v4045, %v4060
    %v4065 = vadd.f32 %v4048, %v4061
    %v4066 = vmul.f32 %v4062, 0.7978846
    %v4067 = vmul.f32 %v4063, 0.7978846
    %v4068 = vmul.f32 %v4064, 0.7978846
    %v4069 = vmul.f32 %v4065, 0.7978846
    %v4070 = vtanh.pop %v4066
    %v4071 = vtanh.pop %v4067
    %v4072 = vtanh.pop %v4068
    %v4073 = vtanh.pop %v4069
    %v4074 = vadd.f32 %v4070, 1.0
    %v4075 = vadd.f32 %v4071, 1.0
    %v4076 = vadd.f32 %v4072, 1.0
    %v4077 = vadd.f32 %v4073, 1.0
    %v4078 = vmul.f32 %v4074, 0.5
    %v4079 = vmul.f32 %v4075, 0.5
    %v4080 = vmul.f32 %v4076, 0.5
    %v4081 = vmul.f32 %v4077, 0.5
    %v4082 = vmul.f32 %v4039, %v4078
    %v4083 = vmul.f32 %v4042, %v4079
    %v4084 = vmul.f32 %v4045, %v4080
    %v4085 = vmul.f32 %v4048, %v4081
    %v4087 = vperm.slane %v4017, 0
    %4089 = vmatpush.msra.mxu0 %v4016
    %4090 = vmatpush.msra.mxu0 %v4015
    %4091 = vmatpush.msra.mxu0 %v4014
    %4092 = vmatpush.msra.mxu0 %v4013
    %4093 = vmatpush.msra.mxu0 %v4012
    %4094 = vmatpush.msra.mxu0 %v4011
    %4095 = vmatpush.msra.mxu0 %v4010
    %4096 = vmatpush.msra.mxu0 %v4009
    %4097 = vmatpush.msra.mxu0 %v4008
    %4098 = vmatpush.msra.mxu0 %v4007
    %4099 = vmatpush.msra.mxu0 %v4006
    %4100 = vmatpush.msra.mxu0 %v4005
    %4101 = vmatpush.msra.mxu0 %v4004
    %4102 = vmatpush.msra.mxu0 %v4003
    %4103 = vmatpush.msra.mxu0 %v4002
    %4104 = vmatpush.msra.mxu0 %v4001
    %4105 = vmatmul.f32.gmra.mxu0 %v4082
    %v4106 = vpop.f32.mrf.mxu0
    %v4107 = vadd.f32 %v4087, %v4106
    %4108 = vmatmul.f32.gmra.mxu0 %v4083
    %v4109 = vpop.f32.mrf.mxu0
    %v4110 = vadd.f32 %v4087, %v4109
    %4111 = vmatmul.f32.gmra.mxu0 %v4084
    %v4112 = vpop.f32.mrf.mxu0
    %4113 = vmatmul.f32.gmra.mxu0 %v4085
    %v4114 = vpop.f32.mrf.mxu0
    %4115 = vdwg.mxu0
    %v4116 = vadd.f32 %v3879, %v4107
    %v4117 = vadd.f32 %v3880, %v4110
    %v4118 = vld [vmem:[#allocation31] sm:$0x3]
    %4119 = vadd.xlane.f32.xlu0 %v4116
    %v4120 = vpop.xlane.xlu0 %4119
    %4121 = vadd.xlane.f32.xlu0 %v4117
    %v4122 = vpop.xlane.xlu0 %4121
    %v4123 = vmul.f32 %v4120, 0.03125
    %v4124 = vmul.f32 %v4122, 0.03125
    %v4125 = vmul.f32 %v4116, %v4116
    %v4126 = vmul.f32 %v4117, %v4117
    %4127 = vadd.xlane.f32.xlu0 %v4125
    %v4128 = vpop.xlane.xlu0 %4127
    %4129 = vadd.xlane.f32.xlu0 %v4126
    %v4130 = vpop.xlane.xlu0 %4129
    %v4131 = vmul.f32 %v4128, 0.03125
    %v4132 = vmul.f32 %v4130, 0.03125
    %v4133 = vmul.f32 %v4123, %v4123
    %v4134 = vmul.f32 %v4124, %v4124
    %v4135 = vsub.f32 %v4131, %v4133
    %v4136 = vsub.f32 %v4132, %v4134
    %v4137 = vsub.f32 %v4116, %v4123
    %v4138 = vsub.f32 %v4117, %v4124
    %v4139 = vadd.f32 %v4135, 1e-05
    %v4140 = vadd.f32 %v4136, 1e-05
    %v4141 = vrsqrt.pop %v4139
    %v4142 = vmul.f32 %v4141, %v4139
    %v4143 = vmul.f32 %v4142, %v4141
    %v4144 = vmul.f32 0.5, %v4143
    %v4145 = vsub.f32 1.5, %v4144
    %v4146 = vmul.f32 %v4141, %v4145
    %vm4147 = vweird.f32 %v4139
    %vm4148 = vweird.f32 %v4141
    %vm4149 = vmor %vm4147, %vm4148
    %v4150 = vsel %vm4149, %v4141, %v4146
    %v4151 = vrsqrt.pop %v4140
    %v4152 = vmul.f32 %v4151, %v4140
    %v4153 = vmul.f32 %v4152, %v4151
    %v4154 = vmul.f32 0.5, %v4153
    %v4155 = vsub.f32 1.5, %v4154
    %v4156 = vmul.f32 %v4151, %v4155
    %vm4157 = vweird.f32 %v4140
    %vm4158 = vweird.f32 %v4151
    %vm4159 = vmor %vm4157, %vm4158
    %v4160 = vsel %vm4159, %v4151, %v4156
    %v4161 = vmul.f32 %v4137, %v4150
    %v4162 = vmul.f32 %v4138, %v4160
    %v4163 = vperm.slane %v4118, 0
    %v4164 = vmul.f32 %v4161, %v4163
    %v4165 = vmul.f32 %v4162, %v4163
    %v4166 = vperm.slane %v4118, 1
    %v4167 = vadd.f32 %v4164, %v4166
    %v4168 = vadd.f32 %v4165, %v4166
    %v4169 = vld [vmem:[%s107] sm:$0xff]
    %v4170 = vld [vmem:[%s107 + $0x8] sm:$0xff]
    %v4171 = vld [vmem:[%s107 + $0x10] sm:$0xff]
    %v4172 = vld [vmem:[%s107 + $0x18] sm:$0xff]
    %v4173 = vld [vmem:[%s107 + $0x20] sm:$0xff]
    %v4174 = vld [vmem:[%s107 + $0x28] sm:$0xff]
    %v4175 = vld [vmem:[%s107 + $0x30] sm:$0xff]
    %v4176 = vld [vmem:[%s107 + $0x38] sm:$0xff]
    %v4177 = vld [vmem:[%s107 + $0x40] sm:$0xff]
    %v4178 = vld [vmem:[%s107 + $0x48] sm:$0xff]
    %v4179 = vld [vmem:[%s107 + $0x50] sm:$0xff]
    %v4180 = vld [vmem:[%s107 + $0x58] sm:$0xff]
    %v4181 = vld [vmem:[%s107 + $0x60] sm:$0xff]
    %v4182 = vld [vmem:[%s107 + $0x68] sm:$0xff]
    %v4183 = vld [vmem:[%s107 + $0x70] sm:$0xff]
    %v4184 = vld [vmem:[%s107 + $0x78] sm:$0xff]
    %v4185 = vld [vmem:[#allocation32] sm:$0x1]
    %v4187 = vperm.slane %v4185, 0
    %4189 = vmatpush.msra.mxu0 %v4184
    %4190 = vmatpush.msra.mxu0 %v4183
    %4191 = vmatpush.msra.mxu0 %v4182
    %4192 = vmatpush.msra.mxu0 %v4181
    %4193 = vmatpush.msra.mxu0 %v4180
    %4194 = vmatpush.msra.mxu0 %v4179
    %4195 = vmatpush.msra.mxu0 %v4178
    %4196 = vmatpush.msra.mxu0 %v4177
    %4197 = vmatpush.msra.mxu0 %v4176
    %4198 = vmatpush.msra.mxu0 %v4175
    %4199 = vmatpush.msra.mxu0 %v4174
    %4200 = vmatpush.msra.mxu0 %v4173
    %4201 = vmatpush.msra.mxu0 %v4172
    %4202 = vmatpush.msra.mxu0 %v4171
    %4203 = vmatpush.msra.mxu0 %v4170
    %4204 = vmatpush.msra.mxu0 %v4169
    %4205 = vmatmul.f32.gmra.mxu0 %v4167
    %v4206 = vpop.f32.mrf.mxu0
    %v4207 = vadd.f32 %v4187, %v4206
    %4208 = vmatmul.f32.gmra.mxu0 %v4168
    %v4209 = vpop.f32.mrf.mxu0
    %v4210 = vadd.f32 %v4187, %v4209
    %4211 = vdwg.mxu0
    %4212 = vmax.xlane.f32.xlu0 %v4207
    %v4213 = vpop.xlane.xlu0 %4212
    %4214 = vmax.xlane.f32.xlu0 %v4210
    %v4215 = vpop.xlane.xlu0 %4214
    %v4216 = vsub.f32 %v4207, %v4213
    %v4217 = vsub.f32 %v4210, %v4215
    %v4218 = vmul.f32 %v4216, 1.442695
    %v4219 = vpow.pop %v4218
    %v4220 = vmul.f32 %v4217, 1.442695
    %v4221 = vpow.pop %v4220
    %4222 = vadd.xlane.f32.xlu0 %v4219
    %v4223 = vpop.xlane.xlu0 %4222
    %4224 = vadd.xlane.f32.xlu0 %v4221
    %v4225 = vpop.xlane.xlu0 %4224
    %v4226 = vlog2.pop %v4223
    %v4227 = vmul.f32 %v4226, 0.6931472
    %v4228 = vlog2.pop %v4225
    %v4229 = vmul.f32 %v4228, 0.6931472
    %v4230 = vadd.f32 %v4227, %v4213
    %v4231 = vadd.f32 %v4229, %v4215
    %v4232 = vld [vmem:[%s111] sm:$0xff]
    %v4233 = vld [vmem:[%s111 + $0x8] sm:$0xff]
    %v4234 = vlaneseq
    %v4235 = vand.u32 %v4234, 127
    %4236 = vset.pattern.permute.xlu0 0
    %4237 = vperm.xlu0 %4236, %v4232
    %v4238 = vpop.permute.xlu0 %4237
    %4239 = vset.pattern.permute.xlu0 0
    %4240 = vperm.xlu0 %4239, %v4233
    %v4241 = vpop.permute.xlu0 %4240
    %vm4242 = vcmp.eq.s32.totalorder %v4238, %v4235
    %vm4243 = vcmp.eq.s32.totalorder %v4241, %v4235
    %v4244 = vsel %vm4242, 1, 0
    %v4245 = vsel %vm4243, 1, 0
    %v4246 = vcvt.s32.f32 %v4244
    %v4247 = vcvt.s32.f32 %v4245
    %v4248 = vmul.f32 %v4207, %v4246
    %v4249 = vmul.f32 %v4210, %v4247
    %4250 = vadd.xlane.f32.xlu0 %v4248
    %v4251 = vpop.xlane.xlu0 %4250
    %4252 = vadd.xlane.f32.xlu0 %v4249
    %v4253 = vpop.xlane.xlu0 %4252
    %v4254 = vsub.f32 %v4230, %v4251
    %v4255 = vsub.f32 %v4231, %v4253
    %v4256 = vld [vmem:[%s113] sm:$0xff]
    %v4257 = vld [vmem:[%s113 + $0x8] sm:$0xff]
    %v4258 = vmul.f32 %v4254, %v4256
    %v4259 = vmul.f32 %v4255, %v4257
    %vm4260 = vcmask 7168
    %v4261 = vsel %vm4260, %v4258, 0.0
    %v4262 = vsel %vm4260, %v4259, 0.0
    %v4263 = vadd.f32 %v4261, %v4262
    %v4264 = vrot.slane %v4263, 4
    %v4265 = vadd.f32 %v4263, %v4264
    %v4266 = vrot.slane %v4265, 2
    %v4267 = vadd.f32 %v4265, %v4266
    %v4268 = vrot.slane %v4267, 1
    %v4269 = vadd.f32 %v4267, %v4268
    %v4270 = vsel %vm4260, %v4256, 0.0
    %v4271 = vsel %vm4260, %v4257, 0.0
    %v4272 = vadd.f32 %v4270, %v4271
    %v4273 = vrot.slane %v4272, 4
    %v4274 = vadd.f32 %v4272, %v4273
    %v4275 = vrot.slane %v4274, 2
    %v4276 = vadd.f32 %v4274, %v4275
    %v4277 = vrot.slane %v4276, 1
    %v4278 = vadd.f32 %v4276, %v4277
    %v4279 = vrcp.pop %v4278
    %v4280 = vmul.f32 %v4278, %v4279
    %v4281 = vsub.f32 1.0, %v4280
    %v4282 = vmul.f32 %v4279, %v4281
    %v4283 = vadd.f32 %v4279, %v4282
    %vm4284 = vweird.f32 %v4278
    %vm4285 = vweird.f32 %v4279
    %vm4286 = vmor %vm4284, %vm4285
    %v4287 = vsel %vm4286, %v4279, %v4283
    %v4288 = vand.u32 2147483647, %v4278
    %vm4289 = vcmp.eq.f32.partialorder %v4288, 8.507059e+37
    %v4290 = vand.u32 %v4278, 2147483648
    %v4291 = vor.u32 1.1754944e-38, %v4290
    %v4292 = vsel %vm4289, %v4291, %v4287
    %v4293 = vmul.f32 %v4269, %v4292
    %vm4294 = vcmask 0
    %4295 = vst.msk [vmem:[#allocation34] sm:$0x1] %vm4294, %v4293
    // Predicated region
    $region310: #{osm_forward.1} parent=1 // pred_check
      _
    $region311: #{osm_forward.1} parent=1 // pred_check_branch
      %4297 = sbr.rel (0) target = $region313
    $region312: #{osm_forward.1} parent=1 // pred_region
      %4299 = vsyncadd [#allocation4], 0
      %s4301 = sshll.u32 [#allocation34], 4
      %s4302 = int_to_ptr.vmem [resolvable:$true] %s4301
      %s4303 = sshll.u32 %s115, 4
      %s4304 = int_to_ptr.hbm [resolvable:$true] %s4303
      %4306 = dma.vmem_to_hbm [thread:$0]  %s4302, 16, %s4304, [#allocation4]
    $region313: #{osm_forward.1} parent=1 // pred_fallthru
      _
    // Predicated region
    $region314: #{osm_forward.1} parent=1 // pred_check
      _
    $region315: #{osm_forward.1} parent=1 // pred_check_branch
      %4308 = sbr.rel (0) target = $region317
    $region316: #{osm_forward.1} parent=1 // pred_region
      %4310 = dma.done [#allocation4], 16
    $region317: #{osm_forward.1} parent=1 // pred_fallthru
      _
    %4311 = vsyncpa [#allocation3], 1
    %4312 = vsyncpa [#allocation6], 1
    %4313 = vsyncpa [#allocation9], 1
    %4314 = vsyncpa [#allocation12], 1
    %4315 = vsyncpa [#allocation15], 1
    %4316 = vsyncpa [#allocation18], 1
    %4317 = vsyncpa [#allocation21], 1
    %4318 = vsyncpa [#allocation24], 1
    %4319 = vsyncpa [#allocation27], 1
    %4320 = vsyncpa [#allocation30], 1
    %4321 = vsyncpa [#allocation33], 1
    %4322 = vsyncpa [#allocation4], 1

</llo_original>
